<compile_context>
chip_gen: v6e
topology: v6e:2x2x1
jax: 0.10.0
libtpu: 0.0.40
codegen_flags: <defaults>
</compile_context>

<pallas_src>
import math
from functools import partial

import jax
import jax.numpy as jnp
from jax import lax
from jax.experimental import pallas as pl
from jax.experimental.pallas import tpu as pltpu


def _round_up(x, m):
    return (x + m - 1) // m * m


# --------------------------- Pallas kernel -----------------------------------

def _modconv_kernel(s_ref, d_ref, w_ref, x_ref, o_ref, patch_ref, *, k):
    """One (batch, H-tile, Cout-tile) grid step.

    s_ref:     (1, Cin)              per-batch style (y + 1), f32, lane-major
    d_ref:     (1, tile_o)           per-(batch, out-chan) demod scale, f32
    w_ref:     (K*K*Cin, tile_o)     base conv weight, im2col layout, bf16
    x_ref:     (Hp, Wp, Cin)         zero-padded full input image, bf16
    o_ref:     (tile_h, W, tile_o)   output tile
    patch_ref: (tile_h, W, K*K*Cin)  im2col scratch (persists across Cout tiles)
    """
    tile_h, w_out, tile_o = o_ref.shape
    cin = s_ref.shape[-1]
    tt = pl.program_id(1)
    oo = pl.program_id(2)

    # Build the style-modulated im2col patch once per (batch, H-tile); the
    # innermost ("arbitrary") output-channel axis reuses it.
    @pl.when(oo == 0)
    def _build_patch():
        style = s_ref[...].astype(jnp.float32).reshape(1, 1, cin)   # lane-aligned bcast
        row0 = pl.multiple_of(tt * tile_h, tile_h)
        for kh in range(k):
            rows = x_ref[pl.ds(row0 + kh, tile_h), :, :]            # (tile_h, Wp, Cin)
            rows = rows.astype(jnp.float32) * style                 # fold (y+1) into input
            for kw in range(k):
                tap = kh * k + kw
                patch_ref[:, :, tap * cin:(tap + 1) * cin] = (
                    rows[:, kw:kw + w_out, :].astype(patch_ref.dtype))

    # Single big MXU matmul (contraction K*K*Cin), straight into the output.
    patch = patch_ref[...].reshape(tile_h * w_out, k * k * cin)
    acc = jnp.dot(patch, w_ref[...], preferred_element_type=jnp.float32)
    acc = acc * d_ref[...]                                           # (1, tile_o) f32 bcast
    o_ref[...] = acc.reshape(tile_h, w_out, tile_o).astype(o_ref.dtype)


# --------------------------- Wrapper ------------------------------------------

def conv2d_modulated(x_nchw, y, weight_oikk, *, demod=True, eps=1e-8,
                     compute_dtype=jnp.bfloat16, out_dtype=jnp.float32,
                     tile_o_max=256, vmem_cap_bytes=48 * 1024 * 1024):
    """Conv2DModulated forward.

    x: (B, Cin, H, W) NCHW, y: (B, Cin), weight: (Cout, Cin, K, K).
    Returns (B, Cout, H, W) in `out_dtype`.
    Tuning: pass tile_o_max=128 on v5e (128x128 MXU); out_dtype=bf16 on v5e to
    halve writeback if the consumer tolerates it.
    """
    b, cin, h, w = x_nchw.shape
    cout, cin_w, k, k2 = weight_oikk.shape
    assert cin == cin_w and k == k2
    assert k % 2 == 1, "Conv2DModulated 'same' padding assumes an odd kernel"
    pad = (k - 1) // 2              # stride=1, dilation=1 (as in the reference forward)
    kkc = k * k * cin
    itemsize = jnp.dtype(compute_dtype).itemsize
    out_itemsize = jnp.dtype(out_dtype).itemsize

    # ---- output-channel tiling: pad Cout to 128 -> lane-dense stores --------
    cout_p = _round_up(cout, 128)
    tile_o = 256 if (tile_o_max >= 256 and cout_p % 256 == 0) else 128
    n_ot = cout_p // tile_o
    if b * n_ot < 2 and tile_o > 128:       # v7x megacore: give both TCs work
        tile_o //= 2
        n_ot = cout_p // tile_o

    # ---- H tiling: whole padded image stays in VMEM; only the output / patch
    #      side is tiled.  Pick the largest tile_h that fits the VMEM budget. --
    wp = w + 2 * pad

    def _vmem_need(th):
        hpd = _round_up(h, th)
        return (2 * (hpd + 2 * pad) * wp * cin * itemsize   # input image (2 bufs)
                + 2 * kkc * tile_o * itemsize               # weight tile (2 bufs)
                + 2 * th * w * tile_o * out_itemsize        # output tile (2 bufs)
                + th * w * kkc * itemsize                    # im2col scratch
                + (2 << 20))                                 # style/demod blocks + slack

    tile_h = min(h, 512)
    while _vmem_need(tile_h) > vmem_cap_bytes and tile_h > 8:
        tile_h = max(8, _round_up(tile_h // 2, 8))
    if _vmem_need(tile_h) > vmem_cap_bytes:
        # TODO(synk): halo-DMA H/W tiling (manual make_async_copy) for images too
        # large to keep the whole padded input resident in VMEM.
        raise NotImplementedError("input image too large for whole-image VMEM residency")
    n_ht = pl.cdiv(h, tile_h)
    if b * n_ht * n_ot < 2 and tile_h > 8 and h > 8:   # megacore balance for B=1
        tile_h = max(8, _round_up(tile_h // 2, 8))
        n_ht = pl.cdiv(h, tile_h)
    h_pad = n_ht * tile_h
    hp = h_pad + 2 * pad

    # ---- batch-independent weight matrix + per-(b, o) demodulation scale ----
    w_f32 = weight_oikk.astype(jnp.float32)
    w_mat = jnp.transpose(w_f32, (2, 3, 1, 0)).reshape(kkc, cout)     # (K*K*Cin, Cout)
    w_mat = jnp.pad(w_mat, ((0, 0), (0, cout_p - cout))).astype(compute_dtype)

    style = y.astype(jnp.float32) + 1.0                               # (B, Cin)
    if demod:
        sq = jnp.sum(w_f32 * w_f32, axis=(2, 3))                      # (Cout, Cin)
        d = lax.rsqrt((style * style) @ sq.T + eps)                   # (B, Cout), f32
    else:
        d = jnp.ones((b, cout), jnp.float32)
    d = jnp.pad(d, ((0, 0), (0, cout_p - cout)), constant_values=1.0)
    s3 = style.reshape(b, 1, cin)
    d3 = d.reshape(b, 1, cout_p)

    # ---- input: NCHW -> NHWC, 'same' zero pad (+ bottom pad up to H grid),
    #      cast to bf16 -- one fused XLA producer, no stacked halo copies. -----
    xp = jnp.pad(jnp.transpose(x_nchw, (0, 2, 3, 1)).astype(compute_dtype),
                 ((0, 0), (pad, pad + (h_pad - h)), (pad, pad), (0, 0)))

    flops = 2 * b * h_pad * w * kkc * cout_p
    bytes_accessed = (b * hp * wp * cin * itemsize
                      + b * n_ht * kkc * cout_p * itemsize
                      + b * h_pad * w * cout_p * out_itemsize)

    out = pl.pallas_call(
        partial(_modconv_kernel, k=k),
        out_shape=jax.ShapeDtypeStruct((b, h_pad, w, cout_p), out_dtype),
        grid=(b, n_ht, n_ot),
        in_specs=[
            pl.BlockSpec((None, 1, cin), lambda bb, tt, oo: (bb, 0, 0)),        # style
            pl.BlockSpec((None, 1, tile_o), lambda bb, tt, oo: (bb, 0, oo)),    # demod d
            pl.BlockSpec((kkc, tile_o), lambda bb, tt, oo: (0, oo)),            # weights
            pl.BlockSpec((None, hp, wp, cin), lambda bb, tt, oo: (bb, 0, 0, 0)),  # input
        ],
        out_specs=pl.BlockSpec((None, tile_h, w, tile_o),
                               lambda bb, tt, oo: (bb, tt, 0, oo)),
        scratch_shapes=[pltpu.VMEM((tile_h, w, kkc), compute_dtype)],
        compiler_params=pltpu.CompilerParams(
            dimension_semantics=("parallel", "parallel", "arbitrary"),
            vmem_limit_bytes=int(min(vmem_cap_bytes,
                                     max(_vmem_need(tile_h), 32 * 1024 * 1024)))),
        cost_estimate=pl.CostEstimate(flops=int(flops), transcendentals=0,
                                      bytes_accessed=int(bytes_accessed)),
    )(s3, d3, w_mat, xp)

    out = out[:, :h, :, :cout]                       # drop H / Cout padding
    return jnp.transpose(out, (0, 3, 1, 2))          # NHWC -> NCHW


# --------------------------- Pure-JAX reference -------------------------------

def _reference(x_nchw, y, weight_oikk, demod, eps):
    b = x_nchw.shape[0]
    k = weight_oikk.shape[-1]
    pad = (k - 1) // 2
    w1 = y[:, None, :, None, None]
    weights = weight_oikk[None] * (w1 + 1.0)
    if demod:
        d = lax.rsqrt(jnp.sum(weights ** 2, axis=(2, 3, 4), keepdims=True) + eps)
        weights = weights * d
    outs = []
    for i in range(b):
        o = lax.conv_general_dilated(
            x_nchw[i:i + 1], weights[i], window_strides=(1, 1),
            padding=[(pad, pad), (pad, pad)],
            dimension_numbers=("NCHW", "OIHW", "NCHW"))
        outs.append(o)
    return jnp.concatenate(outs, axis=0)


# --------------------------- Demo ---------------------------------------------

if __name__ == "__main__":
    key = jax.random.PRNGKey(0)
    k_w, k_x, k_y = jax.random.split(key, 3)

    batch, in_chan, out_chan, kernel, h, w = 2, 4, 32, 3, 16, 16

    # kaiming_normal_(a=0, mode='fan_in', nonlinearity='leaky_relu')
    fan_in = in_chan * kernel * kernel
    std = math.sqrt(2.0 / fan_in)
    weight = std * jax.random.normal(k_w, (out_chan, in_chan, kernel, kernel),
                                     jnp.float32)
    x = jax.random.normal(k_x, (batch, in_chan, h, w), jnp.float32)
    y = jax.random.normal(k_y, (batch, in_chan), jnp.float32)

    out = conv2d_modulated(x, y, weight, demod=True, eps=1e-8)
    jax.block_until_ready(out)
    assert out.shape == (batch, out_chan, h, w), out.shape

    ref = _reference(x, y, weight, demod=True, eps=1e-8)
    denom = max(float(jnp.max(jnp.abs(ref))), 1e-6)
    rel_err = float(jnp.max(jnp.abs(out - ref))) / denom
    assert rel_err < 3e-2, f"max relative err vs reference = {rel_err}"

    print("KERNEL_OK")
</pallas_src>

<mosaic_0001>
module attributes {stable_mosaic.version = 11 : i64} {
  func.func @_modconv_kernel(%arg0: i32, %arg1: i32, %arg2: i32, %arg3: memref<1x1x4xf32, #tpu.memory_space<vmem>>, %arg4: memref<1x1x128xf32, #tpu.memory_space<vmem>>, %arg5: memref<36x128xbf16, #tpu.memory_space<vmem>>, %arg6: memref<1x18x18x4xbf16, #tpu.memory_space<vmem>>, %arg7: memref<1x16x16x128xf32, #tpu.memory_space<vmem>>, %arg8: memref<16x16x36xbf16, #tpu.memory_space<vmem>>) attributes {dimension_semantics = [#tpu.dimension_semantics<parallel>, #tpu.dimension_semantics<parallel>, #tpu.dimension_semantics<arbitrary>], iteration_bounds = array<i64: 2, 1, 1>, scalar_prefetch = 0 : i64, scratch_operands = 1 : i64, tpu.core_type = #tpu.core_type<tc>, window_params = [{transform_indices = @transform_0, window_bounds = array<i64: 1, 1, 4>}, {transform_indices = @transform_1, window_bounds = array<i64: 1, 1, 128>}, {transform_indices = @transform_2, window_bounds = array<i64: 36, 128>}, {transform_indices = @transform_3, window_bounds = array<i64: 1, 18, 18, 4>}, {transform_indices = @transform_4, window_bounds = array<i64: 1, 16, 16, 128>}]} {
    %c0_i32 = arith.constant 0 : i32
    %0 = arith.cmpi eq, %arg2, %c0_i32 : i32
    %1 = arith.extui %0 : i1 to i32
    %c0_i32_0 = arith.constant 0 : i32
    %2 = arith.cmpi ne, %1, %c0_i32_0 : i32
    scf.if %2 {
      %c0_12 = arith.constant 0 : index
      %c0_13 = arith.constant 0 : index
      %c0_14 = arith.constant 0 : index
      %15 = vector.load %arg3[%c0_12, %c0_13, %c0_14] : memref<1x1x4xf32, #tpu.memory_space<vmem>>, vector<1x1x4xf32>
      %16 = vector.shape_cast %15 : vector<1x1x4xf32> to vector<1x4xf32>
      %17 = vector.shape_cast %16 : vector<1x4xf32> to vector<1x1x4xf32>
      %c16_i32 = arith.constant 16 : i32
      %18 = arith.muli %arg1, %c16_i32 : i32
      %19 = tpu.assume_multiple %18, 16 : i32
      %c0_i32_15 = arith.constant 0 : i32
      %20 = arith.addi %19, %c0_i32_15 : i32
      %c0_16 = arith.constant 0 : index
      %21 = arith.index_cast %20 : i32 to index
      %c0_17 = arith.constant 0 : index
      %c0_18 = arith.constant 0 : index
      %22 = vector.load %arg6[%c0_16, %21, %c0_17, %c0_18] : memref<1x18x18x4xbf16, #tpu.memory_space<vmem>>, vector<1x16x18x4xbf16>
      %23 = vector.shape_cast %22 : vector<1x16x18x4xbf16> to vector<16x18x4xbf16>
      %24 = arith.extf %23 : vector<16x18x4xbf16> to vector<16x18x4xf32>
      %25 = vector.broadcast %17 : vector<1x1x4xf32> to vector<16x18x4xf32>
      %26 = arith.mulf %24, %25 : vector<16x18x4xf32>
      %27 = vector.extract_strided_slice %26 {offsets = [0, 0, 0], sizes = [16, 16, 4], strides = [1, 1, 1]} : vector<16x18x4xf32> to vector<16x16x4xf32>
      %28 = arith.truncf %27 : vector<16x16x4xf32> to vector<16x16x4xbf16>
      %c0_19 = arith.constant 0 : index
      %c0_20 = arith.constant 0 : index
      %c0_21 = arith.constant 0 : index
      %29 = vector.load %arg8[%c0_19, %c0_20, %c0_21] : memref<16x16x36xbf16, #tpu.memory_space<vmem>>, vector<16x16x4xbf16>
      tpu.vector_store %arg8[%c0_19, %c0_20, %c0_21], %28 {strides = array<i32>} : memref<16x16x36xbf16, #tpu.memory_space<vmem>>, vector<16x16x4xbf16>,
      %30 = vector.extract_strided_slice %26 {offsets = [0, 1, 0], sizes = [16, 16, 4], strides = [1, 1, 1]} : vector<16x18x4xf32> to vector<16x16x4xf32>
      %31 = arith.truncf %30 : vector<16x16x4xf32> to vector<16x16x4xbf16>
      %c0_22 = arith.constant 0 : index
      %c0_23 = arith.constant 0 : index
      %c4 = arith.constant 4 : index
      %32 = vector.load %arg8[%c0_22, %c0_23, %c4] : memref<16x16x36xbf16, #tpu.memory_space<vmem>>, vector<16x16x4xbf16>
      tpu.vector_store %arg8[%c0_22, %c0_23, %c4], %31 {strides = array<i32>} : memref<16x16x36xbf16, #tpu.memory_space<vmem>>, vector<16x16x4xbf16>,
      %33 = vector.extract_strided_slice %26 {offsets = [0, 2, 0], sizes = [16, 16, 4], strides = [1, 1, 1]} : vector<16x18x4xf32> to vector<16x16x4xf32>
      %34 = arith.truncf %33 : vector<16x16x4xf32> to vector<16x16x4xbf16>
      %c0_24 = arith.constant 0 : index
      %c0_25 = arith.constant 0 : index
      %c8 = arith.constant 8 : index
      %35 = vector.load %arg8[%c0_24, %c0_25, %c8] : memref<16x16x36xbf16, #tpu.memory_space<vmem>>, vector<16x16x4xbf16>
      tpu.vector_store %arg8[%c0_24, %c0_25, %c8], %34 {strides = array<i32>} : memref<16x16x36xbf16, #tpu.memory_space<vmem>>, vector<16x16x4xbf16>,
      %c1_i32 = arith.constant 1 : i32
      %36 = arith.addi %19, %c1_i32 : i32
      %c0_26 = arith.constant 0 : index
      %37 = arith.index_cast %36 : i32 to index
      %c0_27 = arith.constant 0 : index
      %c0_28 = arith.constant 0 : index
      %38 = vector.load %arg6[%c0_26, %37, %c0_27, %c0_28] : memref<1x18x18x4xbf16, #tpu.memory_space<vmem>>, vector<1x16x18x4xbf16>
      %39 = vector.shape_cast %38 : vector<1x16x18x4xbf16> to vector<16x18x4xbf16>
      %40 = arith.extf %39 : vector<16x18x4xbf16> to vector<16x18x4xf32>
      %41 = vector.broadcast %17 : vector<1x1x4xf32> to vector<16x18x4xf32>
      %42 = arith.mulf %40, %41 : vector<16x18x4xf32>
      %43 = vector.extract_strided_slice %42 {offsets = [0, 0, 0], sizes = [16, 16, 4], strides = [1, 1, 1]} : vector<16x18x4xf32> to vector<16x16x4xf32>
      %44 = arith.truncf %43 : vector<16x16x4xf32> to vector<16x16x4xbf16>
      %c0_29 = arith.constant 0 : index
      %c0_30 = arith.constant 0 : index
      %c12 = arith.constant 12 : index
      %45 = vector.load %arg8[%c0_29, %c0_30, %c12] : memref<16x16x36xbf16, #tpu.memory_space<vmem>>, vector<16x16x4xbf16>
      tpu.vector_store %arg8[%c0_29, %c0_30, %c12], %44 {strides = array<i32>} : memref<16x16x36xbf16, #tpu.memory_space<vmem>>, vector<16x16x4xbf16>,
      %46 = vector.extract_strided_slice %42 {offsets = [0, 1, 0], sizes = [16, 16, 4], strides = [1, 1, 1]} : vector<16x18x4xf32> to vector<16x16x4xf32>
      %47 = arith.truncf %46 : vector<16x16x4xf32> to vector<16x16x4xbf16>
      %c0_31 = arith.constant 0 : index
      %c0_32 = arith.constant 0 : index
      %c16 = arith.constant 16 : index
      %48 = vector.load %arg8[%c0_31, %c0_32, %c16] : memref<16x16x36xbf16, #tpu.memory_space<vmem>>, vector<16x16x4xbf16>
      tpu.vector_store %arg8[%c0_31, %c0_32, %c16], %47 {strides = array<i32>} : memref<16x16x36xbf16, #tpu.memory_space<vmem>>, vector<16x16x4xbf16>,
      %49 = vector.extract_strided_slice %42 {offsets = [0, 2, 0], sizes = [16, 16, 4], strides = [1, 1, 1]} : vector<16x18x4xf32> to vector<16x16x4xf32>
      %50 = arith.truncf %49 : vector<16x16x4xf32> to vector<16x16x4xbf16>
      %c0_33 = arith.constant 0 : index
      %c0_34 = arith.constant 0 : index
      %c20 = arith.constant 20 : index
      %51 = vector.load %arg8[%c0_33, %c0_34, %c20] : memref<16x16x36xbf16, #tpu.memory_space<vmem>>, vector<16x16x4xbf16>
      tpu.vector_store %arg8[%c0_33, %c0_34, %c20], %50 {strides = array<i32>} : memref<16x16x36xbf16, #tpu.memory_space<vmem>>, vector<16x16x4xbf16>,
      %c2_i32 = arith.constant 2 : i32
      %52 = arith.addi %19, %c2_i32 : i32
      %c0_35 = arith.constant 0 : index
      %53 = arith.index_cast %52 : i32 to index
      %c0_36 = arith.constant 0 : index
      %c0_37 = arith.constant 0 : index
      %54 = vector.load %arg6[%c0_35, %53, %c0_36, %c0_37] : memref<1x18x18x4xbf16, #tpu.memory_space<vmem>>, vector<1x16x18x4xbf16>
      %55 = vector.shape_cast %54 : vector<1x16x18x4xbf16> to vector<16x18x4xbf16>
      %56 = arith.extf %55 : vector<16x18x4xbf16> to vector<16x18x4xf32>
      %57 = vector.broadcast %17 : vector<1x1x4xf32> to vector<16x18x4xf32>
      %58 = arith.mulf %56, %57 : vector<16x18x4xf32>
      %59 = vector.extract_strided_slice %58 {offsets = [0, 0, 0], sizes = [16, 16, 4], strides = [1, 1, 1]} : vector<16x18x4xf32> to vector<16x16x4xf32>
      %60 = arith.truncf %59 : vector<16x16x4xf32> to vector<16x16x4xbf16>
      %c0_38 = arith.constant 0 : index
      %c0_39 = arith.constant 0 : index
      %c24 = arith.constant 24 : index
      %61 = vector.load %arg8[%c0_38, %c0_39, %c24] : memref<16x16x36xbf16, #tpu.memory_space<vmem>>, vector<16x16x4xbf16>
      tpu.vector_store %arg8[%c0_38, %c0_39, %c24], %60 {strides = array<i32>} : memref<16x16x36xbf16, #tpu.memory_space<vmem>>, vector<16x16x4xbf16>,
      %62 = vector.extract_strided_slice %58 {offsets = [0, 1, 0], sizes = [16, 16, 4], strides = [1, 1, 1]} : vector<16x18x4xf32> to vector<16x16x4xf32>
      %63 = arith.truncf %62 : vector<16x16x4xf32> to vector<16x16x4xbf16>
      %c0_40 = arith.constant 0 : index
      %c0_41 = arith.constant 0 : index
      %c28 = arith.constant 28 : index
      %64 = vector.load %arg8[%c0_40, %c0_41, %c28] : memref<16x16x36xbf16, #tpu.memory_space<vmem>>, vector<16x16x4xbf16>
      tpu.vector_store %arg8[%c0_40, %c0_41, %c28], %63 {strides = array<i32>} : memref<16x16x36xbf16, #tpu.memory_space<vmem>>, vector<16x16x4xbf16>,
      %65 = vector.extract_strided_slice %58 {offsets = [0, 2, 0], sizes = [16, 16, 4], strides = [1, 1, 1]} : vector<16x18x4xf32> to vector<16x16x4xf32>
      %66 = arith.truncf %65 : vector<16x16x4xf32> to vector<16x16x4xbf16>
      %c0_42 = arith.constant 0 : index
      %c0_43 = arith.constant 0 : index
      %c32 = arith.constant 32 : index
      %67 = vector.load %arg8[%c0_42, %c0_43, %c32] : memref<16x16x36xbf16, #tpu.memory_space<vmem>>, vector<16x16x4xbf16>
      tpu.vector_store %arg8[%c0_42, %c0_43, %c32], %66 {strides = array<i32>} : memref<16x16x36xbf16, #tpu.memory_space<vmem>>, vector<16x16x4xbf16>,
    } else {
    }
    %c0 = arith.constant 0 : index
    %c0_1 = arith.constant 0 : index
    %c0_2 = arith.constant 0 : index
    %3 = vector.load %arg8[%c0, %c0_1, %c0_2] : memref<16x16x36xbf16, #tpu.memory_space<vmem>>, vector<16x16x36xbf16>
    %4 = vector.shape_cast %3 : vector<16x16x36xbf16> to vector<256x36xbf16>
    %c0_3 = arith.constant 0 : index
    %c0_4 = arith.constant 0 : index
    %5 = vector.load %arg5[%c0_3, %c0_4] : memref<36x128xbf16, #tpu.memory_space<vmem>>, vector<36x128xbf16>
    %cst = arith.constant dense<0.000000e+00> : vector<256x128xf32>
    %6 = tpu.matmul %4, %5, %cst {dimension_numbers = #tpu.dot_dimension_numbers<[1], [0], [0], [1], [0, 0, 1, 1], [], []>} : vector<256x36xbf16>, vector<36x128xbf16>, vector<256x128xf32> -> vector<256x128xf32>
    %c0_5 = arith.constant 0 : index
    %c0_6 = arith.constant 0 : index
    %c0_7 = arith.constant 0 : index
    %7 = vector.load %arg4[%c0_5, %c0_6, %c0_7] : memref<1x1x128xf32, #tpu.memory_space<vmem>>, vector<1x1x128xf32>
    %8 = vector.shape_cast %7 : vector<1x1x128xf32> to vector<1x128xf32>
    %9 = vector.broadcast %8 : vector<1x128xf32> to vector<256x128xf32>
    %10 = arith.mulf %6, %9 : vector<256x128xf32>
    %11 = vector.shape_cast %10 : vector<256x128xf32> to vector<16x16x128xf32>
    %c0_8 = arith.constant 0 : index
    %c0_9 = arith.constant 0 : index
    %c0_10 = arith.constant 0 : index
    %c0_11 = arith.constant 0 : index
    %12 = vector.load %arg7[%c0_8, %c0_9, %c0_10, %c0_11] : memref<1x16x16x128xf32, #tpu.memory_space<vmem>>, vector<1x16x16x128xf32>
    %13 = vector.shape_cast %12 : vector<1x16x16x128xf32> to vector<16x16x128xf32>
    %14 = vector.shape_cast %11 : vector<16x16x128xf32> to vector<1x16x16x128xf32>
    tpu.vector_store %arg7[%c0_8, %c0_9, %c0_10, %c0_11], %14 {strides = array<i32>} : memref<1x16x16x128xf32, #tpu.memory_space<vmem>>, vector<1x16x16x128xf32>,
    return
  }
  func.func @transform_0(%arg0: i32, %arg1: i32, %arg2: i32) -> (i32, i32, i32) {
    %c0_i32 = arith.constant 0 : i32
    %c0_i32_0 = arith.constant 0 : i32
    %c0_i32_1 = arith.constant 0 : i32
    return %arg0, %c0_i32, %c0_i32_0 : i32, i32, i32
  }
  func.func @transform_1(%arg0: i32, %arg1: i32, %arg2: i32) -> (i32, i32, i32) {
    %c0_i32 = arith.constant 0 : i32
    %c0_i32_0 = arith.constant 0 : i32
    return %arg0, %c0_i32, %arg2 : i32, i32, i32
  }
  func.func @transform_2(%arg0: i32, %arg1: i32, %arg2: i32) -> (i32, i32) {
    %c0_i32 = arith.constant 0 : i32
    %c0_i32_0 = arith.constant 0 : i32
    return %c0_i32, %arg2 : i32, i32
  }
  func.func @transform_3(%arg0: i32, %arg1: i32, %arg2: i32) -> (i32, i32, i32, i32) {
    %c0_i32 = arith.constant 0 : i32
    %c0_i32_0 = arith.constant 0 : i32
    %c0_i32_1 = arith.constant 0 : i32
    %c0_i32_2 = arith.constant 0 : i32
    return %arg0, %c0_i32, %c0_i32_0, %c0_i32_1 : i32, i32, i32, i32
  }
  func.func @transform_4(%arg0: i32, %arg1: i32, %arg2: i32) -> (i32, i32, i32, i32) {
    %c0_i32 = arith.constant 0 : i32
    %c0_i32_0 = arith.constant 0 : i32
    return %arg0, %arg1, %c0_i32, %arg2 : i32, i32, i32, i32
  }
}

</mosaic_0001>

<llo_original>
// kernel: tpu_custom_call.1
$region0: #{tpu_custom_call.1}
  #allocation0 [shape = 'u32[]', space=smem, size = 0x4, offset = 0x4, fixed_abs, tag = 'smem constant byte address 0x4 - core index']
  #allocation1 [shape = 'u32[144,128]{1,0:T(1,128)}', space=vmem, size = 0x12000, scoped, tag = 'internal scratch']
  #allocation2 [shape = 'bf16[16,16,36]{2,1,0:T(8,128)(2,1)}', space=vmem, size = 0x10000, scoped, tag = 'scratch operand']
  %s0 = inlined_call_operand.vmem [shape: f32[2,1,4], index: 0, kind: input, shape index: {}]
  %s1 = inlined_call_operand.vmem [shape: f32[2,1,128], index: 1, kind: input, shape index: {}]
  %s2 = inlined_call_operand.vmem [shape: bf16[36,128], index: 2, kind: input, shape index: {}]
  %s3 = inlined_call_operand.vmem [shape: bf16[2,18,18,4], index: 3, kind: input, shape index: {}]
  %s4 = inlined_call_operand.hbm [shape: f32[2,16,16,128], index: 4, kind: output, shape index: {}]
  %s5 = sld [smem:[#allocation0]]
  $region53: #{tpu_custom_call.1} parent=0
    _
  %s7 = ssub.s32 1, %s5
  %s8 = scalar_select 0, %s7, %s5
  $region1: #{tpu_custom_call.1} parent=0
    #allocation3 [shape = 'u8[262144]{0}', space=vmem, size = 0x40000, scoped, tag = 'output window, operand 0']
    #allocation4 [shape = 's32[2]{0}', space=sflag, size = 0x8, scoped, tag = 'scoped memory for tpu_custom_call.1']
    %9 = vsyncpa [#allocation4], 0
    %s10 = scalar_lea.sflag [#allocation4], 1
    %11 = vsyncpa %s10, 0
    loop: start=0, step=1, limit=4
    $region2: #{tpu_custom_call.1} parent=1 // loop_pre_header
      _
    $region3: #{tpu_custom_call.1} parent=1 // loop_header
      %s13 = sphi 0, %s17
      %p14 = scmp.ge.s32.totalorder %s13, 4
      %s20 = sphi 0, %s39
      %s21 = sphi 0, %s35
      %s22 = sphi 0, %s31
      %s23 = sphi 0, %s20
      %s24 = sphi 0, %s21
      %s25 = sphi 0, %s22
      %s26 = sphi 0, %s23
      %s27 = sphi 0, %s24
      %s28 = sphi 0, %s25
      %s42 = sphi 0, %s44
      %s45 = sphi 0, %s42
      %s46 = sphi 0, %s45
      %s62 = sphi 0, %s46
      %s70 = sphi 0, %s72
      %s73 = sphi 0, %s70
      %s74 = sphi 0, %s73
      %s90 = sphi 0, %s74
      %s96 = sphi 0, %s98
      %s99 = sphi 0, %s96
      %s100 = sphi 0, %s99
      %s116 = sphi 0, %s100
      %s122 = sphi 0, %s124
      %s125 = sphi 0, %s122
      %s126 = sphi 0, %s125
      %s142 = sphi 0, %s126
      %s152 = sphi 0, %s154
      %s155 = sphi 0, %s152
      %s156 = sphi 0, %s155
      %s172 = sphi 0, %s156
    $region4: #{tpu_custom_call.1} parent=1 // loop_header_branch
      %16 = sbr.rel (%p14) target = $region8
    $region5: #{tpu_custom_call.1} parent=1 // loop_body
      %s18 = ssub.s32 %s13, 1
      %s19 = ssub.s32 %s13, 2
      %s29 = sadd.s32 1, %s22
      %p30 = scmp.ge.s32.totalorder %s29, 1
      %s31 = scalar_select %p30, 0, %s29
      %s32 = sadd.s32 1, %s21
      %s33 = scalar_select %p30, %s32, %s21
      %p34 = scmp.ge.s32.totalorder %s33, 1
      %s35 = scalar_select %p34, 0, %s33
      %s36 = sadd.s32 1, %s20
      %s37 = scalar_select %p34, %s36, %s20
      %p38 = scmp.ge.s32.totalorder %s37, 2
      %s39 = scalar_select %p38, 0, %s37
      %s40 = ssub.s32 %s20, %s39
      %p41 = scmp.eq.s32.totalorder %s40, 0
      %s43 = sadd.s32 %s42, 1
      %s44 = scalar_select %p41, %s42, %s43
      %p47 = pneg %p41
      %p48 = scmp.eq.s32.totalorder %s13, 1
      %p49 = por %p47, %p48
      %p50 = scmp.ne.s32.totalorder %s42, %s45
      %p51 = scmp.eq.s32.totalorder %s13, 0
      %p52 = por %p50, %p51
      %p53 = scmp.ne.s32.totalorder %s42, %s45
      %p54 = scmp.eq.s32.totalorder %s18, 1
      %p55 = por %p53, %p54
      %p56 = scmp.ne.s32.totalorder %s45, %s46
      %p57 = scmp.eq.s32.totalorder %s18, 0
      %p58 = por %p56, %p57
      %p59 = scmp.ne.s32.totalorder %s45, %s46
      %p60 = scmp.eq.s32.totalorder %s19, 1
      %p61 = por %p59, %p60
      %p63 = scmp.ne.s32.totalorder %s46, %s62
      %p64 = scmp.eq.s32.totalorder %s19, 0
      %p65 = por %p63, %p64
      %s66 = ssub.s32 %s20, %s39
      %s67 = ssub.s32 %s22, %s31
      %s68 = sor.u32 %s66, %s67
      %p69 = scmp.eq.s32.totalorder %s68, 0
      %s71 = sadd.s32 %s70, 1
      %s72 = scalar_select %p69, %s70, %s71
      %p75 = pneg %p69
      %p76 = scmp.eq.s32.totalorder %s13, 1
      %p77 = por %p75, %p76
      %p78 = scmp.ne.s32.totalorder %s70, %s73
      %p79 = scmp.eq.s32.totalorder %s13, 0
      %p80 = por %p78, %p79
      %p81 = scmp.ne.s32.totalorder %s70, %s73
      %p82 = scmp.eq.s32.totalorder %s18, 1
      %p83 = por %p81, %p82
      %p84 = scmp.ne.s32.totalorder %s73, %s74
      %p85 = scmp.eq.s32.totalorder %s18, 0
      %p86 = por %p84, %p85
      %p87 = scmp.ne.s32.totalorder %s73, %s74
      %p88 = scmp.eq.s32.totalorder %s19, 1
      %p89 = por %p87, %p88
      %p91 = scmp.ne.s32.totalorder %s74, %s90
      %p92 = scmp.eq.s32.totalorder %s19, 0
      %p93 = por %p91, %p92
      %s94 = ssub.s32 %s22, %s31
      %p95 = scmp.eq.s32.totalorder %s94, 0
      %s97 = sadd.s32 %s96, 1
      %s98 = scalar_select %p95, %s96, %s97
      %p101 = pneg %p95
      %p102 = scmp.eq.s32.totalorder %s13, 1
      %p103 = por %p101, %p102
      %p104 = scmp.ne.s32.totalorder %s96, %s99
      %p105 = scmp.eq.s32.totalorder %s13, 0
      %p106 = por %p104, %p105
      %p107 = scmp.ne.s32.totalorder %s96, %s99
      %p108 = scmp.eq.s32.totalorder %s18, 1
      %p109 = por %p107, %p108
      %p110 = scmp.ne.s32.totalorder %s99, %s100
      %p111 = scmp.eq.s32.totalorder %s18, 0
      %p112 = por %p110, %p111
      %p113 = scmp.ne.s32.totalorder %s99, %s100
      %p114 = scmp.eq.s32.totalorder %s19, 1
      %p115 = por %p113, %p114
      %p117 = scmp.ne.s32.totalorder %s100, %s116
      %p118 = scmp.eq.s32.totalorder %s19, 0
      %p119 = por %p117, %p118
      %s120 = ssub.s32 %s20, %s39
      %p121 = scmp.eq.s32.totalorder %s120, 0
      %s123 = sadd.s32 %s122, 1
      %s124 = scalar_select %p121, %s122, %s123
      %p127 = pneg %p121
      %p128 = scmp.eq.s32.totalorder %s13, 1
      %p129 = por %p127, %p128
      %p130 = scmp.ne.s32.totalorder %s122, %s125
      %p131 = scmp.eq.s32.totalorder %s13, 0
      %p132 = por %p130, %p131
      %p133 = scmp.ne.s32.totalorder %s122, %s125
      %p134 = scmp.eq.s32.totalorder %s18, 1
      %p135 = por %p133, %p134
      %p136 = scmp.ne.s32.totalorder %s125, %s126
      %p137 = scmp.eq.s32.totalorder %s18, 0
      %p138 = por %p136, %p137
      %p139 = scmp.ne.s32.totalorder %s125, %s126
      %p140 = scmp.eq.s32.totalorder %s19, 1
      %p141 = por %p139, %p140
      %p143 = scmp.ne.s32.totalorder %s126, %s142
      %p144 = scmp.eq.s32.totalorder %s19, 0
      %p145 = por %p143, %p144
      %s146 = ssub.s32 %s20, %s39
      %s147 = ssub.s32 %s21, %s35
      %s148 = sor.u32 %s146, %s147
      %s149 = ssub.s32 %s22, %s31
      %s150 = sor.u32 %s148, %s149
      %p151 = scmp.eq.s32.totalorder %s150, 0
      %s153 = sadd.s32 %s152, 1
      %s154 = scalar_select %p151, %s152, %s153
      %p157 = pneg %p151
      %p158 = scmp.eq.s32.totalorder %s13, 1
      %p159 = por %p157, %p158
      %p160 = scmp.ne.s32.totalorder %s152, %s155
      %p161 = scmp.eq.s32.totalorder %s13, 0
      %p162 = por %p160, %p161
      %p163 = scmp.ne.s32.totalorder %s152, %s155
      %p164 = scmp.eq.s32.totalorder %s18, 1
      %p165 = por %p163, %p164
      %p166 = scmp.ne.s32.totalorder %s155, %s156
      %p167 = scmp.eq.s32.totalorder %s18, 0
      %p168 = por %p166, %p167
      %p169 = scmp.ne.s32.totalorder %s155, %s156
      %p170 = scmp.eq.s32.totalorder %s19, 1
      %p171 = por %p169, %p170
      %p173 = scmp.ne.s32.totalorder %s156, %s172
      %p174 = scmp.eq.s32.totalorder %s19, 0
      %p175 = por %p173, %p174
      %p176 = scmp.le.s32.totalorder 1, %s13
      %p177 = scmp.lt.s32.totalorder %s13, 3
      %p178 = pnand %p176, %p177
      %p179 = pneg %p178
      // Predicated region
      $region9: #{tpu_custom_call.1} parent=5 // pred_check
        _
      $region10: #{tpu_custom_call.1} parent=5 // pred_check_branch
        %181 = sbr.rel (%p178) target = $region12
      $region11: #{tpu_custom_call.1} parent=5 // pred_region
        %s182 = ssub.s32 %s13, 1
        // Predicated region
        $region13: #{tpu_custom_call.1} parent=11 // pred_check
          %p183 = pneg %p112
        $region14: #{tpu_custom_call.1} parent=11 // pred_check_branch
          %185 = sbr.rel (%p183) target = $region16
        $region15: #{tpu_custom_call.1} parent=11 // pred_region
          %p186 = scmp.lt.s32.totalorder %s25, 0
          %s187 = scalar_select %p186, %s25, 0
          %s188 = smul.addr %s187, 4
          %s189 = scalar_lea.vmem %s2, %s188
        $region16: #{tpu_custom_call.1} parent=11 // pred_fallthru
          _
      $region12: #{tpu_custom_call.1} parent=5 // pred_fallthru
        _
      %p190 = scmp.lt.s32.totalorder %s13, 2
      // Predicated region
      $region17: #{tpu_custom_call.1} parent=5 // pred_check
        %p191 = pneg %p190
      $region18: #{tpu_custom_call.1} parent=5 // pred_check_branch
        %193 = sbr.rel (%p191) target = $region20
      $region19: #{tpu_custom_call.1} parent=5 // pred_region
        // Predicated region
        $region21: #{tpu_custom_call.1} parent=19 // pred_check
          %p194 = pneg %p52
        $region22: #{tpu_custom_call.1} parent=19 // pred_check_branch
          %196 = sbr.rel (%p194) target = $region24
        $region23: #{tpu_custom_call.1} parent=19 // pred_region
          %p197 = scmp.lt.s32.totalorder %s20, 1
          %s198 = scalar_select %p197, %s20, 1
          %s199 = scalar_lea.vmem %s0, %s198
        $region24: #{tpu_custom_call.1} parent=19 // pred_fallthru
          _
        // Predicated region
        $region25: #{tpu_custom_call.1} parent=19 // pred_check
          %p200 = pneg %p80
        $region26: #{tpu_custom_call.1} parent=19 // pred_check_branch
          %202 = sbr.rel (%p200) target = $region28
        $region27: #{tpu_custom_call.1} parent=19 // pred_region
          %p203 = scmp.lt.s32.totalorder %s20, 1
          %s204 = scalar_select %p203, %s20, 1
          %p205 = scmp.lt.s32.totalorder %s22, 0
          %s206 = scalar_select %p205, %s22, 0
          %s207 = sadd.s32 %s206, %s204
          %s208 = scalar_lea.vmem %s1, %s207
        $region28: #{tpu_custom_call.1} parent=19 // pred_fallthru
          _
        // Predicated region
        $region29: #{tpu_custom_call.1} parent=19 // pred_check
          %p209 = pneg %p132
        $region30: #{tpu_custom_call.1} parent=19 // pred_check_branch
          %211 = sbr.rel (%p209) target = $region32
        $region31: #{tpu_custom_call.1} parent=19 // pred_region
          %p212 = scmp.lt.s32.totalorder %s20, 1
          %s213 = scalar_select %p212, %s20, 1
          %s214 = smul.addr %s213, 54
          %s215 = smul.addr %s214, 4
          %s216 = scalar_lea.vmem %s3, %s215
        $region32: #{tpu_custom_call.1} parent=19 // pred_fallthru
          _
      $region20: #{tpu_custom_call.1} parent=5 // pred_fallthru
        _
      %p217 = scmp.le.s32.totalorder 1, %s13
      %p218 = scmp.lt.s32.totalorder %s13, 3
      %p219 = pnand %p217, %p218
      %p220 = pneg %p219
      // Predicated region
      $region33: #{tpu_custom_call.1} parent=5 // pred_check
        _
      $region34: #{tpu_custom_call.1} parent=5 // pred_check_branch
        %222 = sbr.rel (%p219) target = $region36
      $region35: #{tpu_custom_call.1} parent=5 // pred_region
        %s223 = ssub.s32 %s13, 1
        %p224 = scmp.lt.s32.totalorder %s23, 1
        %s225 = scalar_select %p224, %s23, 1
        %s226 = scalar_lea.vmem %s0, %s225
        %p227 = pneg %p58
        %p228 = pneg %p55
        %p229 = scmp.lt.s32.totalorder %s23, 1
        %s230 = scalar_select %p229, %s23, 1
        %p231 = scmp.lt.s32.totalorder %s25, 0
        %s232 = scalar_select %p231, %s25, 0
        %s233 = sadd.s32 %s232, %s230
        %s234 = scalar_lea.vmem %s1, %s233
        %p235 = pneg %p86
        %p236 = pneg %p83
        %p237 = scmp.lt.s32.totalorder %s25, 0
        %s238 = scalar_select %p237, %s25, 0
        %s239 = smul.addr %s238, 4
        %s240 = scalar_lea.vmem %s2, %s239
        %p241 = pneg %p112
        %p242 = pneg %p109
        %p243 = scmp.lt.s32.totalorder %s23, 1
        %s244 = scalar_select %p243, %s23, 1
        %s245 = smul.addr %s244, 54
        %s246 = smul.addr %s245, 4
        %s247 = scalar_lea.vmem %s3, %s246
        %p248 = pneg %p138
        %p249 = pneg %p135
        %p250 = pneg %p168
        %p251 = pneg %p165
        %s252 = sand.u32 %s155, 1
        %s253 = scalar_lea.sflag [#allocation4], %s252
        %s254 = sand.u32 %s155, 1
        %s255 = smul.addr %s254, 256
        %s256 = scalar_lea.vmem [#allocation3], %s255
        %p257 = scmp.lt.s32.totalorder %s23, 1
        %s258 = scalar_select %p257, %s23, 1
        %s259 = scalar_lea.vmem %s0, %s258
        %p260 = scmp.lt.s32.totalorder %s23, 1
        %s261 = scalar_select %p260, %s23, 1
        %p262 = scmp.lt.s32.totalorder %s25, 0
        %s263 = scalar_select %p262, %s25, 0
        %s264 = sadd.s32 %s263, %s261
        %s265 = scalar_lea.vmem %s1, %s264
        %p266 = scmp.lt.s32.totalorder %s25, 0
        %s267 = scalar_select %p266, %s25, 0
        %s268 = smul.addr %s267, 4
        %s269 = scalar_lea.vmem %s2, %s268
        %p270 = scmp.lt.s32.totalorder %s23, 1
        %s271 = scalar_select %p270, %s23, 1
        %s272 = smul.addr %s271, 54
        %s273 = smul.addr %s272, 4
        %s274 = scalar_lea.vmem %s3, %s273
        %s275 = smul.u32 16, %s24
        %p277 = scmp.eq.s32.totalorder %s25, 0
        // Predicated region
        $region37: #{tpu_custom_call.1} parent=35 // pred_check
          %p278 = pneg %p277
        $region38: #{tpu_custom_call.1} parent=35 // pred_check_branch
          %280 = sbr.rel (%p278) target = $region40
        $region39: #{tpu_custom_call.1} parent=35 // pred_region
          %v281 = vld [vmem:[%s259] sm:$0x1]
          %s282 = smul.u32 %s24, 16
          %s283 = smul.u32 %s282, 3
          %s284 = smul.addr %s283, 4
          %s285 = scalar_lea.vmem %s274, %s284
          %v286 = vld [vmem:[%s285] sm:$0xf]
          %v287 = vld [vmem:[%s285 + $0x4] sm:$0xf]
          %v288 = vld [vmem:[%s285 + $0x8] sm:$0x1]
          %v289 = vld [vmem:[%s285 + $0xc] sm:$0xf]
          %v290 = vld [vmem:[%s285 + $0x10] sm:$0xf]
          %v291 = vld [vmem:[%s285 + $0x14] sm:$0x1]
          %v292 = vld [vmem:[%s285 + $0x18] sm:$0xf]
          %v293 = vld [vmem:[%s285 + $0x1c] sm:$0xf]
          %v294 = vld [vmem:[%s285 + $0x20] sm:$0x1]
          %v295 = vld [vmem:[%s285 + $0x24] sm:$0xf]
          %v296 = vld [vmem:[%s285 + $0x28] sm:$0xf]
          %v297 = vld [vmem:[%s285 + $0x2c] sm:$0x1]
          %v298 = vld [vmem:[%s285 + $0x30] sm:$0xf]
          %v299 = vld [vmem:[%s285 + $0x34] sm:$0xf]
          %v300 = vld [vmem:[%s285 + $0x38] sm:$0x1]
          %v301 = vld [vmem:[%s285 + $0x3c] sm:$0xf]
          %v302 = vld [vmem:[%s285 + $0x40] sm:$0xf]
          %v303 = vld [vmem:[%s285 + $0x44] sm:$0x1]
          %v304 = vld [vmem:[%s285 + $0x48] sm:$0xf]
          %v305 = vld [vmem:[%s285 + $0x4c] sm:$0xf]
          %v306 = vld [vmem:[%s285 + $0x50] sm:$0x1]
          %v307 = vld [vmem:[%s285 + $0x54] sm:$0xf]
          %v308 = vld [vmem:[%s285 + $0x58] sm:$0xf]
          %v309 = vld [vmem:[%s285 + $0x5c] sm:$0x1]
          %v310 = vld [vmem:[%s285 + $0x60] sm:$0xf]
          %v311 = vld [vmem:[%s285 + $0x64] sm:$0xf]
          %v312 = vld [vmem:[%s285 + $0x68] sm:$0x1]
          %v313 = vld [vmem:[%s285 + $0x6c] sm:$0xf]
          %v314 = vld [vmem:[%s285 + $0x70] sm:$0xf]
          %v315 = vld [vmem:[%s285 + $0x74] sm:$0x1]
          %v316 = vld [vmem:[%s285 + $0x78] sm:$0xf]
          %v317 = vld [vmem:[%s285 + $0x7c] sm:$0xf]
          %v318 = vld [vmem:[%s285 + $0x80] sm:$0x1]
          %v319 = vld [vmem:[%s285 + $0x84] sm:$0xf]
          %v320 = vld [vmem:[%s285 + $0x88] sm:$0xf]
          %v321 = vld [vmem:[%s285 + $0x8c] sm:$0x1]
          %v322 = vld [vmem:[%s285 + $0x90] sm:$0xf]
          %v323 = vld [vmem:[%s285 + $0x94] sm:$0xf]
          %v324 = vld [vmem:[%s285 + $0x98] sm:$0x1]
          %v325 = vld [vmem:[%s285 + $0x9c] sm:$0xf]
          %v326 = vld [vmem:[%s285 + $0xa0] sm:$0xf]
          %v327 = vld [vmem:[%s285 + $0xa4] sm:$0x1]
          %v328 = vld [vmem:[%s285 + $0xa8] sm:$0xf]
          %v329 = vld [vmem:[%s285 + $0xac] sm:$0xf]
          %v330 = vld [vmem:[%s285 + $0xb0] sm:$0x1]
          %v331 = vld [vmem:[%s285 + $0xb4] sm:$0xf]
          %v332 = vld [vmem:[%s285 + $0xb8] sm:$0xf]
          %v333 = vld [vmem:[%s285 + $0xbc] sm:$0x1]
          %v334 = vunpack.c.l.bf16 %v286
          %v335 = vunpack.c.l.bf16 %v287
          %v336 = vunpack.c.l.bf16 %v288
          %v337 = vunpack.c.l.bf16 %v289
          %v338 = vunpack.c.l.bf16 %v290
          %v339 = vunpack.c.l.bf16 %v291
          %v340 = vunpack.c.l.bf16 %v292
          %v341 = vunpack.c.l.bf16 %v293
          %v342 = vunpack.c.l.bf16 %v294
          %v343 = vunpack.c.l.bf16 %v295
          %v344 = vunpack.c.l.bf16 %v296
          %v345 = vunpack.c.l.bf16 %v297
          %v346 = vunpack.c.l.bf16 %v298
          %v347 = vunpack.c.l.bf16 %v299
          %v348 = vunpack.c.l.bf16 %v300
          %v349 = vunpack.c.l.bf16 %v301
          %v350 = vunpack.c.l.bf16 %v302
          %v351 = vunpack.c.l.bf16 %v303
          %v352 = vunpack.c.l.bf16 %v304
          %v353 = vunpack.c.l.bf16 %v305
          %v354 = vunpack.c.l.bf16 %v306
          %v355 = vunpack.c.l.bf16 %v307
          %v356 = vunpack.c.l.bf16 %v308
          %v357 = vunpack.c.l.bf16 %v309
          %v358 = vunpack.c.l.bf16 %v310
          %v359 = vunpack.c.l.bf16 %v311
          %v360 = vunpack.c.l.bf16 %v312
          %v361 = vunpack.c.l.bf16 %v313
          %v362 = vunpack.c.l.bf16 %v314
          %v363 = vunpack.c.l.bf16 %v315
          %v364 = vunpack.c.l.bf16 %v316
          %v365 = vunpack.c.l.bf16 %v317
          %v366 = vunpack.c.l.bf16 %v318
          %v367 = vunpack.c.l.bf16 %v319
          %v368 = vunpack.c.l.bf16 %v320
          %v369 = vunpack.c.l.bf16 %v321
          %v370 = vunpack.c.l.bf16 %v322
          %v371 = vunpack.c.l.bf16 %v323
          %v372 = vunpack.c.l.bf16 %v324
          %v373 = vunpack.c.l.bf16 %v325
          %v374 = vunpack.c.l.bf16 %v326
          %v375 = vunpack.c.l.bf16 %v327
          %v376 = vunpack.c.l.bf16 %v328
          %v377 = vunpack.c.l.bf16 %v329
          %v378 = vunpack.c.l.bf16 %v330
          %v379 = vunpack.c.l.bf16 %v331
          %v380 = vunpack.c.l.bf16 %v332
          %v381 = vunpack.c.l.bf16 %v333
          %v383 = vlaneseq
          %v384 = vshrl.u32 %v383, 7
          %v385 = vsub.s32 0, %v384
          %v386 = vrot.slane %v281, %v385
          %v388 = vmul.f32 %v334, %v386
          %v389 = vmul.f32 %v335, %v386
          %v390 = vmul.f32 %v336, %v386
          %v391 = vmul.f32 %v337, %v386
          %v392 = vmul.f32 %v338, %v386
          %v393 = vmul.f32 %v339, %v386
          %v394 = vmul.f32 %v340, %v386
          %v395 = vmul.f32 %v341, %v386
          %v396 = vmul.f32 %v342, %v386
          %v397 = vmul.f32 %v343, %v386
          %v398 = vmul.f32 %v344, %v386
          %v399 = vmul.f32 %v345, %v386
          %v400 = vmul.f32 %v346, %v386
          %v401 = vmul.f32 %v347, %v386
          %v402 = vmul.f32 %v348, %v386
          %v403 = vmul.f32 %v349, %v386
          %v404 = vmul.f32 %v350, %v386
          %v405 = vmul.f32 %v351, %v386
          %v406 = vmul.f32 %v352, %v386
          %v407 = vmul.f32 %v353, %v386
          %v408 = vmul.f32 %v354, %v386
          %v409 = vmul.f32 %v355, %v386
          %v410 = vmul.f32 %v356, %v386
          %v411 = vmul.f32 %v357, %v386
          %v412 = vmul.f32 %v358, %v386
          %v413 = vmul.f32 %v359, %v386
          %v414 = vmul.f32 %v360, %v386
          %v415 = vmul.f32 %v361, %v386
          %v416 = vmul.f32 %v362, %v386
          %v417 = vmul.f32 %v363, %v386
          %v418 = vmul.f32 %v364, %v386
          %v419 = vmul.f32 %v365, %v386
          %v420 = vmul.f32 %v366, %v386
          %v421 = vmul.f32 %v367, %v386
          %v422 = vmul.f32 %v368, %v386
          %v423 = vmul.f32 %v369, %v386
          %v424 = vmul.f32 %v370, %v386
          %v425 = vmul.f32 %v371, %v386
          %v426 = vmul.f32 %v372, %v386
          %v427 = vmul.f32 %v373, %v386
          %v428 = vmul.f32 %v374, %v386
          %v429 = vmul.f32 %v375, %v386
          %v430 = vmul.f32 %v376, %v386
          %v431 = vmul.f32 %v377, %v386
          %v432 = vmul.f32 %v378, %v386
          %v433 = vmul.f32 %v379, %v386
          %v434 = vmul.f32 %v380, %v386
          %v435 = vmul.f32 %v381, %v386
          %v436 = vpack.c.bf16 %v389, %v388
          %v437 = vpack.c.bf16 %v392, %v391
          %v438 = vpack.c.bf16 %v395, %v394
          %v439 = vpack.c.bf16 %v398, %v397
          %v440 = vpack.c.bf16 %v401, %v400
          %v441 = vpack.c.bf16 %v404, %v403
          %v442 = vpack.c.bf16 %v407, %v406
          %v443 = vpack.c.bf16 %v410, %v409
          %v444 = vpack.c.bf16 %v413, %v412
          %v445 = vpack.c.bf16 %v416, %v415
          %v446 = vpack.c.bf16 %v419, %v418
          %v447 = vpack.c.bf16 %v422, %v421
          %v448 = vpack.c.bf16 %v425, %v424
          %v449 = vpack.c.bf16 %v428, %v427
          %v450 = vpack.c.bf16 %v431, %v430
          %v451 = vpack.c.bf16 %v434, %v433
          %v468 = vunpack.c.l.b16 %v436
          %v469 = vunpack.c.h.b16 %v436
          %v470 = vunpack.c.l.b16 %v437
          %v471 = vunpack.c.h.b16 %v437
          %v472 = vunpack.c.l.b16 %v438
          %v473 = vunpack.c.h.b16 %v438
          %v474 = vunpack.c.l.b16 %v439
          %v475 = vunpack.c.h.b16 %v439
          %v476 = vunpack.c.l.b16 %v440
          %v477 = vunpack.c.h.b16 %v440
          %v478 = vunpack.c.l.b16 %v441
          %v479 = vunpack.c.h.b16 %v441
          %v480 = vunpack.c.l.b16 %v442
          %v481 = vunpack.c.h.b16 %v442
          %v482 = vunpack.c.l.b16 %v443
          %v483 = vunpack.c.h.b16 %v443
          %v484 = vunpack.c.l.b16 %v444
          %v485 = vunpack.c.h.b16 %v444
          %v486 = vunpack.c.l.b16 %v445
          %v487 = vunpack.c.h.b16 %v445
          %v488 = vunpack.c.l.b16 %v446
          %v489 = vunpack.c.h.b16 %v446
          %v490 = vunpack.c.l.b16 %v447
          %v491 = vunpack.c.h.b16 %v447
          %v492 = vunpack.c.l.b16 %v448
          %v493 = vunpack.c.h.b16 %v448
          %v494 = vunpack.c.l.b16 %v449
          %v495 = vunpack.c.h.b16 %v449
          %v496 = vunpack.c.l.b16 %v450
          %v497 = vunpack.c.h.b16 %v450
          %v498 = vunpack.c.l.b16 %v451
          %v499 = vunpack.c.h.b16 %v451
          %v500 = vpack.c.b16 %v468, %v468
          %v501 = vpack.c.b16 %v469, %v469
          %v502 = vpack.c.b16 %v470, %v470
          %v503 = vpack.c.b16 %v471, %v471
          %v504 = vpack.c.b16 %v472, %v472
          %v505 = vpack.c.b16 %v473, %v473
          %v506 = vpack.c.b16 %v474, %v474
          %v507 = vpack.c.b16 %v475, %v475
          %v508 = vpack.c.b16 %v476, %v476
          %v509 = vpack.c.b16 %v477, %v477
          %v510 = vpack.c.b16 %v478, %v478
          %v511 = vpack.c.b16 %v479, %v479
          %v512 = vpack.c.b16 %v480, %v480
          %v513 = vpack.c.b16 %v481, %v481
          %v514 = vpack.c.b16 %v482, %v482
          %v515 = vpack.c.b16 %v483, %v483
          %v516 = vpack.c.b16 %v484, %v484
          %v517 = vpack.c.b16 %v485, %v485
          %v518 = vpack.c.b16 %v486, %v486
          %v519 = vpack.c.b16 %v487, %v487
          %v520 = vpack.c.b16 %v488, %v488
          %v521 = vpack.c.b16 %v489, %v489
          %v522 = vpack.c.b16 %v490, %v490
          %v523 = vpack.c.b16 %v491, %v491
          %v524 = vpack.c.b16 %v492, %v492
          %v525 = vpack.c.b16 %v493, %v493
          %v526 = vpack.c.b16 %v494, %v494
          %v527 = vpack.c.b16 %v495, %v495
          %v528 = vpack.c.b16 %v496, %v496
          %v529 = vpack.c.b16 %v497, %v497
          %v530 = vpack.c.b16 %v498, %v498
          %v531 = vpack.c.b16 %v499, %v499
          %vm564 = vcmask 27648
          %565 = vst.msk [vmem:[#allocation2] sm:$0xf] %vm564, %v500
          %566 = vst.msk [vmem:[#allocation2 + $0x4] sm:$0xf] %vm564, %v501
          %567 = vst.msk [vmem:[#allocation2 + $0x8] sm:$0xf] %vm564, %v502
          %568 = vst.msk [vmem:[#allocation2 + $0xc] sm:$0xf] %vm564, %v503
          %569 = vst.msk [vmem:[#allocation2 + $0x10] sm:$0xf] %vm564, %v504
          %570 = vst.msk [vmem:[#allocation2 + $0x14] sm:$0xf] %vm564, %v505
          %571 = vst.msk [vmem:[#allocation2 + $0x18] sm:$0xf] %vm564, %v506
          %572 = vst.msk [vmem:[#allocation2 + $0x1c] sm:$0xf] %vm564, %v507
          %573 = vst.msk [vmem:[#allocation2 + $0x20] sm:$0xf] %vm564, %v508
          %574 = vst.msk [vmem:[#allocation2 + $0x24] sm:$0xf] %vm564, %v509
          %575 = vst.msk [vmem:[#allocation2 + $0x28] sm:$0xf] %vm564, %v510
          %576 = vst.msk [vmem:[#allocation2 + $0x2c] sm:$0xf] %vm564, %v511
          %577 = vst.msk [vmem:[#allocation2 + $0x30] sm:$0xf] %vm564, %v512
          %578 = vst.msk [vmem:[#allocation2 + $0x34] sm:$0xf] %vm564, %v513
          %579 = vst.msk [vmem:[#allocation2 + $0x38] sm:$0xf] %vm564, %v514
          %580 = vst.msk [vmem:[#allocation2 + $0x3c] sm:$0xf] %vm564, %v515
          %581 = vst.msk [vmem:[#allocation2 + $0x40] sm:$0xf] %vm564, %v516
          %582 = vst.msk [vmem:[#allocation2 + $0x44] sm:$0xf] %vm564, %v517
          %583 = vst.msk [vmem:[#allocation2 + $0x48] sm:$0xf] %vm564, %v518
          %584 = vst.msk [vmem:[#allocation2 + $0x4c] sm:$0xf] %vm564, %v519
          %585 = vst.msk [vmem:[#allocation2 + $0x50] sm:$0xf] %vm564, %v520
          %586 = vst.msk [vmem:[#allocation2 + $0x54] sm:$0xf] %vm564, %v521
          %587 = vst.msk [vmem:[#allocation2 + $0x58] sm:$0xf] %vm564, %v522
          %588 = vst.msk [vmem:[#allocation2 + $0x5c] sm:$0xf] %vm564, %v523
          %589 = vst.msk [vmem:[#allocation2 + $0x60] sm:$0xf] %vm564, %v524
          %590 = vst.msk [vmem:[#allocation2 + $0x64] sm:$0xf] %vm564, %v525
          %591 = vst.msk [vmem:[#allocation2 + $0x68] sm:$0xf] %vm564, %v526
          %592 = vst.msk [vmem:[#allocation2 + $0x6c] sm:$0xf] %vm564, %v527
          %593 = vst.msk [vmem:[#allocation2 + $0x70] sm:$0xf] %vm564, %v528
          %594 = vst.msk [vmem:[#allocation2 + $0x74] sm:$0xf] %vm564, %v529
          %595 = vst.msk [vmem:[#allocation2 + $0x78] sm:$0xf] %vm564, %v530
          %596 = vst.msk [vmem:[#allocation2 + $0x7c] sm:$0xf] %vm564, %v531
          %v597 = vpack.c.bf16 %v390, %v390
          %v598 = vpack.c.bf16 %v393, %v393
          %v599 = vpack.c.bf16 %v396, %v396
          %v600 = vpack.c.bf16 %v399, %v399
          %v601 = vpack.c.bf16 %v402, %v402
          %v602 = vpack.c.bf16 %v405, %v405
          %v603 = vpack.c.bf16 %v408, %v408
          %v604 = vpack.c.bf16 %v411, %v411
          %v605 = vpack.c.bf16 %v414, %v414
          %v606 = vpack.c.bf16 %v417, %v417
          %v607 = vpack.c.bf16 %v420, %v420
          %v608 = vpack.c.bf16 %v423, %v423
          %v609 = vpack.c.bf16 %v426, %v426
          %v610 = vpack.c.bf16 %v429, %v429
          %v611 = vpack.c.bf16 %v432, %v432
          %v612 = vpack.c.bf16 %v435, %v435
          %v629 = vunpack.c.l.b16 %v597
          %v630 = vunpack.c.l.b16 %v598
          %v631 = vunpack.c.l.b16 %v599
          %v632 = vunpack.c.l.b16 %v600
          %v633 = vunpack.c.l.b16 %v601
          %v634 = vunpack.c.l.b16 %v602
          %v635 = vunpack.c.l.b16 %v603
          %v636 = vunpack.c.l.b16 %v604
          %v637 = vunpack.c.l.b16 %v605
          %v638 = vunpack.c.l.b16 %v606
          %v639 = vunpack.c.l.b16 %v607
          %v640 = vunpack.c.l.b16 %v608
          %v641 = vunpack.c.l.b16 %v609
          %v642 = vunpack.c.l.b16 %v610
          %v643 = vunpack.c.l.b16 %v611
          %v644 = vunpack.c.l.b16 %v612
          %v645 = vpack.c.b16 %v629, %v629
          %v646 = vpack.c.b16 %v630, %v630
          %v647 = vpack.c.b16 %v631, %v631
          %v648 = vpack.c.b16 %v632, %v632
          %v649 = vpack.c.b16 %v633, %v633
          %v650 = vpack.c.b16 %v634, %v634
          %v651 = vpack.c.b16 %v635, %v635
          %v652 = vpack.c.b16 %v636, %v636
          %v653 = vpack.c.b16 %v637, %v637
          %v654 = vpack.c.b16 %v638, %v638
          %v655 = vpack.c.b16 %v639, %v639
          %v656 = vpack.c.b16 %v640, %v640
          %v657 = vpack.c.b16 %v641, %v641
          %v658 = vpack.c.b16 %v642, %v642
          %v659 = vpack.c.b16 %v643, %v643
          %v660 = vpack.c.b16 %v644, %v644
          %vm661 = vsmask.f32 3328
          %vm662 = vsmask.f32 7440
          %vm663 = vmor %vm661, %vm662
          %v665 = vshrl.u32 %v500, 16
          %v667 = vrot.slane %v665, 4
          %v668 = vshll.u32 %v500, 16
          %v670 = vrot.slane %v668, 5
          %v671 = vor.u32 %v667, %v670
          %v672 = vrot.slane %v671, 4
          %v674 = vshll.u32 %v501, 16
          %v676 = vrot.slane %v674, 5
          %v677 = vsel %vm663, %v672, %v676
          %v678 = vshrl.u32 %v501, 16
          %v680 = vrot.slane %v678, 4
          %v681 = vor.u32 %v680, %v676
          %v682 = vrot.slane %v681, 4
          %v684 = vshll.u32 %v645, 16
          %v686 = vrot.slane %v684, 5
          %v687 = vsel %vm663, %v682, %v686
          %v689 = vshrl.u32 %v502, 16
          %v691 = vrot.slane %v689, 4
          %v692 = vshll.u32 %v502, 16
          %v694 = vrot.slane %v692, 5
          %v695 = vor.u32 %v691, %v694
          %v696 = vrot.slane %v695, 4
          %v698 = vshll.u32 %v503, 16
          %v700 = vrot.slane %v698, 5
          %v701 = vsel %vm663, %v696, %v700
          %v702 = vshrl.u32 %v503, 16
          %v704 = vrot.slane %v702, 4
          %v705 = vor.u32 %v704, %v700
          %v706 = vrot.slane %v705, 4
          %v708 = vshll.u32 %v646, 16
          %v710 = vrot.slane %v708, 5
          %v711 = vsel %vm663, %v706, %v710
          %v713 = vshrl.u32 %v504, 16
          %v715 = vrot.slane %v713, 4
          %v716 = vshll.u32 %v504, 16
          %v718 = vrot.slane %v716, 5
          %v719 = vor.u32 %v715, %v718
          %v720 = vrot.slane %v719, 4
          %v722 = vshll.u32 %v505, 16
          %v724 = vrot.slane %v722, 5
          %v725 = vsel %vm663, %v720, %v724
          %v726 = vshrl.u32 %v505, 16
          %v728 = vrot.slane %v726, 4
          %v729 = vor.u32 %v728, %v724
          %v730 = vrot.slane %v729, 4
          %v732 = vshll.u32 %v647, 16
          %v734 = vrot.slane %v732, 5
          %v735 = vsel %vm663, %v730, %v734
          %v737 = vshrl.u32 %v506, 16
          %v739 = vrot.slane %v737, 4
          %v740 = vshll.u32 %v506, 16
          %v742 = vrot.slane %v740, 5
          %v743 = vor.u32 %v739, %v742
          %v744 = vrot.slane %v743, 4
          %v746 = vshll.u32 %v507, 16
          %v748 = vrot.slane %v746, 5
          %v749 = vsel %vm663, %v744, %v748
          %v750 = vshrl.u32 %v507, 16
          %v752 = vrot.slane %v750, 4
          %v753 = vor.u32 %v752, %v748
          %v754 = vrot.slane %v753, 4
          %v756 = vshll.u32 %v648, 16
          %v758 = vrot.slane %v756, 5
          %v759 = vsel %vm663, %v754, %v758
          %v761 = vshrl.u32 %v508, 16
          %v763 = vrot.slane %v761, 4
          %v764 = vshll.u32 %v508, 16
          %v766 = vrot.slane %v764, 5
          %v767 = vor.u32 %v763, %v766
          %v768 = vrot.slane %v767, 4
          %v770 = vshll.u32 %v509, 16
          %v772 = vrot.slane %v770, 5
          %v773 = vsel %vm663, %v768, %v772
          %v774 = vshrl.u32 %v509, 16
          %v776 = vrot.slane %v774, 4
          %v777 = vor.u32 %v776, %v772
          %v778 = vrot.slane %v777, 4
          %v780 = vshll.u32 %v649, 16
          %v782 = vrot.slane %v780, 5
          %v783 = vsel %vm663, %v778, %v782
          %v785 = vshrl.u32 %v510, 16
          %v787 = vrot.slane %v785, 4
          %v788 = vshll.u32 %v510, 16
          %v790 = vrot.slane %v788, 5
          %v791 = vor.u32 %v787, %v790
          %v792 = vrot.slane %v791, 4
          %v794 = vshll.u32 %v511, 16
          %v796 = vrot.slane %v794, 5
          %v797 = vsel %vm663, %v792, %v796
          %v798 = vshrl.u32 %v511, 16
          %v800 = vrot.slane %v798, 4
          %v801 = vor.u32 %v800, %v796
          %v802 = vrot.slane %v801, 4
          %v804 = vshll.u32 %v650, 16
          %v806 = vrot.slane %v804, 5
          %v807 = vsel %vm663, %v802, %v806
          %v809 = vshrl.u32 %v512, 16
          %v811 = vrot.slane %v809, 4
          %v812 = vshll.u32 %v512, 16
          %v814 = vrot.slane %v812, 5
          %v815 = vor.u32 %v811, %v814
          %v816 = vrot.slane %v815, 4
          %v818 = vshll.u32 %v513, 16
          %v820 = vrot.slane %v818, 5
          %v821 = vsel %vm663, %v816, %v820
          %v822 = vshrl.u32 %v513, 16
          %v824 = vrot.slane %v822, 4
          %v825 = vor.u32 %v824, %v820
          %v826 = vrot.slane %v825, 4
          %v828 = vshll.u32 %v651, 16
          %v830 = vrot.slane %v828, 5
          %v831 = vsel %vm663, %v826, %v830
          %v833 = vshrl.u32 %v514, 16
          %v835 = vrot.slane %v833, 4
          %v836 = vshll.u32 %v514, 16
          %v838 = vrot.slane %v836, 5
          %v839 = vor.u32 %v835, %v838
          %v840 = vrot.slane %v839, 4
          %v842 = vshll.u32 %v515, 16
          %v844 = vrot.slane %v842, 5
          %v845 = vsel %vm663, %v840, %v844
          %v846 = vshrl.u32 %v515, 16
          %v848 = vrot.slane %v846, 4
          %v849 = vor.u32 %v848, %v844
          %v850 = vrot.slane %v849, 4
          %v852 = vshll.u32 %v652, 16
          %v854 = vrot.slane %v852, 5
          %v855 = vsel %vm663, %v850, %v854
          %v857 = vshrl.u32 %v516, 16
          %v859 = vrot.slane %v857, 4
          %v860 = vshll.u32 %v516, 16
          %v862 = vrot.slane %v860, 5
          %v863 = vor.u32 %v859, %v862
          %v864 = vrot.slane %v863, 4
          %v866 = vshll.u32 %v517, 16
          %v868 = vrot.slane %v866, 5
          %v869 = vsel %vm663, %v864, %v868
          %v870 = vshrl.u32 %v517, 16
          %v872 = vrot.slane %v870, 4
          %v873 = vor.u32 %v872, %v868
          %v874 = vrot.slane %v873, 4
          %v876 = vshll.u32 %v653, 16
          %v878 = vrot.slane %v876, 5
          %v879 = vsel %vm663, %v874, %v878
          %v881 = vshrl.u32 %v518, 16
          %v883 = vrot.slane %v881, 4
          %v884 = vshll.u32 %v518, 16
          %v886 = vrot.slane %v884, 5
          %v887 = vor.u32 %v883, %v886
          %v888 = vrot.slane %v887, 4
          %v890 = vshll.u32 %v519, 16
          %v892 = vrot.slane %v890, 5
          %v893 = vsel %vm663, %v888, %v892
          %v894 = vshrl.u32 %v519, 16
          %v896 = vrot.slane %v894, 4
          %v897 = vor.u32 %v896, %v892
          %v898 = vrot.slane %v897, 4
          %v900 = vshll.u32 %v654, 16
          %v902 = vrot.slane %v900, 5
          %v903 = vsel %vm663, %v898, %v902
          %v905 = vshrl.u32 %v520, 16
          %v907 = vrot.slane %v905, 4
          %v908 = vshll.u32 %v520, 16
          %v910 = vrot.slane %v908, 5
          %v911 = vor.u32 %v907, %v910
          %v912 = vrot.slane %v911, 4
          %v914 = vshll.u32 %v521, 16
          %v916 = vrot.slane %v914, 5
          %v917 = vsel %vm663, %v912, %v916
          %v918 = vshrl.u32 %v521, 16
          %v920 = vrot.slane %v918, 4
          %v921 = vor.u32 %v920, %v916
          %v922 = vrot.slane %v921, 4
          %v924 = vshll.u32 %v655, 16
          %v926 = vrot.slane %v924, 5
          %v927 = vsel %vm663, %v922, %v926
          %v929 = vshrl.u32 %v522, 16
          %v931 = vrot.slane %v929, 4
          %v932 = vshll.u32 %v522, 16
          %v934 = vrot.slane %v932, 5
          %v935 = vor.u32 %v931, %v934
          %v936 = vrot.slane %v935, 4
          %v938 = vshll.u32 %v523, 16
          %v940 = vrot.slane %v938, 5
          %v941 = vsel %vm663, %v936, %v940
          %v942 = vshrl.u32 %v523, 16
          %v944 = vrot.slane %v942, 4
          %v945 = vor.u32 %v944, %v940
          %v946 = vrot.slane %v945, 4
          %v948 = vshll.u32 %v656, 16
          %v950 = vrot.slane %v948, 5
          %v951 = vsel %vm663, %v946, %v950
          %v953 = vshrl.u32 %v524, 16
          %v955 = vrot.slane %v953, 4
          %v956 = vshll.u32 %v524, 16
          %v958 = vrot.slane %v956, 5
          %v959 = vor.u32 %v955, %v958
          %v960 = vrot.slane %v959, 4
          %v962 = vshll.u32 %v525, 16
          %v964 = vrot.slane %v962, 5
          %v965 = vsel %vm663, %v960, %v964
          %v966 = vshrl.u32 %v525, 16
          %v968 = vrot.slane %v966, 4
          %v969 = vor.u32 %v968, %v964
          %v970 = vrot.slane %v969, 4
          %v972 = vshll.u32 %v657, 16
          %v974 = vrot.slane %v972, 5
          %v975 = vsel %vm663, %v970, %v974
          %v977 = vshrl.u32 %v526, 16
          %v979 = vrot.slane %v977, 4
          %v980 = vshll.u32 %v526, 16
          %v982 = vrot.slane %v980, 5
          %v983 = vor.u32 %v979, %v982
          %v984 = vrot.slane %v983, 4
          %v986 = vshll.u32 %v527, 16
          %v988 = vrot.slane %v986, 5
          %v989 = vsel %vm663, %v984, %v988
          %v990 = vshrl.u32 %v527, 16
          %v992 = vrot.slane %v990, 4
          %v993 = vor.u32 %v992, %v988
          %v994 = vrot.slane %v993, 4
          %v996 = vshll.u32 %v658, 16
          %v998 = vrot.slane %v996, 5
          %v999 = vsel %vm663, %v994, %v998
          %v1001 = vshrl.u32 %v528, 16
          %v1003 = vrot.slane %v1001, 4
          %v1004 = vshll.u32 %v528, 16
          %v1006 = vrot.slane %v1004, 5
          %v1007 = vor.u32 %v1003, %v1006
          %v1008 = vrot.slane %v1007, 4
          %v1010 = vshll.u32 %v529, 16
          %v1012 = vrot.slane %v1010, 5
          %v1013 = vsel %vm663, %v1008, %v1012
          %v1014 = vshrl.u32 %v529, 16
          %v1016 = vrot.slane %v1014, 4
          %v1017 = vor.u32 %v1016, %v1012
          %v1018 = vrot.slane %v1017, 4
          %v1020 = vshll.u32 %v659, 16
          %v1022 = vrot.slane %v1020, 5
          %v1023 = vsel %vm663, %v1018, %v1022
          %v1025 = vshrl.u32 %v530, 16
          %v1027 = vrot.slane %v1025, 4
          %v1028 = vshll.u32 %v530, 16
          %v1030 = vrot.slane %v1028, 5
          %v1031 = vor.u32 %v1027, %v1030
          %v1032 = vrot.slane %v1031, 4
          %v1034 = vshll.u32 %v531, 16
          %v1036 = vrot.slane %v1034, 5
          %v1037 = vsel %vm663, %v1032, %v1036
          %v1038 = vshrl.u32 %v531, 16
          %v1040 = vrot.slane %v1038, 4
          %v1041 = vor.u32 %v1040, %v1036
          %v1042 = vrot.slane %v1041, 4
          %v1044 = vshll.u32 %v660, 16
          %v1046 = vrot.slane %v1044, 5
          %v1047 = vsel %vm663, %v1042, %v1046
          %1048 = vrot.lane.b32.xlu0 %v677, 4
          %v1049 = vpop.permute.xlu0 %1048
          %1050 = vrot.lane.b32.xlu0 %v687, 4
          %v1051 = vpop.permute.xlu0 %1050
          %1052 = vrot.lane.b32.xlu0 %v701, 4
          %v1053 = vpop.permute.xlu0 %1052
          %1054 = vrot.lane.b32.xlu0 %v711, 4
          %v1055 = vpop.permute.xlu0 %1054
          %1056 = vrot.lane.b32.xlu0 %v725, 4
          %v1057 = vpop.permute.xlu0 %1056
          %1058 = vrot.lane.b32.xlu0 %v735, 4
          %v1059 = vpop.permute.xlu0 %1058
          %1060 = vrot.lane.b32.xlu0 %v749, 4
          %v1061 = vpop.permute.xlu0 %1060
          %1062 = vrot.lane.b32.xlu0 %v759, 4
          %v1063 = vpop.permute.xlu0 %1062
          %1064 = vrot.lane.b32.xlu0 %v773, 4
          %v1065 = vpop.permute.xlu0 %1064
          %1066 = vrot.lane.b32.xlu0 %v783, 4
          %v1067 = vpop.permute.xlu0 %1066
          %1068 = vrot.lane.b32.xlu0 %v797, 4
          %v1069 = vpop.permute.xlu0 %1068
          %1070 = vrot.lane.b32.xlu0 %v807, 4
          %v1071 = vpop.permute.xlu0 %1070
          %1072 = vrot.lane.b32.xlu0 %v821, 4
          %v1073 = vpop.permute.xlu0 %1072
          %1074 = vrot.lane.b32.xlu0 %v831, 4
          %v1075 = vpop.permute.xlu0 %1074
          %1076 = vrot.lane.b32.xlu0 %v845, 4
          %v1077 = vpop.permute.xlu0 %1076
          %1078 = vrot.lane.b32.xlu0 %v855, 4
          %v1079 = vpop.permute.xlu0 %1078
          %1080 = vrot.lane.b32.xlu0 %v869, 4
          %v1081 = vpop.permute.xlu0 %1080
          %1082 = vrot.lane.b32.xlu0 %v879, 4
          %v1083 = vpop.permute.xlu0 %1082
          %1084 = vrot.lane.b32.xlu0 %v893, 4
          %v1085 = vpop.permute.xlu0 %1084
          %1086 = vrot.lane.b32.xlu0 %v903, 4
          %v1087 = vpop.permute.xlu0 %1086
          %1088 = vrot.lane.b32.xlu0 %v917, 4
          %v1089 = vpop.permute.xlu0 %1088
          %1090 = vrot.lane.b32.xlu0 %v927, 4
          %v1091 = vpop.permute.xlu0 %1090
          %1092 = vrot.lane.b32.xlu0 %v941, 4
          %v1093 = vpop.permute.xlu0 %1092
          %1094 = vrot.lane.b32.xlu0 %v951, 4
          %v1095 = vpop.permute.xlu0 %1094
          %1096 = vrot.lane.b32.xlu0 %v965, 4
          %v1097 = vpop.permute.xlu0 %1096
          %1098 = vrot.lane.b32.xlu0 %v975, 4
          %v1099 = vpop.permute.xlu0 %1098
          %1100 = vrot.lane.b32.xlu0 %v989, 4
          %v1101 = vpop.permute.xlu0 %1100
          %1102 = vrot.lane.b32.xlu0 %v999, 4
          %v1103 = vpop.permute.xlu0 %1102
          %1104 = vrot.lane.b32.xlu0 %v1013, 4
          %v1105 = vpop.permute.xlu0 %1104
          %1106 = vrot.lane.b32.xlu0 %v1023, 4
          %v1107 = vpop.permute.xlu0 %1106
          %1108 = vrot.lane.b32.xlu0 %v1037, 4
          %v1109 = vpop.permute.xlu0 %1108
          %1110 = vrot.lane.b32.xlu0 %v1047, 4
          %v1111 = vpop.permute.xlu0 %1110
          %vm1144 = vcmask 60448
          %1145 = vst.msk [vmem:[#allocation2] sm:$0xf] %vm1144, %v1049
          %1146 = vst.msk [vmem:[#allocation2 + $0x4] sm:$0xf] %vm1144, %v1051
          %1147 = vst.msk [vmem:[#allocation2 + $0x8] sm:$0xf] %vm1144, %v1053
          %1148 = vst.msk [vmem:[#allocation2 + $0xc] sm:$0xf] %vm1144, %v1055
          %1149 = vst.msk [vmem:[#allocation2 + $0x10] sm:$0xf] %vm1144, %v1057
          %1150 = vst.msk [vmem:[#allocation2 + $0x14] sm:$0xf] %vm1144, %v1059
          %1151 = vst.msk [vmem:[#allocation2 + $0x18] sm:$0xf] %vm1144, %v1061
          %1152 = vst.msk [vmem:[#allocation2 + $0x1c] sm:$0xf] %vm1144, %v1063
          %1153 = vst.msk [vmem:[#allocation2 + $0x20] sm:$0xf] %vm1144, %v1065
          %1154 = vst.msk [vmem:[#allocation2 + $0x24] sm:$0xf] %vm1144, %v1067
          %1155 = vst.msk [vmem:[#allocation2 + $0x28] sm:$0xf] %vm1144, %v1069
          %1156 = vst.msk [vmem:[#allocation2 + $0x2c] sm:$0xf] %vm1144, %v1071
          %1157 = vst.msk [vmem:[#allocation2 + $0x30] sm:$0xf] %vm1144, %v1073
          %1158 = vst.msk [vmem:[#allocation2 + $0x34] sm:$0xf] %vm1144, %v1075
          %1159 = vst.msk [vmem:[#allocation2 + $0x38] sm:$0xf] %vm1144, %v1077
          %1160 = vst.msk [vmem:[#allocation2 + $0x3c] sm:$0xf] %vm1144, %v1079
          %1161 = vst.msk [vmem:[#allocation2 + $0x40] sm:$0xf] %vm1144, %v1081
          %1162 = vst.msk [vmem:[#allocation2 + $0x44] sm:$0xf] %vm1144, %v1083
          %1163 = vst.msk [vmem:[#allocation2 + $0x48] sm:$0xf] %vm1144, %v1085
          %1164 = vst.msk [vmem:[#allocation2 + $0x4c] sm:$0xf] %vm1144, %v1087
          %1165 = vst.msk [vmem:[#allocation2 + $0x50] sm:$0xf] %vm1144, %v1089
          %1166 = vst.msk [vmem:[#allocation2 + $0x54] sm:$0xf] %vm1144, %v1091
          %1167 = vst.msk [vmem:[#allocation2 + $0x58] sm:$0xf] %vm1144, %v1093
          %1168 = vst.msk [vmem:[#allocation2 + $0x5c] sm:$0xf] %vm1144, %v1095
          %1169 = vst.msk [vmem:[#allocation2 + $0x60] sm:$0xf] %vm1144, %v1097
          %1170 = vst.msk [vmem:[#allocation2 + $0x64] sm:$0xf] %vm1144, %v1099
          %1171 = vst.msk [vmem:[#allocation2 + $0x68] sm:$0xf] %vm1144, %v1101
          %1172 = vst.msk [vmem:[#allocation2 + $0x6c] sm:$0xf] %vm1144, %v1103
          %1173 = vst.msk [vmem:[#allocation2 + $0x70] sm:$0xf] %vm1144, %v1105
          %1174 = vst.msk [vmem:[#allocation2 + $0x74] sm:$0xf] %vm1144, %v1107
          %1175 = vst.msk [vmem:[#allocation2 + $0x78] sm:$0xf] %vm1144, %v1109
          %1176 = vst.msk [vmem:[#allocation2 + $0x7c] sm:$0xf] %vm1144, %v1111
          %vm1177 = vcmask 1042432
          %vm1178 = vcmask 1046532
          %vm1179 = vmor %vm1177, %vm1178
          %v1180 = vrot.slane %v500, 5
          %v1181 = vrot.slane %v1180, 4
          %v1182 = vrot.slane %v501, 5
          %v1183 = vsel %vm1179, %v1181, %v1182
          %v1184 = vrot.slane %v1182, 4
          %v1185 = vrot.slane %v645, 5
          %v1186 = vsel %vm1179, %v1184, %v1185
          %v1187 = vrot.slane %v502, 5
          %v1188 = vrot.slane %v1187, 4
          %v1189 = vrot.slane %v503, 5
          %v1190 = vsel %vm1179, %v1188, %v1189
          %v1191 = vrot.slane %v1189, 4
          %v1192 = vrot.slane %v646, 5
          %v1193 = vsel %vm1179, %v1191, %v1192
          %v1194 = vrot.slane %v504, 5
          %v1195 = vrot.slane %v1194, 4
          %v1196 = vrot.slane %v505, 5
          %v1197 = vsel %vm1179, %v1195, %v1196
          %v1198 = vrot.slane %v1196, 4
          %v1199 = vrot.slane %v647, 5
          %v1200 = vsel %vm1179, %v1198, %v1199
          %v1201 = vrot.slane %v506, 5
          %v1202 = vrot.slane %v1201, 4
          %v1203 = vrot.slane %v507, 5
          %v1204 = vsel %vm1179, %v1202, %v1203
          %v1205 = vrot.slane %v1203, 4
          %v1206 = vrot.slane %v648, 5
          %v1207 = vsel %vm1179, %v1205, %v1206
          %v1208 = vrot.slane %v508, 5
          %v1209 = vrot.slane %v1208, 4
          %v1210 = vrot.slane %v509, 5
          %v1211 = vsel %vm1179, %v1209, %v1210
          %v1212 = vrot.slane %v1210, 4
          %v1213 = vrot.slane %v649, 5
          %v1214 = vsel %vm1179, %v1212, %v1213
          %v1215 = vrot.slane %v510, 5
          %v1216 = vrot.slane %v1215, 4
          %v1217 = vrot.slane %v511, 5
          %v1218 = vsel %vm1179, %v1216, %v1217
          %v1219 = vrot.slane %v1217, 4
          %v1220 = vrot.slane %v650, 5
          %v1221 = vsel %vm1179, %v1219, %v1220
          %v1222 = vrot.slane %v512, 5
          %v1223 = vrot.slane %v1222, 4
          %v1224 = vrot.slane %v513, 5
          %v1225 = vsel %vm1179, %v1223, %v1224
          %v1226 = vrot.slane %v1224, 4
          %v1227 = vrot.slane %v651, 5
          %v1228 = vsel %vm1179, %v1226, %v1227
          %v1229 = vrot.slane %v514, 5
          %v1230 = vrot.slane %v1229, 4
          %v1231 = vrot.slane %v515, 5
          %v1232 = vsel %vm1179, %v1230, %v1231
          %v1233 = vrot.slane %v1231, 4
          %v1234 = vrot.slane %v652, 5
          %v1235 = vsel %vm1179, %v1233, %v1234
          %v1236 = vrot.slane %v516, 5
          %v1237 = vrot.slane %v1236, 4
          %v1238 = vrot.slane %v517, 5
          %v1239 = vsel %vm1179, %v1237, %v1238
          %v1240 = vrot.slane %v1238, 4
          %v1241 = vrot.slane %v653, 5
          %v1242 = vsel %vm1179, %v1240, %v1241
          %v1243 = vrot.slane %v518, 5
          %v1244 = vrot.slane %v1243, 4
          %v1245 = vrot.slane %v519, 5
          %v1246 = vsel %vm1179, %v1244, %v1245
          %v1247 = vrot.slane %v1245, 4
          %v1248 = vrot.slane %v654, 5
          %v1249 = vsel %vm1179, %v1247, %v1248
          %v1250 = vrot.slane %v520, 5
          %v1251 = vrot.slane %v1250, 4
          %v1252 = vrot.slane %v521, 5
          %v1253 = vsel %vm1179, %v1251, %v1252
          %v1254 = vrot.slane %v1252, 4
          %v1255 = vrot.slane %v655, 5
          %v1256 = vsel %vm1179, %v1254, %v1255
          %v1257 = vrot.slane %v522, 5
          %v1258 = vrot.slane %v1257, 4
          %v1259 = vrot.slane %v523, 5
          %v1260 = vsel %vm1179, %v1258, %v1259
          %v1261 = vrot.slane %v1259, 4
          %v1262 = vrot.slane %v656, 5
          %v1263 = vsel %vm1179, %v1261, %v1262
          %v1264 = vrot.slane %v524, 5
          %v1265 = vrot.slane %v1264, 4
          %v1266 = vrot.slane %v525, 5
          %v1267 = vsel %vm1179, %v1265, %v1266
          %v1268 = vrot.slane %v1266, 4
          %v1269 = vrot.slane %v657, 5
          %v1270 = vsel %vm1179, %v1268, %v1269
          %v1271 = vrot.slane %v526, 5
          %v1272 = vrot.slane %v1271, 4
          %v1273 = vrot.slane %v527, 5
          %v1274 = vsel %vm1179, %v1272, %v1273
          %v1275 = vrot.slane %v1273, 4
          %v1276 = vrot.slane %v658, 5
          %v1277 = vsel %vm1179, %v1275, %v1276
          %v1278 = vrot.slane %v528, 5
          %v1279 = vrot.slane %v1278, 4
          %v1280 = vrot.slane %v529, 5
          %v1281 = vsel %vm1179, %v1279, %v1280
          %v1282 = vrot.slane %v1280, 4
          %v1283 = vrot.slane %v659, 5
          %v1284 = vsel %vm1179, %v1282, %v1283
          %v1285 = vrot.slane %v530, 5
          %v1286 = vrot.slane %v1285, 4
          %v1287 = vrot.slane %v531, 5
          %v1288 = vsel %vm1179, %v1286, %v1287
          %v1289 = vrot.slane %v1287, 4
          %v1290 = vrot.slane %v660, 5
          %v1291 = vsel %vm1179, %v1289, %v1290
          %1292 = vrot.lane.b32.xlu0 %v1183, 8
          %v1293 = vpop.permute.xlu0 %1292
          %1294 = vrot.lane.b32.xlu0 %v1186, 8
          %v1295 = vpop.permute.xlu0 %1294
          %1296 = vrot.lane.b32.xlu0 %v1190, 8
          %v1297 = vpop.permute.xlu0 %1296
          %1298 = vrot.lane.b32.xlu0 %v1193, 8
          %v1299 = vpop.permute.xlu0 %1298
          %1300 = vrot.lane.b32.xlu0 %v1197, 8
          %v1301 = vpop.permute.xlu0 %1300
          %1302 = vrot.lane.b32.xlu0 %v1200, 8
          %v1303 = vpop.permute.xlu0 %1302
          %1304 = vrot.lane.b32.xlu0 %v1204, 8
          %v1305 = vpop.permute.xlu0 %1304
          %1306 = vrot.lane.b32.xlu0 %v1207, 8
          %v1307 = vpop.permute.xlu0 %1306
          %1308 = vrot.lane.b32.xlu0 %v1211, 8
          %v1309 = vpop.permute.xlu0 %1308
          %1310 = vrot.lane.b32.xlu0 %v1214, 8
          %v1311 = vpop.permute.xlu0 %1310
          %1312 = vrot.lane.b32.xlu0 %v1218, 8
          %v1313 = vpop.permute.xlu0 %1312
          %1314 = vrot.lane.b32.xlu0 %v1221, 8
          %v1315 = vpop.permute.xlu0 %1314
          %1316 = vrot.lane.b32.xlu0 %v1225, 8
          %v1317 = vpop.permute.xlu0 %1316
          %1318 = vrot.lane.b32.xlu0 %v1228, 8
          %v1319 = vpop.permute.xlu0 %1318
          %1320 = vrot.lane.b32.xlu0 %v1232, 8
          %v1321 = vpop.permute.xlu0 %1320
          %1322 = vrot.lane.b32.xlu0 %v1235, 8
          %v1323 = vpop.permute.xlu0 %1322
          %1324 = vrot.lane.b32.xlu0 %v1239, 8
          %v1325 = vpop.permute.xlu0 %1324
          %1326 = vrot.lane.b32.xlu0 %v1242, 8
          %v1327 = vpop.permute.xlu0 %1326
          %1328 = vrot.lane.b32.xlu0 %v1246, 8
          %v1329 = vpop.permute.xlu0 %1328
          %1330 = vrot.lane.b32.xlu0 %v1249, 8
          %v1331 = vpop.permute.xlu0 %1330
          %1332 = vrot.lane.b32.xlu0 %v1253, 8
          %v1333 = vpop.permute.xlu0 %1332
          %1334 = vrot.lane.b32.xlu0 %v1256, 8
          %v1335 = vpop.permute.xlu0 %1334
          %1336 = vrot.lane.b32.xlu0 %v1260, 8
          %v1337 = vpop.permute.xlu0 %1336
          %1338 = vrot.lane.b32.xlu0 %v1263, 8
          %v1339 = vpop.permute.xlu0 %1338
          %1340 = vrot.lane.b32.xlu0 %v1267, 8
          %v1341 = vpop.permute.xlu0 %1340
          %1342 = vrot.lane.b32.xlu0 %v1270, 8
          %v1343 = vpop.permute.xlu0 %1342
          %1344 = vrot.lane.b32.xlu0 %v1274, 8
          %v1345 = vpop.permute.xlu0 %1344
          %1346 = vrot.lane.b32.xlu0 %v1277, 8
          %v1347 = vpop.permute.xlu0 %1346
          %1348 = vrot.lane.b32.xlu0 %v1281, 8
          %v1349 = vpop.permute.xlu0 %1348
          %1350 = vrot.lane.b32.xlu0 %v1284, 8
          %v1351 = vpop.permute.xlu0 %1350
          %1352 = vrot.lane.b32.xlu0 %v1288, 8
          %v1353 = vpop.permute.xlu0 %1352
          %1354 = vrot.lane.b32.xlu0 %v1291, 8
          %v1355 = vpop.permute.xlu0 %1354
          %vm1388 = vcmask 93248
          %1389 = vst.msk [vmem:[#allocation2] sm:$0xf] %vm1388, %v1293
          %1390 = vst.msk [vmem:[#allocation2 + $0x4] sm:$0xf] %vm1388, %v1295
          %1391 = vst.msk [vmem:[#allocation2 + $0x8] sm:$0xf] %vm1388, %v1297
          %1392 = vst.msk [vmem:[#allocation2 + $0xc] sm:$0xf] %vm1388, %v1299
          %1393 = vst.msk [vmem:[#allocation2 + $0x10] sm:$0xf] %vm1388, %v1301
          %1394 = vst.msk [vmem:[#allocation2 + $0x14] sm:$0xf] %vm1388, %v1303
          %1395 = vst.msk [vmem:[#allocation2 + $0x18] sm:$0xf] %vm1388, %v1305
          %1396 = vst.msk [vmem:[#allocation2 + $0x1c] sm:$0xf] %vm1388, %v1307
          %1397 = vst.msk [vmem:[#allocation2 + $0x20] sm:$0xf] %vm1388, %v1309
          %1398 = vst.msk [vmem:[#allocation2 + $0x24] sm:$0xf] %vm1388, %v1311
          %1399 = vst.msk [vmem:[#allocation2 + $0x28] sm:$0xf] %vm1388, %v1313
          %1400 = vst.msk [vmem:[#allocation2 + $0x2c] sm:$0xf] %vm1388, %v1315
          %1401 = vst.msk [vmem:[#allocation2 + $0x30] sm:$0xf] %vm1388, %v1317
          %1402 = vst.msk [vmem:[#allocation2 + $0x34] sm:$0xf] %vm1388, %v1319
          %1403 = vst.msk [vmem:[#allocation2 + $0x38] sm:$0xf] %vm1388, %v1321
          %1404 = vst.msk [vmem:[#allocation2 + $0x3c] sm:$0xf] %vm1388, %v1323
          %1405 = vst.msk [vmem:[#allocation2 + $0x40] sm:$0xf] %vm1388, %v1325
          %1406 = vst.msk [vmem:[#allocation2 + $0x44] sm:$0xf] %vm1388, %v1327
          %1407 = vst.msk [vmem:[#allocation2 + $0x48] sm:$0xf] %vm1388, %v1329
          %1408 = vst.msk [vmem:[#allocation2 + $0x4c] sm:$0xf] %vm1388, %v1331
          %1409 = vst.msk [vmem:[#allocation2 + $0x50] sm:$0xf] %vm1388, %v1333
          %1410 = vst.msk [vmem:[#allocation2 + $0x54] sm:$0xf] %vm1388, %v1335
          %1411 = vst.msk [vmem:[#allocation2 + $0x58] sm:$0xf] %vm1388, %v1337
          %1412 = vst.msk [vmem:[#allocation2 + $0x5c] sm:$0xf] %vm1388, %v1339
          %1413 = vst.msk [vmem:[#allocation2 + $0x60] sm:$0xf] %vm1388, %v1341
          %1414 = vst.msk [vmem:[#allocation2 + $0x64] sm:$0xf] %vm1388, %v1343
          %1415 = vst.msk [vmem:[#allocation2 + $0x68] sm:$0xf] %vm1388, %v1345
          %1416 = vst.msk [vmem:[#allocation2 + $0x6c] sm:$0xf] %vm1388, %v1347
          %1417 = vst.msk [vmem:[#allocation2 + $0x70] sm:$0xf] %vm1388, %v1349
          %1418 = vst.msk [vmem:[#allocation2 + $0x74] sm:$0xf] %vm1388, %v1351
          %1419 = vst.msk [vmem:[#allocation2 + $0x78] sm:$0xf] %vm1388, %v1353
          %1420 = vst.msk [vmem:[#allocation2 + $0x7c] sm:$0xf] %vm1388, %v1355
          %s1421 = sadd.s32 %s282, 1
          %s1422 = smul.u32 %s1421, 3
          %s1423 = smul.addr %s1422, 4
          %s1424 = scalar_lea.vmem %s274, %s1423
          %v1425 = vld [vmem:[%s1424] sm:$0xf]
          %v1426 = vld [vmem:[%s1424 + $0x4] sm:$0xf]
          %v1427 = vld [vmem:[%s1424 + $0x8] sm:$0x1]
          %v1428 = vld [vmem:[%s1424 + $0xc] sm:$0xf]
          %v1429 = vld [vmem:[%s1424 + $0x10] sm:$0xf]
          %v1430 = vld [vmem:[%s1424 + $0x14] sm:$0x1]
          %v1431 = vld [vmem:[%s1424 + $0x18] sm:$0xf]
          %v1432 = vld [vmem:[%s1424 + $0x1c] sm:$0xf]
          %v1433 = vld [vmem:[%s1424 + $0x20] sm:$0x1]
          %v1434 = vld [vmem:[%s1424 + $0x24] sm:$0xf]
          %v1435 = vld [vmem:[%s1424 + $0x28] sm:$0xf]
          %v1436 = vld [vmem:[%s1424 + $0x2c] sm:$0x1]
          %v1437 = vld [vmem:[%s1424 + $0x30] sm:$0xf]
          %v1438 = vld [vmem:[%s1424 + $0x34] sm:$0xf]
          %v1439 = vld [vmem:[%s1424 + $0x38] sm:$0x1]
          %v1440 = vld [vmem:[%s1424 + $0x3c] sm:$0xf]
          %v1441 = vld [vmem:[%s1424 + $0x40] sm:$0xf]
          %v1442 = vld [vmem:[%s1424 + $0x44] sm:$0x1]
          %v1443 = vld [vmem:[%s1424 + $0x48] sm:$0xf]
          %v1444 = vld [vmem:[%s1424 + $0x4c] sm:$0xf]
          %v1445 = vld [vmem:[%s1424 + $0x50] sm:$0x1]
          %v1446 = vld [vmem:[%s1424 + $0x54] sm:$0xf]
          %v1447 = vld [vmem:[%s1424 + $0x58] sm:$0xf]
          %v1448 = vld [vmem:[%s1424 + $0x5c] sm:$0x1]
          %v1449 = vld [vmem:[%s1424 + $0x60] sm:$0xf]
          %v1450 = vld [vmem:[%s1424 + $0x64] sm:$0xf]
          %v1451 = vld [vmem:[%s1424 + $0x68] sm:$0x1]
          %v1452 = vld [vmem:[%s1424 + $0x6c] sm:$0xf]
          %v1453 = vld [vmem:[%s1424 + $0x70] sm:$0xf]
          %v1454 = vld [vmem:[%s1424 + $0x74] sm:$0x1]
          %v1455 = vld [vmem:[%s1424 + $0x78] sm:$0xf]
          %v1456 = vld [vmem:[%s1424 + $0x7c] sm:$0xf]
          %v1457 = vld [vmem:[%s1424 + $0x80] sm:$0x1]
          %v1458 = vld [vmem:[%s1424 + $0x84] sm:$0xf]
          %v1459 = vld [vmem:[%s1424 + $0x88] sm:$0xf]
          %v1460 = vld [vmem:[%s1424 + $0x8c] sm:$0x1]
          %v1461 = vld [vmem:[%s1424 + $0x90] sm:$0xf]
          %v1462 = vld [vmem:[%s1424 + $0x94] sm:$0xf]
          %v1463 = vld [vmem:[%s1424 + $0x98] sm:$0x1]
          %v1464 = vld [vmem:[%s1424 + $0x9c] sm:$0xf]
          %v1465 = vld [vmem:[%s1424 + $0xa0] sm:$0xf]
          %v1466 = vld [vmem:[%s1424 + $0xa4] sm:$0x1]
          %v1467 = vld [vmem:[%s1424 + $0xa8] sm:$0xf]
          %v1468 = vld [vmem:[%s1424 + $0xac] sm:$0xf]
          %v1469 = vld [vmem:[%s1424 + $0xb0] sm:$0x1]
          %v1470 = vld [vmem:[%s1424 + $0xb4] sm:$0xf]
          %v1471 = vld [vmem:[%s1424 + $0xb8] sm:$0xf]
          %v1472 = vld [vmem:[%s1424 + $0xbc] sm:$0x1]
          %v1473 = vunpack.c.l.bf16 %v1425
          %v1474 = vunpack.c.l.bf16 %v1426
          %v1475 = vunpack.c.l.bf16 %v1427
          %v1476 = vunpack.c.l.bf16 %v1428
          %v1477 = vunpack.c.l.bf16 %v1429
          %v1478 = vunpack.c.l.bf16 %v1430
          %v1479 = vunpack.c.l.bf16 %v1431
          %v1480 = vunpack.c.l.bf16 %v1432
          %v1481 = vunpack.c.l.bf16 %v1433
          %v1482 = vunpack.c.l.bf16 %v1434
          %v1483 = vunpack.c.l.bf16 %v1435
          %v1484 = vunpack.c.l.bf16 %v1436
          %v1485 = vunpack.c.l.bf16 %v1437
          %v1486 = vunpack.c.l.bf16 %v1438
          %v1487 = vunpack.c.l.bf16 %v1439
          %v1488 = vunpack.c.l.bf16 %v1440
          %v1489 = vunpack.c.l.bf16 %v1441
          %v1490 = vunpack.c.l.bf16 %v1442
          %v1491 = vunpack.c.l.bf16 %v1443
          %v1492 = vunpack.c.l.bf16 %v1444
          %v1493 = vunpack.c.l.bf16 %v1445
          %v1494 = vunpack.c.l.bf16 %v1446
          %v1495 = vunpack.c.l.bf16 %v1447
          %v1496 = vunpack.c.l.bf16 %v1448
          %v1497 = vunpack.c.l.bf16 %v1449
          %v1498 = vunpack.c.l.bf16 %v1450
          %v1499 = vunpack.c.l.bf16 %v1451
          %v1500 = vunpack.c.l.bf16 %v1452
          %v1501 = vunpack.c.l.bf16 %v1453
          %v1502 = vunpack.c.l.bf16 %v1454
          %v1503 = vunpack.c.l.bf16 %v1455
          %v1504 = vunpack.c.l.bf16 %v1456
          %v1505 = vunpack.c.l.bf16 %v1457
          %v1506 = vunpack.c.l.bf16 %v1458
          %v1507 = vunpack.c.l.bf16 %v1459
          %v1508 = vunpack.c.l.bf16 %v1460
          %v1509 = vunpack.c.l.bf16 %v1461
          %v1510 = vunpack.c.l.bf16 %v1462
          %v1511 = vunpack.c.l.bf16 %v1463
          %v1512 = vunpack.c.l.bf16 %v1464
          %v1513 = vunpack.c.l.bf16 %v1465
          %v1514 = vunpack.c.l.bf16 %v1466
          %v1515 = vunpack.c.l.bf16 %v1467
          %v1516 = vunpack.c.l.bf16 %v1468
          %v1517 = vunpack.c.l.bf16 %v1469
          %v1518 = vunpack.c.l.bf16 %v1470
          %v1519 = vunpack.c.l.bf16 %v1471
          %v1520 = vunpack.c.l.bf16 %v1472
          %v1521 = vmul.f32 %v1473, %v386
          %v1522 = vmul.f32 %v1474, %v386
          %v1523 = vmul.f32 %v1475, %v386
          %v1524 = vmul.f32 %v1476, %v386
          %v1525 = vmul.f32 %v1477, %v386
          %v1526 = vmul.f32 %v1478, %v386
          %v1527 = vmul.f32 %v1479, %v386
          %v1528 = vmul.f32 %v1480, %v386
          %v1529 = vmul.f32 %v1481, %v386
          %v1530 = vmul.f32 %v1482, %v386
          %v1531 = vmul.f32 %v1483, %v386
          %v1532 = vmul.f32 %v1484, %v386
          %v1533 = vmul.f32 %v1485, %v386
          %v1534 = vmul.f32 %v1486, %v386
          %v1535 = vmul.f32 %v1487, %v386
          %v1536 = vmul.f32 %v1488, %v386
          %v1537 = vmul.f32 %v1489, %v386
          %v1538 = vmul.f32 %v1490, %v386
          %v1539 = vmul.f32 %v1491, %v386
          %v1540 = vmul.f32 %v1492, %v386
          %v1541 = vmul.f32 %v1493, %v386
          %v1542 = vmul.f32 %v1494, %v386
          %v1543 = vmul.f32 %v1495, %v386
          %v1544 = vmul.f32 %v1496, %v386
          %v1545 = vmul.f32 %v1497, %v386
          %v1546 = vmul.f32 %v1498, %v386
          %v1547 = vmul.f32 %v1499, %v386
          %v1548 = vmul.f32 %v1500, %v386
          %v1549 = vmul.f32 %v1501, %v386
          %v1550 = vmul.f32 %v1502, %v386
          %v1551 = vmul.f32 %v1503, %v386
          %v1552 = vmul.f32 %v1504, %v386
          %v1553 = vmul.f32 %v1505, %v386
          %v1554 = vmul.f32 %v1506, %v386
          %v1555 = vmul.f32 %v1507, %v386
          %v1556 = vmul.f32 %v1508, %v386
          %v1557 = vmul.f32 %v1509, %v386
          %v1558 = vmul.f32 %v1510, %v386
          %v1559 = vmul.f32 %v1511, %v386
          %v1560 = vmul.f32 %v1512, %v386
          %v1561 = vmul.f32 %v1513, %v386
          %v1562 = vmul.f32 %v1514, %v386
          %v1563 = vmul.f32 %v1515, %v386
          %v1564 = vmul.f32 %v1516, %v386
          %v1565 = vmul.f32 %v1517, %v386
          %v1566 = vmul.f32 %v1518, %v386
          %v1567 = vmul.f32 %v1519, %v386
          %v1568 = vmul.f32 %v1520, %v386
          %v1569 = vpack.c.bf16 %v1522, %v1521
          %v1570 = vpack.c.bf16 %v1525, %v1524
          %v1571 = vpack.c.bf16 %v1528, %v1527
          %v1572 = vpack.c.bf16 %v1531, %v1530
          %v1573 = vpack.c.bf16 %v1534, %v1533
          %v1574 = vpack.c.bf16 %v1537, %v1536
          %v1575 = vpack.c.bf16 %v1540, %v1539
          %v1576 = vpack.c.bf16 %v1543, %v1542
          %v1577 = vpack.c.bf16 %v1546, %v1545
          %v1578 = vpack.c.bf16 %v1549, %v1548
          %v1579 = vpack.c.bf16 %v1552, %v1551
          %v1580 = vpack.c.bf16 %v1555, %v1554
          %v1581 = vpack.c.bf16 %v1558, %v1557
          %v1582 = vpack.c.bf16 %v1561, %v1560
          %v1583 = vpack.c.bf16 %v1564, %v1563
          %v1584 = vpack.c.bf16 %v1567, %v1566
          %v1601 = vunpack.c.l.b16 %v1569
          %v1602 = vunpack.c.h.b16 %v1569
          %v1603 = vunpack.c.l.b16 %v1570
          %v1604 = vunpack.c.h.b16 %v1570
          %v1605 = vunpack.c.l.b16 %v1571
          %v1606 = vunpack.c.h.b16 %v1571
          %v1607 = vunpack.c.l.b16 %v1572
          %v1608 = vunpack.c.h.b16 %v1572
          %v1609 = vunpack.c.l.b16 %v1573
          %v1610 = vunpack.c.h.b16 %v1573
          %v1611 = vunpack.c.l.b16 %v1574
          %v1612 = vunpack.c.h.b16 %v1574
          %v1613 = vunpack.c.l.b16 %v1575
          %v1614 = vunpack.c.h.b16 %v1575
          %v1615 = vunpack.c.l.b16 %v1576
          %v1616 = vunpack.c.h.b16 %v1576
          %v1617 = vunpack.c.l.b16 %v1577
          %v1618 = vunpack.c.h.b16 %v1577
          %v1619 = vunpack.c.l.b16 %v1578
          %v1620 = vunpack.c.h.b16 %v1578
          %v1621 = vunpack.c.l.b16 %v1579
          %v1622 = vunpack.c.h.b16 %v1579
          %v1623 = vunpack.c.l.b16 %v1580
          %v1624 = vunpack.c.h.b16 %v1580
          %v1625 = vunpack.c.l.b16 %v1581
          %v1626 = vunpack.c.h.b16 %v1581
          %v1627 = vunpack.c.l.b16 %v1582
          %v1628 = vunpack.c.h.b16 %v1582
          %v1629 = vunpack.c.l.b16 %v1583
          %v1630 = vunpack.c.h.b16 %v1583
          %v1631 = vunpack.c.l.b16 %v1584
          %v1632 = vunpack.c.h.b16 %v1584
          %v1633 = vpack.c.b16 %v1601, %v1601
          %v1634 = vpack.c.b16 %v1602, %v1602
          %v1635 = vpack.c.b16 %v1603, %v1603
          %v1636 = vpack.c.b16 %v1604, %v1604
          %v1637 = vpack.c.b16 %v1605, %v1605
          %v1638 = vpack.c.b16 %v1606, %v1606
          %v1639 = vpack.c.b16 %v1607, %v1607
          %v1640 = vpack.c.b16 %v1608, %v1608
          %v1641 = vpack.c.b16 %v1609, %v1609
          %v1642 = vpack.c.b16 %v1610, %v1610
          %v1643 = vpack.c.b16 %v1611, %v1611
          %v1644 = vpack.c.b16 %v1612, %v1612
          %v1645 = vpack.c.b16 %v1613, %v1613
          %v1646 = vpack.c.b16 %v1614, %v1614
          %v1647 = vpack.c.b16 %v1615, %v1615
          %v1648 = vpack.c.b16 %v1616, %v1616
          %v1649 = vpack.c.b16 %v1617, %v1617
          %v1650 = vpack.c.b16 %v1618, %v1618
          %v1651 = vpack.c.b16 %v1619, %v1619
          %v1652 = vpack.c.b16 %v1620, %v1620
          %v1653 = vpack.c.b16 %v1621, %v1621
          %v1654 = vpack.c.b16 %v1622, %v1622
          %v1655 = vpack.c.b16 %v1623, %v1623
          %v1656 = vpack.c.b16 %v1624, %v1624
          %v1657 = vpack.c.b16 %v1625, %v1625
          %v1658 = vpack.c.b16 %v1626, %v1626
          %v1659 = vpack.c.b16 %v1627, %v1627
          %v1660 = vpack.c.b16 %v1628, %v1628
          %v1661 = vpack.c.b16 %v1629, %v1629
          %v1662 = vpack.c.b16 %v1630, %v1630
          %v1663 = vpack.c.b16 %v1631, %v1631
          %v1664 = vpack.c.b16 %v1632, %v1632
          %1665 = vrot.lane.b32.xlu0 %v1633, 12
          %v1666 = vpop.permute.xlu0 %1665
          %1667 = vrot.lane.b32.xlu0 %v1634, 12
          %v1668 = vpop.permute.xlu0 %1667
          %1669 = vrot.lane.b32.xlu0 %v1635, 12
          %v1670 = vpop.permute.xlu0 %1669
          %1671 = vrot.lane.b32.xlu0 %v1636, 12
          %v1672 = vpop.permute.xlu0 %1671
          %1673 = vrot.lane.b32.xlu0 %v1637, 12
          %v1674 = vpop.permute.xlu0 %1673
          %1675 = vrot.lane.b32.xlu0 %v1638, 12
          %v1676 = vpop.permute.xlu0 %1675
          %1677 = vrot.lane.b32.xlu0 %v1639, 12
          %v1678 = vpop.permute.xlu0 %1677
          %1679 = vrot.lane.b32.xlu0 %v1640, 12
          %v1680 = vpop.permute.xlu0 %1679
          %1681 = vrot.lane.b32.xlu0 %v1641, 12
          %v1682 = vpop.permute.xlu0 %1681
          %1683 = vrot.lane.b32.xlu0 %v1642, 12
          %v1684 = vpop.permute.xlu0 %1683
          %1685 = vrot.lane.b32.xlu0 %v1643, 12
          %v1686 = vpop.permute.xlu0 %1685
          %1687 = vrot.lane.b32.xlu0 %v1644, 12
          %v1688 = vpop.permute.xlu0 %1687
          %1689 = vrot.lane.b32.xlu0 %v1645, 12
          %v1690 = vpop.permute.xlu0 %1689
          %1691 = vrot.lane.b32.xlu0 %v1646, 12
          %v1692 = vpop.permute.xlu0 %1691
          %1693 = vrot.lane.b32.xlu0 %v1647, 12
          %v1694 = vpop.permute.xlu0 %1693
          %1695 = vrot.lane.b32.xlu0 %v1648, 12
          %v1696 = vpop.permute.xlu0 %1695
          %1697 = vrot.lane.b32.xlu0 %v1649, 12
          %v1698 = vpop.permute.xlu0 %1697
          %1699 = vrot.lane.b32.xlu0 %v1650, 12
          %v1700 = vpop.permute.xlu0 %1699
          %1701 = vrot.lane.b32.xlu0 %v1651, 12
          %v1702 = vpop.permute.xlu0 %1701
          %1703 = vrot.lane.b32.xlu0 %v1652, 12
          %v1704 = vpop.permute.xlu0 %1703
          %1705 = vrot.lane.b32.xlu0 %v1653, 12
          %v1706 = vpop.permute.xlu0 %1705
          %1707 = vrot.lane.b32.xlu0 %v1654, 12
          %v1708 = vpop.permute.xlu0 %1707
          %1709 = vrot.lane.b32.xlu0 %v1655, 12
          %v1710 = vpop.permute.xlu0 %1709
          %1711 = vrot.lane.b32.xlu0 %v1656, 12
          %v1712 = vpop.permute.xlu0 %1711
          %1713 = vrot.lane.b32.xlu0 %v1657, 12
          %v1714 = vpop.permute.xlu0 %1713
          %1715 = vrot.lane.b32.xlu0 %v1658, 12
          %v1716 = vpop.permute.xlu0 %1715
          %1717 = vrot.lane.b32.xlu0 %v1659, 12
          %v1718 = vpop.permute.xlu0 %1717
          %1719 = vrot.lane.b32.xlu0 %v1660, 12
          %v1720 = vpop.permute.xlu0 %1719
          %1721 = vrot.lane.b32.xlu0 %v1661, 12
          %v1722 = vpop.permute.xlu0 %1721
          %1723 = vrot.lane.b32.xlu0 %v1662, 12
          %v1724 = vpop.permute.xlu0 %1723
          %1725 = vrot.lane.b32.xlu0 %v1663, 12
          %v1726 = vpop.permute.xlu0 %1725
          %1727 = vrot.lane.b32.xlu0 %v1664, 12
          %v1728 = vpop.permute.xlu0 %1727
          %vm1761 = vcmask 126048
          %1762 = vst.msk [vmem:[#allocation2] sm:$0xf] %vm1761, %v1666
          %1763 = vst.msk [vmem:[#allocation2 + $0x4] sm:$0xf] %vm1761, %v1668
          %1764 = vst.msk [vmem:[#allocation2 + $0x8] sm:$0xf] %vm1761, %v1670
          %1765 = vst.msk [vmem:[#allocation2 + $0xc] sm:$0xf] %vm1761, %v1672
          %1766 = vst.msk [vmem:[#allocation2 + $0x10] sm:$0xf] %vm1761, %v1674
          %1767 = vst.msk [vmem:[#allocation2 + $0x14] sm:$0xf] %vm1761, %v1676
          %1768 = vst.msk [vmem:[#allocation2 + $0x18] sm:$0xf] %vm1761, %v1678
          %1769 = vst.msk [vmem:[#allocation2 + $0x1c] sm:$0xf] %vm1761, %v1680
          %1770 = vst.msk [vmem:[#allocation2 + $0x20] sm:$0xf] %vm1761, %v1682
          %1771 = vst.msk [vmem:[#allocation2 + $0x24] sm:$0xf] %vm1761, %v1684
          %1772 = vst.msk [vmem:[#allocation2 + $0x28] sm:$0xf] %vm1761, %v1686
          %1773 = vst.msk [vmem:[#allocation2 + $0x2c] sm:$0xf] %vm1761, %v1688
          %1774 = vst.msk [vmem:[#allocation2 + $0x30] sm:$0xf] %vm1761, %v1690
          %1775 = vst.msk [vmem:[#allocation2 + $0x34] sm:$0xf] %vm1761, %v1692
          %1776 = vst.msk [vmem:[#allocation2 + $0x38] sm:$0xf] %vm1761, %v1694
          %1777 = vst.msk [vmem:[#allocation2 + $0x3c] sm:$0xf] %vm1761, %v1696
          %1778 = vst.msk [vmem:[#allocation2 + $0x40] sm:$0xf] %vm1761, %v1698
          %1779 = vst.msk [vmem:[#allocation2 + $0x44] sm:$0xf] %vm1761, %v1700
          %1780 = vst.msk [vmem:[#allocation2 + $0x48] sm:$0xf] %vm1761, %v1702
          %1781 = vst.msk [vmem:[#allocation2 + $0x4c] sm:$0xf] %vm1761, %v1704
          %1782 = vst.msk [vmem:[#allocation2 + $0x50] sm:$0xf] %vm1761, %v1706
          %1783 = vst.msk [vmem:[#allocation2 + $0x54] sm:$0xf] %vm1761, %v1708
          %1784 = vst.msk [vmem:[#allocation2 + $0x58] sm:$0xf] %vm1761, %v1710
          %1785 = vst.msk [vmem:[#allocation2 + $0x5c] sm:$0xf] %vm1761, %v1712
          %1786 = vst.msk [vmem:[#allocation2 + $0x60] sm:$0xf] %vm1761, %v1714
          %1787 = vst.msk [vmem:[#allocation2 + $0x64] sm:$0xf] %vm1761, %v1716
          %1788 = vst.msk [vmem:[#allocation2 + $0x68] sm:$0xf] %vm1761, %v1718
          %1789 = vst.msk [vmem:[#allocation2 + $0x6c] sm:$0xf] %vm1761, %v1720
          %1790 = vst.msk [vmem:[#allocation2 + $0x70] sm:$0xf] %vm1761, %v1722
          %1791 = vst.msk [vmem:[#allocation2 + $0x74] sm:$0xf] %vm1761, %v1724
          %1792 = vst.msk [vmem:[#allocation2 + $0x78] sm:$0xf] %vm1761, %v1726
          %1793 = vst.msk [vmem:[#allocation2 + $0x7c] sm:$0xf] %vm1761, %v1728
          %v1794 = vpack.c.bf16 %v1523, %v1523
          %v1795 = vpack.c.bf16 %v1526, %v1526
          %v1796 = vpack.c.bf16 %v1529, %v1529
          %v1797 = vpack.c.bf16 %v1532, %v1532
          %v1798 = vpack.c.bf16 %v1535, %v1535
          %v1799 = vpack.c.bf16 %v1538, %v1538
          %v1800 = vpack.c.bf16 %v1541, %v1541
          %v1801 = vpack.c.bf16 %v1544, %v1544
          %v1802 = vpack.c.bf16 %v1547, %v1547
          %v1803 = vpack.c.bf16 %v1550, %v1550
          %v1804 = vpack.c.bf16 %v1553, %v1553
          %v1805 = vpack.c.bf16 %v1556, %v1556
          %v1806 = vpack.c.bf16 %v1559, %v1559
          %v1807 = vpack.c.bf16 %v1562, %v1562
          %v1808 = vpack.c.bf16 %v1565, %v1565
          %v1809 = vpack.c.bf16 %v1568, %v1568
          %v1826 = vunpack.c.l.b16 %v1794
          %v1827 = vunpack.c.l.b16 %v1795
          %v1828 = vunpack.c.l.b16 %v1796
          %v1829 = vunpack.c.l.b16 %v1797
          %v1830 = vunpack.c.l.b16 %v1798
          %v1831 = vunpack.c.l.b16 %v1799
          %v1832 = vunpack.c.l.b16 %v1800
          %v1833 = vunpack.c.l.b16 %v1801
          %v1834 = vunpack.c.l.b16 %v1802
          %v1835 = vunpack.c.l.b16 %v1803
          %v1836 = vunpack.c.l.b16 %v1804
          %v1837 = vunpack.c.l.b16 %v1805
          %v1838 = vunpack.c.l.b16 %v1806
          %v1839 = vunpack.c.l.b16 %v1807
          %v1840 = vunpack.c.l.b16 %v1808
          %v1841 = vunpack.c.l.b16 %v1809
          %v1842 = vpack.c.b16 %v1826, %v1826
          %v1843 = vpack.c.b16 %v1827, %v1827
          %v1844 = vpack.c.b16 %v1828, %v1828
          %v1845 = vpack.c.b16 %v1829, %v1829
          %v1846 = vpack.c.b16 %v1830, %v1830
          %v1847 = vpack.c.b16 %v1831, %v1831
          %v1848 = vpack.c.b16 %v1832, %v1832
          %v1849 = vpack.c.b16 %v1833, %v1833
          %v1850 = vpack.c.b16 %v1834, %v1834
          %v1851 = vpack.c.b16 %v1835, %v1835
          %v1852 = vpack.c.b16 %v1836, %v1836
          %v1853 = vpack.c.b16 %v1837, %v1837
          %v1854 = vpack.c.b16 %v1838, %v1838
          %v1855 = vpack.c.b16 %v1839, %v1839
          %v1856 = vpack.c.b16 %v1840, %v1840
          %v1857 = vpack.c.b16 %v1841, %v1841
          %v1859 = vshrl.u32 %v1633, 16
          %v1861 = vrot.slane %v1859, 4
          %v1862 = vshll.u32 %v1633, 16
          %v1864 = vrot.slane %v1862, 5
          %v1865 = vor.u32 %v1861, %v1864
          %v1866 = vrot.slane %v1865, 4
          %v1868 = vshll.u32 %v1634, 16
          %v1870 = vrot.slane %v1868, 5
          %v1871 = vsel %vm663, %v1866, %v1870
          %v1872 = vshrl.u32 %v1634, 16
          %v1874 = vrot.slane %v1872, 4
          %v1875 = vor.u32 %v1874, %v1870
          %v1876 = vrot.slane %v1875, 4
          %v1878 = vshll.u32 %v1842, 16
          %v1880 = vrot.slane %v1878, 5
          %v1881 = vsel %vm663, %v1876, %v1880
          %v1883 = vshrl.u32 %v1635, 16
          %v1885 = vrot.slane %v1883, 4
          %v1886 = vshll.u32 %v1635, 16
          %v1888 = vrot.slane %v1886, 5
          %v1889 = vor.u32 %v1885, %v1888
          %v1890 = vrot.slane %v1889, 4
          %v1892 = vshll.u32 %v1636, 16
          %v1894 = vrot.slane %v1892, 5
          %v1895 = vsel %vm663, %v1890, %v1894
          %v1896 = vshrl.u32 %v1636, 16
          %v1898 = vrot.slane %v1896, 4
          %v1899 = vor.u32 %v1898, %v1894
          %v1900 = vrot.slane %v1899, 4
          %v1902 = vshll.u32 %v1843, 16
          %v1904 = vrot.slane %v1902, 5
          %v1905 = vsel %vm663, %v1900, %v1904
          %v1907 = vshrl.u32 %v1637, 16
          %v1909 = vrot.slane %v1907, 4
          %v1910 = vshll.u32 %v1637, 16
          %v1912 = vrot.slane %v1910, 5
          %v1913 = vor.u32 %v1909, %v1912
          %v1914 = vrot.slane %v1913, 4
          %v1916 = vshll.u32 %v1638, 16
          %v1918 = vrot.slane %v1916, 5
          %v1919 = vsel %vm663, %v1914, %v1918
          %v1920 = vshrl.u32 %v1638, 16
          %v1922 = vrot.slane %v1920, 4
          %v1923 = vor.u32 %v1922, %v1918
          %v1924 = vrot.slane %v1923, 4
          %v1926 = vshll.u32 %v1844, 16
          %v1928 = vrot.slane %v1926, 5
          %v1929 = vsel %vm663, %v1924, %v1928
          %v1931 = vshrl.u32 %v1639, 16
          %v1933 = vrot.slane %v1931, 4
          %v1934 = vshll.u32 %v1639, 16
          %v1936 = vrot.slane %v1934, 5
          %v1937 = vor.u32 %v1933, %v1936
          %v1938 = vrot.slane %v1937, 4
          %v1940 = vshll.u32 %v1640, 16
          %v1942 = vrot.slane %v1940, 5
          %v1943 = vsel %vm663, %v1938, %v1942
          %v1944 = vshrl.u32 %v1640, 16
          %v1946 = vrot.slane %v1944, 4
          %v1947 = vor.u32 %v1946, %v1942
          %v1948 = vrot.slane %v1947, 4
          %v1950 = vshll.u32 %v1845, 16
          %v1952 = vrot.slane %v1950, 5
          %v1953 = vsel %vm663, %v1948, %v1952
          %v1955 = vshrl.u32 %v1641, 16
          %v1957 = vrot.slane %v1955, 4
          %v1958 = vshll.u32 %v1641, 16
          %v1960 = vrot.slane %v1958, 5
          %v1961 = vor.u32 %v1957, %v1960
          %v1962 = vrot.slane %v1961, 4
          %v1964 = vshll.u32 %v1642, 16
          %v1966 = vrot.slane %v1964, 5
          %v1967 = vsel %vm663, %v1962, %v1966
          %v1968 = vshrl.u32 %v1642, 16
          %v1970 = vrot.slane %v1968, 4
          %v1971 = vor.u32 %v1970, %v1966
          %v1972 = vrot.slane %v1971, 4
          %v1974 = vshll.u32 %v1846, 16
          %v1976 = vrot.slane %v1974, 5
          %v1977 = vsel %vm663, %v1972, %v1976
          %v1979 = vshrl.u32 %v1643, 16
          %v1981 = vrot.slane %v1979, 4
          %v1982 = vshll.u32 %v1643, 16
          %v1984 = vrot.slane %v1982, 5
          %v1985 = vor.u32 %v1981, %v1984
          %v1986 = vrot.slane %v1985, 4
          %v1988 = vshll.u32 %v1644, 16
          %v1990 = vrot.slane %v1988, 5
          %v1991 = vsel %vm663, %v1986, %v1990
          %v1992 = vshrl.u32 %v1644, 16
          %v1994 = vrot.slane %v1992, 4
          %v1995 = vor.u32 %v1994, %v1990
          %v1996 = vrot.slane %v1995, 4
          %v1998 = vshll.u32 %v1847, 16
          %v2000 = vrot.slane %v1998, 5
          %v2001 = vsel %vm663, %v1996, %v2000
          %v2003 = vshrl.u32 %v1645, 16
          %v2005 = vrot.slane %v2003, 4
          %v2006 = vshll.u32 %v1645, 16
          %v2008 = vrot.slane %v2006, 5
          %v2009 = vor.u32 %v2005, %v2008
          %v2010 = vrot.slane %v2009, 4
          %v2012 = vshll.u32 %v1646, 16
          %v2014 = vrot.slane %v2012, 5
          %v2015 = vsel %vm663, %v2010, %v2014
          %v2016 = vshrl.u32 %v1646, 16
          %v2018 = vrot.slane %v2016, 4
          %v2019 = vor.u32 %v2018, %v2014
          %v2020 = vrot.slane %v2019, 4
          %v2022 = vshll.u32 %v1848, 16
          %v2024 = vrot.slane %v2022, 5
          %v2025 = vsel %vm663, %v2020, %v2024
          %v2027 = vshrl.u32 %v1647, 16
          %v2029 = vrot.slane %v2027, 4
          %v2030 = vshll.u32 %v1647, 16
          %v2032 = vrot.slane %v2030, 5
          %v2033 = vor.u32 %v2029, %v2032
          %v2034 = vrot.slane %v2033, 4
          %v2036 = vshll.u32 %v1648, 16
          %v2038 = vrot.slane %v2036, 5
          %v2039 = vsel %vm663, %v2034, %v2038
          %v2040 = vshrl.u32 %v1648, 16
          %v2042 = vrot.slane %v2040, 4
          %v2043 = vor.u32 %v2042, %v2038
          %v2044 = vrot.slane %v2043, 4
          %v2046 = vshll.u32 %v1849, 16
          %v2048 = vrot.slane %v2046, 5
          %v2049 = vsel %vm663, %v2044, %v2048
          %v2051 = vshrl.u32 %v1649, 16
          %v2053 = vrot.slane %v2051, 4
          %v2054 = vshll.u32 %v1649, 16
          %v2056 = vrot.slane %v2054, 5
          %v2057 = vor.u32 %v2053, %v2056
          %v2058 = vrot.slane %v2057, 4
          %v2060 = vshll.u32 %v1650, 16
          %v2062 = vrot.slane %v2060, 5
          %v2063 = vsel %vm663, %v2058, %v2062
          %v2064 = vshrl.u32 %v1650, 16
          %v2066 = vrot.slane %v2064, 4
          %v2067 = vor.u32 %v2066, %v2062
          %v2068 = vrot.slane %v2067, 4
          %v2070 = vshll.u32 %v1850, 16
          %v2072 = vrot.slane %v2070, 5
          %v2073 = vsel %vm663, %v2068, %v2072
          %v2075 = vshrl.u32 %v1651, 16
          %v2077 = vrot.slane %v2075, 4
          %v2078 = vshll.u32 %v1651, 16
          %v2080 = vrot.slane %v2078, 5
          %v2081 = vor.u32 %v2077, %v2080
          %v2082 = vrot.slane %v2081, 4
          %v2084 = vshll.u32 %v1652, 16
          %v2086 = vrot.slane %v2084, 5
          %v2087 = vsel %vm663, %v2082, %v2086
          %v2088 = vshrl.u32 %v1652, 16
          %v2090 = vrot.slane %v2088, 4
          %v2091 = vor.u32 %v2090, %v2086
          %v2092 = vrot.slane %v2091, 4
          %v2094 = vshll.u32 %v1851, 16
          %v2096 = vrot.slane %v2094, 5
          %v2097 = vsel %vm663, %v2092, %v2096
          %v2099 = vshrl.u32 %v1653, 16
          %v2101 = vrot.slane %v2099, 4
          %v2102 = vshll.u32 %v1653, 16
          %v2104 = vrot.slane %v2102, 5
          %v2105 = vor.u32 %v2101, %v2104
          %v2106 = vrot.slane %v2105, 4
          %v2108 = vshll.u32 %v1654, 16
          %v2110 = vrot.slane %v2108, 5
          %v2111 = vsel %vm663, %v2106, %v2110
          %v2112 = vshrl.u32 %v1654, 16
          %v2114 = vrot.slane %v2112, 4
          %v2115 = vor.u32 %v2114, %v2110
          %v2116 = vrot.slane %v2115, 4
          %v2118 = vshll.u32 %v1852, 16
          %v2120 = vrot.slane %v2118, 5
          %v2121 = vsel %vm663, %v2116, %v2120
          %v2123 = vshrl.u32 %v1655, 16
          %v2125 = vrot.slane %v2123, 4
          %v2126 = vshll.u32 %v1655, 16
          %v2128 = vrot.slane %v2126, 5
          %v2129 = vor.u32 %v2125, %v2128
          %v2130 = vrot.slane %v2129, 4
          %v2132 = vshll.u32 %v1656, 16
          %v2134 = vrot.slane %v2132, 5
          %v2135 = vsel %vm663, %v2130, %v2134
          %v2136 = vshrl.u32 %v1656, 16
          %v2138 = vrot.slane %v2136, 4
          %v2139 = vor.u32 %v2138, %v2134
          %v2140 = vrot.slane %v2139, 4
          %v2142 = vshll.u32 %v1853, 16
          %v2144 = vrot.slane %v2142, 5
          %v2145 = vsel %vm663, %v2140, %v2144
          %v2147 = vshrl.u32 %v1657, 16
          %v2149 = vrot.slane %v2147, 4
          %v2150 = vshll.u32 %v1657, 16
          %v2152 = vrot.slane %v2150, 5
          %v2153 = vor.u32 %v2149, %v2152
          %v2154 = vrot.slane %v2153, 4
          %v2156 = vshll.u32 %v1658, 16
          %v2158 = vrot.slane %v2156, 5
          %v2159 = vsel %vm663, %v2154, %v2158
          %v2160 = vshrl.u32 %v1658, 16
          %v2162 = vrot.slane %v2160, 4
          %v2163 = vor.u32 %v2162, %v2158
          %v2164 = vrot.slane %v2163, 4
          %v2166 = vshll.u32 %v1854, 16
          %v2168 = vrot.slane %v2166, 5
          %v2169 = vsel %vm663, %v2164, %v2168
          %v2171 = vshrl.u32 %v1659, 16
          %v2173 = vrot.slane %v2171, 4
          %v2174 = vshll.u32 %v1659, 16
          %v2176 = vrot.slane %v2174, 5
          %v2177 = vor.u32 %v2173, %v2176
          %v2178 = vrot.slane %v2177, 4
          %v2180 = vshll.u32 %v1660, 16
          %v2182 = vrot.slane %v2180, 5
          %v2183 = vsel %vm663, %v2178, %v2182
          %v2184 = vshrl.u32 %v1660, 16
          %v2186 = vrot.slane %v2184, 4
          %v2187 = vor.u32 %v2186, %v2182
          %v2188 = vrot.slane %v2187, 4
          %v2190 = vshll.u32 %v1855, 16
          %v2192 = vrot.slane %v2190, 5
          %v2193 = vsel %vm663, %v2188, %v2192
          %v2195 = vshrl.u32 %v1661, 16
          %v2197 = vrot.slane %v2195, 4
          %v2198 = vshll.u32 %v1661, 16
          %v2200 = vrot.slane %v2198, 5
          %v2201 = vor.u32 %v2197, %v2200
          %v2202 = vrot.slane %v2201, 4
          %v2204 = vshll.u32 %v1662, 16
          %v2206 = vrot.slane %v2204, 5
          %v2207 = vsel %vm663, %v2202, %v2206
          %v2208 = vshrl.u32 %v1662, 16
          %v2210 = vrot.slane %v2208, 4
          %v2211 = vor.u32 %v2210, %v2206
          %v2212 = vrot.slane %v2211, 4
          %v2214 = vshll.u32 %v1856, 16
          %v2216 = vrot.slane %v2214, 5
          %v2217 = vsel %vm663, %v2212, %v2216
          %v2219 = vshrl.u32 %v1663, 16
          %v2221 = vrot.slane %v2219, 4
          %v2222 = vshll.u32 %v1663, 16
          %v2224 = vrot.slane %v2222, 5
          %v2225 = vor.u32 %v2221, %v2224
          %v2226 = vrot.slane %v2225, 4
          %v2228 = vshll.u32 %v1664, 16
          %v2230 = vrot.slane %v2228, 5
          %v2231 = vsel %vm663, %v2226, %v2230
          %v2232 = vshrl.u32 %v1664, 16
          %v2234 = vrot.slane %v2232, 4
          %v2235 = vor.u32 %v2234, %v2230
          %v2236 = vrot.slane %v2235, 4
          %v2238 = vshll.u32 %v1857, 16
          %v2240 = vrot.slane %v2238, 5
          %v2241 = vsel %vm663, %v2236, %v2240
          %2242 = vrot.lane.b32.xlu0 %v1871, 16
          %v2243 = vpop.permute.xlu0 %2242
          %2244 = vrot.lane.b32.xlu0 %v1881, 16
          %v2245 = vpop.permute.xlu0 %2244
          %2246 = vrot.lane.b32.xlu0 %v1895, 16
          %v2247 = vpop.permute.xlu0 %2246
          %2248 = vrot.lane.b32.xlu0 %v1905, 16
          %v2249 = vpop.permute.xlu0 %2248
          %2250 = vrot.lane.b32.xlu0 %v1919, 16
          %v2251 = vpop.permute.xlu0 %2250
          %2252 = vrot.lane.b32.xlu0 %v1929, 16
          %v2253 = vpop.permute.xlu0 %2252
          %2254 = vrot.lane.b32.xlu0 %v1943, 16
          %v2255 = vpop.permute.xlu0 %2254
          %2256 = vrot.lane.b32.xlu0 %v1953, 16
          %v2257 = vpop.permute.xlu0 %2256
          %2258 = vrot.lane.b32.xlu0 %v1967, 16
          %v2259 = vpop.permute.xlu0 %2258
          %2260 = vrot.lane.b32.xlu0 %v1977, 16
          %v2261 = vpop.permute.xlu0 %2260
          %2262 = vrot.lane.b32.xlu0 %v1991, 16
          %v2263 = vpop.permute.xlu0 %2262
          %2264 = vrot.lane.b32.xlu0 %v2001, 16
          %v2265 = vpop.permute.xlu0 %2264
          %2266 = vrot.lane.b32.xlu0 %v2015, 16
          %v2267 = vpop.permute.xlu0 %2266
          %2268 = vrot.lane.b32.xlu0 %v2025, 16
          %v2269 = vpop.permute.xlu0 %2268
          %2270 = vrot.lane.b32.xlu0 %v2039, 16
          %v2271 = vpop.permute.xlu0 %2270
          %2272 = vrot.lane.b32.xlu0 %v2049, 16
          %v2273 = vpop.permute.xlu0 %2272
          %2274 = vrot.lane.b32.xlu0 %v2063, 16
          %v2275 = vpop.permute.xlu0 %2274
          %2276 = vrot.lane.b32.xlu0 %v2073, 16
          %v2277 = vpop.permute.xlu0 %2276
          %2278 = vrot.lane.b32.xlu0 %v2087, 16
          %v2279 = vpop.permute.xlu0 %2278
          %2280 = vrot.lane.b32.xlu0 %v2097, 16
          %v2281 = vpop.permute.xlu0 %2280
          %2282 = vrot.lane.b32.xlu0 %v2111, 16
          %v2283 = vpop.permute.xlu0 %2282
          %2284 = vrot.lane.b32.xlu0 %v2121, 16
          %v2285 = vpop.permute.xlu0 %2284
          %2286 = vrot.lane.b32.xlu0 %v2135, 16
          %v2287 = vpop.permute.xlu0 %2286
          %2288 = vrot.lane.b32.xlu0 %v2145, 16
          %v2289 = vpop.permute.xlu0 %2288
          %2290 = vrot.lane.b32.xlu0 %v2159, 16
          %v2291 = vpop.permute.xlu0 %2290
          %2292 = vrot.lane.b32.xlu0 %v2169, 16
          %v2293 = vpop.permute.xlu0 %2292
          %2294 = vrot.lane.b32.xlu0 %v2183, 16
          %v2295 = vpop.permute.xlu0 %2294
          %2296 = vrot.lane.b32.xlu0 %v2193, 16
          %v2297 = vpop.permute.xlu0 %2296
          %2298 = vrot.lane.b32.xlu0 %v2207, 16
          %v2299 = vpop.permute.xlu0 %2298
          %2300 = vrot.lane.b32.xlu0 %v2217, 16
          %v2301 = vpop.permute.xlu0 %2300
          %2302 = vrot.lane.b32.xlu0 %v2231, 16
          %v2303 = vpop.permute.xlu0 %2302
          %2304 = vrot.lane.b32.xlu0 %v2241, 16
          %v2305 = vpop.permute.xlu0 %2304
          %vm2338 = vcmask 158848
          %2339 = vst.msk [vmem:[#allocation2] sm:$0xf] %vm2338, %v2243
          %2340 = vst.msk [vmem:[#allocation2 + $0x4] sm:$0xf] %vm2338, %v2245
          %2341 = vst.msk [vmem:[#allocation2 + $0x8] sm:$0xf] %vm2338, %v2247
          %2342 = vst.msk [vmem:[#allocation2 + $0xc] sm:$0xf] %vm2338, %v2249
          %2343 = vst.msk [vmem:[#allocation2 + $0x10] sm:$0xf] %vm2338, %v2251
          %2344 = vst.msk [vmem:[#allocation2 + $0x14] sm:$0xf] %vm2338, %v2253
          %2345 = vst.msk [vmem:[#allocation2 + $0x18] sm:$0xf] %vm2338, %v2255
          %2346 = vst.msk [vmem:[#allocation2 + $0x1c] sm:$0xf] %vm2338, %v2257
          %2347 = vst.msk [vmem:[#allocation2 + $0x20] sm:$0xf] %vm2338, %v2259
          %2348 = vst.msk [vmem:[#allocation2 + $0x24] sm:$0xf] %vm2338, %v2261
          %2349 = vst.msk [vmem:[#allocation2 + $0x28] sm:$0xf] %vm2338, %v2263
          %2350 = vst.msk [vmem:[#allocation2 + $0x2c] sm:$0xf] %vm2338, %v2265
          %2351 = vst.msk [vmem:[#allocation2 + $0x30] sm:$0xf] %vm2338, %v2267
          %2352 = vst.msk [vmem:[#allocation2 + $0x34] sm:$0xf] %vm2338, %v2269
          %2353 = vst.msk [vmem:[#allocation2 + $0x38] sm:$0xf] %vm2338, %v2271
          %2354 = vst.msk [vmem:[#allocation2 + $0x3c] sm:$0xf] %vm2338, %v2273
          %2355 = vst.msk [vmem:[#allocation2 + $0x40] sm:$0xf] %vm2338, %v2275
          %2356 = vst.msk [vmem:[#allocation2 + $0x44] sm:$0xf] %vm2338, %v2277
          %2357 = vst.msk [vmem:[#allocation2 + $0x48] sm:$0xf] %vm2338, %v2279
          %2358 = vst.msk [vmem:[#allocation2 + $0x4c] sm:$0xf] %vm2338, %v2281
          %2359 = vst.msk [vmem:[#allocation2 + $0x50] sm:$0xf] %vm2338, %v2283
          %2360 = vst.msk [vmem:[#allocation2 + $0x54] sm:$0xf] %vm2338, %v2285
          %2361 = vst.msk [vmem:[#allocation2 + $0x58] sm:$0xf] %vm2338, %v2287
          %2362 = vst.msk [vmem:[#allocation2 + $0x5c] sm:$0xf] %vm2338, %v2289
          %2363 = vst.msk [vmem:[#allocation2 + $0x60] sm:$0xf] %vm2338, %v2291
          %2364 = vst.msk [vmem:[#allocation2 + $0x64] sm:$0xf] %vm2338, %v2293
          %2365 = vst.msk [vmem:[#allocation2 + $0x68] sm:$0xf] %vm2338, %v2295
          %2366 = vst.msk [vmem:[#allocation2 + $0x6c] sm:$0xf] %vm2338, %v2297
          %2367 = vst.msk [vmem:[#allocation2 + $0x70] sm:$0xf] %vm2338, %v2299
          %2368 = vst.msk [vmem:[#allocation2 + $0x74] sm:$0xf] %vm2338, %v2301
          %2369 = vst.msk [vmem:[#allocation2 + $0x78] sm:$0xf] %vm2338, %v2303
          %2370 = vst.msk [vmem:[#allocation2 + $0x7c] sm:$0xf] %vm2338, %v2305
          %v2371 = vrot.slane %v1633, 5
          %v2372 = vrot.slane %v2371, 4
          %v2373 = vrot.slane %v1634, 5
          %v2374 = vsel %vm1179, %v2372, %v2373
          %v2375 = vrot.slane %v2373, 4
          %v2376 = vrot.slane %v1842, 5
          %v2377 = vsel %vm1179, %v2375, %v2376
          %v2378 = vrot.slane %v1635, 5
          %v2379 = vrot.slane %v2378, 4
          %v2380 = vrot.slane %v1636, 5
          %v2381 = vsel %vm1179, %v2379, %v2380
          %v2382 = vrot.slane %v2380, 4
          %v2383 = vrot.slane %v1843, 5
          %v2384 = vsel %vm1179, %v2382, %v2383
          %v2385 = vrot.slane %v1637, 5
          %v2386 = vrot.slane %v2385, 4
          %v2387 = vrot.slane %v1638, 5
          %v2388 = vsel %vm1179, %v2386, %v2387
          %v2389 = vrot.slane %v2387, 4
          %v2390 = vrot.slane %v1844, 5
          %v2391 = vsel %vm1179, %v2389, %v2390
          %v2392 = vrot.slane %v1639, 5
          %v2393 = vrot.slane %v2392, 4
          %v2394 = vrot.slane %v1640, 5
          %v2395 = vsel %vm1179, %v2393, %v2394
          %v2396 = vrot.slane %v2394, 4
          %v2397 = vrot.slane %v1845, 5
          %v2398 = vsel %vm1179, %v2396, %v2397
          %v2399 = vrot.slane %v1641, 5
          %v2400 = vrot.slane %v2399, 4
          %v2401 = vrot.slane %v1642, 5
          %v2402 = vsel %vm1179, %v2400, %v2401
          %v2403 = vrot.slane %v2401, 4
          %v2404 = vrot.slane %v1846, 5
          %v2405 = vsel %vm1179, %v2403, %v2404
          %v2406 = vrot.slane %v1643, 5
          %v2407 = vrot.slane %v2406, 4
          %v2408 = vrot.slane %v1644, 5
          %v2409 = vsel %vm1179, %v2407, %v2408
          %v2410 = vrot.slane %v2408, 4
          %v2411 = vrot.slane %v1847, 5
          %v2412 = vsel %vm1179, %v2410, %v2411
          %v2413 = vrot.slane %v1645, 5
          %v2414 = vrot.slane %v2413, 4
          %v2415 = vrot.slane %v1646, 5
          %v2416 = vsel %vm1179, %v2414, %v2415
          %v2417 = vrot.slane %v2415, 4
          %v2418 = vrot.slane %v1848, 5
          %v2419 = vsel %vm1179, %v2417, %v2418
          %v2420 = vrot.slane %v1647, 5
          %v2421 = vrot.slane %v2420, 4
          %v2422 = vrot.slane %v1648, 5
          %v2423 = vsel %vm1179, %v2421, %v2422
          %v2424 = vrot.slane %v2422, 4
          %v2425 = vrot.slane %v1849, 5
          %v2426 = vsel %vm1179, %v2424, %v2425
          %v2427 = vrot.slane %v1649, 5
          %v2428 = vrot.slane %v2427, 4
          %v2429 = vrot.slane %v1650, 5
          %v2430 = vsel %vm1179, %v2428, %v2429
          %v2431 = vrot.slane %v2429, 4
          %v2432 = vrot.slane %v1850, 5
          %v2433 = vsel %vm1179, %v2431, %v2432
          %v2434 = vrot.slane %v1651, 5
          %v2435 = vrot.slane %v2434, 4
          %v2436 = vrot.slane %v1652, 5
          %v2437 = vsel %vm1179, %v2435, %v2436
          %v2438 = vrot.slane %v2436, 4
          %v2439 = vrot.slane %v1851, 5
          %v2440 = vsel %vm1179, %v2438, %v2439
          %v2441 = vrot.slane %v1653, 5
          %v2442 = vrot.slane %v2441, 4
          %v2443 = vrot.slane %v1654, 5
          %v2444 = vsel %vm1179, %v2442, %v2443
          %v2445 = vrot.slane %v2443, 4
          %v2446 = vrot.slane %v1852, 5
          %v2447 = vsel %vm1179, %v2445, %v2446
          %v2448 = vrot.slane %v1655, 5
          %v2449 = vrot.slane %v2448, 4
          %v2450 = vrot.slane %v1656, 5
          %v2451 = vsel %vm1179, %v2449, %v2450
          %v2452 = vrot.slane %v2450, 4
          %v2453 = vrot.slane %v1853, 5
          %v2454 = vsel %vm1179, %v2452, %v2453
          %v2455 = vrot.slane %v1657, 5
          %v2456 = vrot.slane %v2455, 4
          %v2457 = vrot.slane %v1658, 5
          %v2458 = vsel %vm1179, %v2456, %v2457
          %v2459 = vrot.slane %v2457, 4
          %v2460 = vrot.slane %v1854, 5
          %v2461 = vsel %vm1179, %v2459, %v2460
          %v2462 = vrot.slane %v1659, 5
          %v2463 = vrot.slane %v2462, 4
          %v2464 = vrot.slane %v1660, 5
          %v2465 = vsel %vm1179, %v2463, %v2464
          %v2466 = vrot.slane %v2464, 4
          %v2467 = vrot.slane %v1855, 5
          %v2468 = vsel %vm1179, %v2466, %v2467
          %v2469 = vrot.slane %v1661, 5
          %v2470 = vrot.slane %v2469, 4
          %v2471 = vrot.slane %v1662, 5
          %v2472 = vsel %vm1179, %v2470, %v2471
          %v2473 = vrot.slane %v2471, 4
          %v2474 = vrot.slane %v1856, 5
          %v2475 = vsel %vm1179, %v2473, %v2474
          %v2476 = vrot.slane %v1663, 5
          %v2477 = vrot.slane %v2476, 4
          %v2478 = vrot.slane %v1664, 5
          %v2479 = vsel %vm1179, %v2477, %v2478
          %v2480 = vrot.slane %v2478, 4
          %v2481 = vrot.slane %v1857, 5
          %v2482 = vsel %vm1179, %v2480, %v2481
          %2483 = vrot.lane.b32.xlu0 %v2374, 20
          %v2484 = vpop.permute.xlu0 %2483
          %2485 = vrot.lane.b32.xlu0 %v2377, 20
          %v2486 = vpop.permute.xlu0 %2485
          %2487 = vrot.lane.b32.xlu0 %v2381, 20
          %v2488 = vpop.permute.xlu0 %2487
          %2489 = vrot.lane.b32.xlu0 %v2384, 20
          %v2490 = vpop.permute.xlu0 %2489
          %2491 = vrot.lane.b32.xlu0 %v2388, 20
          %v2492 = vpop.permute.xlu0 %2491
          %2493 = vrot.lane.b32.xlu0 %v2391, 20
          %v2494 = vpop.permute.xlu0 %2493
          %2495 = vrot.lane.b32.xlu0 %v2395, 20
          %v2496 = vpop.permute.xlu0 %2495
          %2497 = vrot.lane.b32.xlu0 %v2398, 20
          %v2498 = vpop.permute.xlu0 %2497
          %2499 = vrot.lane.b32.xlu0 %v2402, 20
          %v2500 = vpop.permute.xlu0 %2499
          %2501 = vrot.lane.b32.xlu0 %v2405, 20
          %v2502 = vpop.permute.xlu0 %2501
          %2503 = vrot.lane.b32.xlu0 %v2409, 20
          %v2504 = vpop.permute.xlu0 %2503
          %2505 = vrot.lane.b32.xlu0 %v2412, 20
          %v2506 = vpop.permute.xlu0 %2505
          %2507 = vrot.lane.b32.xlu0 %v2416, 20
          %v2508 = vpop.permute.xlu0 %2507
          %2509 = vrot.lane.b32.xlu0 %v2419, 20
          %v2510 = vpop.permute.xlu0 %2509
          %2511 = vrot.lane.b32.xlu0 %v2423, 20
          %v2512 = vpop.permute.xlu0 %2511
          %2513 = vrot.lane.b32.xlu0 %v2426, 20
          %v2514 = vpop.permute.xlu0 %2513
          %2515 = vrot.lane.b32.xlu0 %v2430, 20
          %v2516 = vpop.permute.xlu0 %2515
          %2517 = vrot.lane.b32.xlu0 %v2433, 20
          %v2518 = vpop.permute.xlu0 %2517
          %2519 = vrot.lane.b32.xlu0 %v2437, 20
          %v2520 = vpop.permute.xlu0 %2519
          %2521 = vrot.lane.b32.xlu0 %v2440, 20
          %v2522 = vpop.permute.xlu0 %2521
          %2523 = vrot.lane.b32.xlu0 %v2444, 20
          %v2524 = vpop.permute.xlu0 %2523
          %2525 = vrot.lane.b32.xlu0 %v2447, 20
          %v2526 = vpop.permute.xlu0 %2525
          %2527 = vrot.lane.b32.xlu0 %v2451, 20
          %v2528 = vpop.permute.xlu0 %2527
          %2529 = vrot.lane.b32.xlu0 %v2454, 20
          %v2530 = vpop.permute.xlu0 %2529
          %2531 = vrot.lane.b32.xlu0 %v2458, 20
          %v2532 = vpop.permute.xlu0 %2531
          %2533 = vrot.lane.b32.xlu0 %v2461, 20
          %v2534 = vpop.permute.xlu0 %2533
          %2535 = vrot.lane.b32.xlu0 %v2465, 20
          %v2536 = vpop.permute.xlu0 %2535
          %2537 = vrot.lane.b32.xlu0 %v2468, 20
          %v2538 = vpop.permute.xlu0 %2537
          %2539 = vrot.lane.b32.xlu0 %v2472, 20
          %v2540 = vpop.permute.xlu0 %2539
          %2541 = vrot.lane.b32.xlu0 %v2475, 20
          %v2542 = vpop.permute.xlu0 %2541
          %2543 = vrot.lane.b32.xlu0 %v2479, 20
          %v2544 = vpop.permute.xlu0 %2543
          %2545 = vrot.lane.b32.xlu0 %v2482, 20
          %v2546 = vpop.permute.xlu0 %2545
          %vm2579 = vcmask 191648
          %2580 = vst.msk [vmem:[#allocation2] sm:$0xf] %vm2579, %v2484
          %2581 = vst.msk [vmem:[#allocation2 + $0x4] sm:$0xf] %vm2579, %v2486
          %2582 = vst.msk [vmem:[#allocation2 + $0x8] sm:$0xf] %vm2579, %v2488
          %2583 = vst.msk [vmem:[#allocation2 + $0xc] sm:$0xf] %vm2579, %v2490
          %2584 = vst.msk [vmem:[#allocation2 + $0x10] sm:$0xf] %vm2579, %v2492
          %2585 = vst.msk [vmem:[#allocation2 + $0x14] sm:$0xf] %vm2579, %v2494
          %2586 = vst.msk [vmem:[#allocation2 + $0x18] sm:$0xf] %vm2579, %v2496
          %2587 = vst.msk [vmem:[#allocation2 + $0x1c] sm:$0xf] %vm2579, %v2498
          %2588 = vst.msk [vmem:[#allocation2 + $0x20] sm:$0xf] %vm2579, %v2500
          %2589 = vst.msk [vmem:[#allocation2 + $0x24] sm:$0xf] %vm2579, %v2502
          %2590 = vst.msk [vmem:[#allocation2 + $0x28] sm:$0xf] %vm2579, %v2504
          %2591 = vst.msk [vmem:[#allocation2 + $0x2c] sm:$0xf] %vm2579, %v2506
          %2592 = vst.msk [vmem:[#allocation2 + $0x30] sm:$0xf] %vm2579, %v2508
          %2593 = vst.msk [vmem:[#allocation2 + $0x34] sm:$0xf] %vm2579, %v2510
          %2594 = vst.msk [vmem:[#allocation2 + $0x38] sm:$0xf] %vm2579, %v2512
          %2595 = vst.msk [vmem:[#allocation2 + $0x3c] sm:$0xf] %vm2579, %v2514
          %2596 = vst.msk [vmem:[#allocation2 + $0x40] sm:$0xf] %vm2579, %v2516
          %2597 = vst.msk [vmem:[#allocation2 + $0x44] sm:$0xf] %vm2579, %v2518
          %2598 = vst.msk [vmem:[#allocation2 + $0x48] sm:$0xf] %vm2579, %v2520
          %2599 = vst.msk [vmem:[#allocation2 + $0x4c] sm:$0xf] %vm2579, %v2522
          %2600 = vst.msk [vmem:[#allocation2 + $0x50] sm:$0xf] %vm2579, %v2524
          %2601 = vst.msk [vmem:[#allocation2 + $0x54] sm:$0xf] %vm2579, %v2526
          %2602 = vst.msk [vmem:[#allocation2 + $0x58] sm:$0xf] %vm2579, %v2528
          %2603 = vst.msk [vmem:[#allocation2 + $0x5c] sm:$0xf] %vm2579, %v2530
          %2604 = vst.msk [vmem:[#allocation2 + $0x60] sm:$0xf] %vm2579, %v2532
          %2605 = vst.msk [vmem:[#allocation2 + $0x64] sm:$0xf] %vm2579, %v2534
          %2606 = vst.msk [vmem:[#allocation2 + $0x68] sm:$0xf] %vm2579, %v2536
          %2607 = vst.msk [vmem:[#allocation2 + $0x6c] sm:$0xf] %vm2579, %v2538
          %2608 = vst.msk [vmem:[#allocation2 + $0x70] sm:$0xf] %vm2579, %v2540
          %2609 = vst.msk [vmem:[#allocation2 + $0x74] sm:$0xf] %vm2579, %v2542
          %2610 = vst.msk [vmem:[#allocation2 + $0x78] sm:$0xf] %vm2579, %v2544
          %2611 = vst.msk [vmem:[#allocation2 + $0x7c] sm:$0xf] %vm2579, %v2546
          %s2612 = sadd.s32 %s282, 2
          %s2613 = smul.u32 %s2612, 3
          %s2614 = smul.addr %s2613, 4
          %s2615 = scalar_lea.vmem %s274, %s2614
          %v2616 = vld [vmem:[%s2615] sm:$0xf]
          %v2617 = vld [vmem:[%s2615 + $0x4] sm:$0xf]
          %v2618 = vld [vmem:[%s2615 + $0x8] sm:$0x1]
          %v2619 = vld [vmem:[%s2615 + $0xc] sm:$0xf]
          %v2620 = vld [vmem:[%s2615 + $0x10] sm:$0xf]
          %v2621 = vld [vmem:[%s2615 + $0x14] sm:$0x1]
          %v2622 = vld [vmem:[%s2615 + $0x18] sm:$0xf]
          %v2623 = vld [vmem:[%s2615 + $0x1c] sm:$0xf]
          %v2624 = vld [vmem:[%s2615 + $0x20] sm:$0x1]
          %v2625 = vld [vmem:[%s2615 + $0x24] sm:$0xf]
          %v2626 = vld [vmem:[%s2615 + $0x28] sm:$0xf]
          %v2627 = vld [vmem:[%s2615 + $0x2c] sm:$0x1]
          %v2628 = vld [vmem:[%s2615 + $0x30] sm:$0xf]
          %v2629 = vld [vmem:[%s2615 + $0x34] sm:$0xf]
          %v2630 = vld [vmem:[%s2615 + $0x38] sm:$0x1]
          %v2631 = vld [vmem:[%s2615 + $0x3c] sm:$0xf]
          %v2632 = vld [vmem:[%s2615 + $0x40] sm:$0xf]
          %v2633 = vld [vmem:[%s2615 + $0x44] sm:$0x1]
          %v2634 = vld [vmem:[%s2615 + $0x48] sm:$0xf]
          %v2635 = vld [vmem:[%s2615 + $0x4c] sm:$0xf]
          %v2636 = vld [vmem:[%s2615 + $0x50] sm:$0x1]
          %v2637 = vld [vmem:[%s2615 + $0x54] sm:$0xf]
          %v2638 = vld [vmem:[%s2615 + $0x58] sm:$0xf]
          %v2639 = vld [vmem:[%s2615 + $0x5c] sm:$0x1]
          %v2640 = vld [vmem:[%s2615 + $0x60] sm:$0xf]
          %v2641 = vld [vmem:[%s2615 + $0x64] sm:$0xf]
          %v2642 = vld [vmem:[%s2615 + $0x68] sm:$0x1]
          %v2643 = vld [vmem:[%s2615 + $0x6c] sm:$0xf]
          %v2644 = vld [vmem:[%s2615 + $0x70] sm:$0xf]
          %v2645 = vld [vmem:[%s2615 + $0x74] sm:$0x1]
          %v2646 = vld [vmem:[%s2615 + $0x78] sm:$0xf]
          %v2647 = vld [vmem:[%s2615 + $0x7c] sm:$0xf]
          %v2648 = vld [vmem:[%s2615 + $0x80] sm:$0x1]
          %v2649 = vld [vmem:[%s2615 + $0x84] sm:$0xf]
          %v2650 = vld [vmem:[%s2615 + $0x88] sm:$0xf]
          %v2651 = vld [vmem:[%s2615 + $0x8c] sm:$0x1]
          %v2652 = vld [vmem:[%s2615 + $0x90] sm:$0xf]
          %v2653 = vld [vmem:[%s2615 + $0x94] sm:$0xf]
          %v2654 = vld [vmem:[%s2615 + $0x98] sm:$0x1]
          %v2655 = vld [vmem:[%s2615 + $0x9c] sm:$0xf]
          %v2656 = vld [vmem:[%s2615 + $0xa0] sm:$0xf]
          %v2657 = vld [vmem:[%s2615 + $0xa4] sm:$0x1]
          %v2658 = vld [vmem:[%s2615 + $0xa8] sm:$0xf]
          %v2659 = vld [vmem:[%s2615 + $0xac] sm:$0xf]
          %v2660 = vld [vmem:[%s2615 + $0xb0] sm:$0x1]
          %v2661 = vld [vmem:[%s2615 + $0xb4] sm:$0xf]
          %v2662 = vld [vmem:[%s2615 + $0xb8] sm:$0xf]
          %v2663 = vld [vmem:[%s2615 + $0xbc] sm:$0x1]
          %v2664 = vunpack.c.l.bf16 %v2616
          %v2665 = vunpack.c.l.bf16 %v2617
          %v2666 = vunpack.c.l.bf16 %v2618
          %v2667 = vunpack.c.l.bf16 %v2619
          %v2668 = vunpack.c.l.bf16 %v2620
          %v2669 = vunpack.c.l.bf16 %v2621
          %v2670 = vunpack.c.l.bf16 %v2622
          %v2671 = vunpack.c.l.bf16 %v2623
          %v2672 = vunpack.c.l.bf16 %v2624
          %v2673 = vunpack.c.l.bf16 %v2625
          %v2674 = vunpack.c.l.bf16 %v2626
          %v2675 = vunpack.c.l.bf16 %v2627
          %v2676 = vunpack.c.l.bf16 %v2628
          %v2677 = vunpack.c.l.bf16 %v2629
          %v2678 = vunpack.c.l.bf16 %v2630
          %v2679 = vunpack.c.l.bf16 %v2631
          %v2680 = vunpack.c.l.bf16 %v2632
          %v2681 = vunpack.c.l.bf16 %v2633
          %v2682 = vunpack.c.l.bf16 %v2634
          %v2683 = vunpack.c.l.bf16 %v2635
          %v2684 = vunpack.c.l.bf16 %v2636
          %v2685 = vunpack.c.l.bf16 %v2637
          %v2686 = vunpack.c.l.bf16 %v2638
          %v2687 = vunpack.c.l.bf16 %v2639
          %v2688 = vunpack.c.l.bf16 %v2640
          %v2689 = vunpack.c.l.bf16 %v2641
          %v2690 = vunpack.c.l.bf16 %v2642
          %v2691 = vunpack.c.l.bf16 %v2643
          %v2692 = vunpack.c.l.bf16 %v2644
          %v2693 = vunpack.c.l.bf16 %v2645
          %v2694 = vunpack.c.l.bf16 %v2646
          %v2695 = vunpack.c.l.bf16 %v2647
          %v2696 = vunpack.c.l.bf16 %v2648
          %v2697 = vunpack.c.l.bf16 %v2649
          %v2698 = vunpack.c.l.bf16 %v2650
          %v2699 = vunpack.c.l.bf16 %v2651
          %v2700 = vunpack.c.l.bf16 %v2652
          %v2701 = vunpack.c.l.bf16 %v2653
          %v2702 = vunpack.c.l.bf16 %v2654
          %v2703 = vunpack.c.l.bf16 %v2655
          %v2704 = vunpack.c.l.bf16 %v2656
          %v2705 = vunpack.c.l.bf16 %v2657
          %v2706 = vunpack.c.l.bf16 %v2658
          %v2707 = vunpack.c.l.bf16 %v2659
          %v2708 = vunpack.c.l.bf16 %v2660
          %v2709 = vunpack.c.l.bf16 %v2661
          %v2710 = vunpack.c.l.bf16 %v2662
          %v2711 = vunpack.c.l.bf16 %v2663
          %v2712 = vmul.f32 %v2664, %v386
          %v2713 = vmul.f32 %v2665, %v386
          %v2714 = vmul.f32 %v2666, %v386
          %v2715 = vmul.f32 %v2667, %v386
          %v2716 = vmul.f32 %v2668, %v386
          %v2717 = vmul.f32 %v2669, %v386
          %v2718 = vmul.f32 %v2670, %v386
          %v2719 = vmul.f32 %v2671, %v386
          %v2720 = vmul.f32 %v2672, %v386
          %v2721 = vmul.f32 %v2673, %v386
          %v2722 = vmul.f32 %v2674, %v386
          %v2723 = vmul.f32 %v2675, %v386
          %v2724 = vmul.f32 %v2676, %v386
          %v2725 = vmul.f32 %v2677, %v386
          %v2726 = vmul.f32 %v2678, %v386
          %v2727 = vmul.f32 %v2679, %v386
          %v2728 = vmul.f32 %v2680, %v386
          %v2729 = vmul.f32 %v2681, %v386
          %v2730 = vmul.f32 %v2682, %v386
          %v2731 = vmul.f32 %v2683, %v386
          %v2732 = vmul.f32 %v2684, %v386
          %v2733 = vmul.f32 %v2685, %v386
          %v2734 = vmul.f32 %v2686, %v386
          %v2735 = vmul.f32 %v2687, %v386
          %v2736 = vmul.f32 %v2688, %v386
          %v2737 = vmul.f32 %v2689, %v386
          %v2738 = vmul.f32 %v2690, %v386
          %v2739 = vmul.f32 %v2691, %v386
          %v2740 = vmul.f32 %v2692, %v386
          %v2741 = vmul.f32 %v2693, %v386
          %v2742 = vmul.f32 %v2694, %v386
          %v2743 = vmul.f32 %v2695, %v386
          %v2744 = vmul.f32 %v2696, %v386
          %v2745 = vmul.f32 %v2697, %v386
          %v2746 = vmul.f32 %v2698, %v386
          %v2747 = vmul.f32 %v2699, %v386
          %v2748 = vmul.f32 %v2700, %v386
          %v2749 = vmul.f32 %v2701, %v386
          %v2750 = vmul.f32 %v2702, %v386
          %v2751 = vmul.f32 %v2703, %v386
          %v2752 = vmul.f32 %v2704, %v386
          %v2753 = vmul.f32 %v2705, %v386
          %v2754 = vmul.f32 %v2706, %v386
          %v2755 = vmul.f32 %v2707, %v386
          %v2756 = vmul.f32 %v2708, %v386
          %v2757 = vmul.f32 %v2709, %v386
          %v2758 = vmul.f32 %v2710, %v386
          %v2759 = vmul.f32 %v2711, %v386
          %v2760 = vpack.c.bf16 %v2713, %v2712
          %v2761 = vpack.c.bf16 %v2716, %v2715
          %v2762 = vpack.c.bf16 %v2719, %v2718
          %v2763 = vpack.c.bf16 %v2722, %v2721
          %v2764 = vpack.c.bf16 %v2725, %v2724
          %v2765 = vpack.c.bf16 %v2728, %v2727
          %v2766 = vpack.c.bf16 %v2731, %v2730
          %v2767 = vpack.c.bf16 %v2734, %v2733
          %v2768 = vpack.c.bf16 %v2737, %v2736
          %v2769 = vpack.c.bf16 %v2740, %v2739
          %v2770 = vpack.c.bf16 %v2743, %v2742
          %v2771 = vpack.c.bf16 %v2746, %v2745
          %v2772 = vpack.c.bf16 %v2749, %v2748
          %v2773 = vpack.c.bf16 %v2752, %v2751
          %v2774 = vpack.c.bf16 %v2755, %v2754
          %v2775 = vpack.c.bf16 %v2758, %v2757
          %v2792 = vunpack.c.l.b16 %v2760
          %v2793 = vunpack.c.h.b16 %v2760
          %v2794 = vunpack.c.l.b16 %v2761
          %v2795 = vunpack.c.h.b16 %v2761
          %v2796 = vunpack.c.l.b16 %v2762
          %v2797 = vunpack.c.h.b16 %v2762
          %v2798 = vunpack.c.l.b16 %v2763
          %v2799 = vunpack.c.h.b16 %v2763
          %v2800 = vunpack.c.l.b16 %v2764
          %v2801 = vunpack.c.h.b16 %v2764
          %v2802 = vunpack.c.l.b16 %v2765
          %v2803 = vunpack.c.h.b16 %v2765
          %v2804 = vunpack.c.l.b16 %v2766
          %v2805 = vunpack.c.h.b16 %v2766
          %v2806 = vunpack.c.l.b16 %v2767
          %v2807 = vunpack.c.h.b16 %v2767
          %v2808 = vunpack.c.l.b16 %v2768
          %v2809 = vunpack.c.h.b16 %v2768
          %v2810 = vunpack.c.l.b16 %v2769
          %v2811 = vunpack.c.h.b16 %v2769
          %v2812 = vunpack.c.l.b16 %v2770
          %v2813 = vunpack.c.h.b16 %v2770
          %v2814 = vunpack.c.l.b16 %v2771
          %v2815 = vunpack.c.h.b16 %v2771
          %v2816 = vunpack.c.l.b16 %v2772
          %v2817 = vunpack.c.h.b16 %v2772
          %v2818 = vunpack.c.l.b16 %v2773
          %v2819 = vunpack.c.h.b16 %v2773
          %v2820 = vunpack.c.l.b16 %v2774
          %v2821 = vunpack.c.h.b16 %v2774
          %v2822 = vunpack.c.l.b16 %v2775
          %v2823 = vunpack.c.h.b16 %v2775
          %v2824 = vpack.c.b16 %v2792, %v2792
          %v2825 = vpack.c.b16 %v2793, %v2793
          %v2826 = vpack.c.b16 %v2794, %v2794
          %v2827 = vpack.c.b16 %v2795, %v2795
          %v2828 = vpack.c.b16 %v2796, %v2796
          %v2829 = vpack.c.b16 %v2797, %v2797
          %v2830 = vpack.c.b16 %v2798, %v2798
          %v2831 = vpack.c.b16 %v2799, %v2799
          %v2832 = vpack.c.b16 %v2800, %v2800
          %v2833 = vpack.c.b16 %v2801, %v2801
          %v2834 = vpack.c.b16 %v2802, %v2802
          %v2835 = vpack.c.b16 %v2803, %v2803
          %v2836 = vpack.c.b16 %v2804, %v2804
          %v2837 = vpack.c.b16 %v2805, %v2805
          %v2838 = vpack.c.b16 %v2806, %v2806
          %v2839 = vpack.c.b16 %v2807, %v2807
          %v2840 = vpack.c.b16 %v2808, %v2808
          %v2841 = vpack.c.b16 %v2809, %v2809
          %v2842 = vpack.c.b16 %v2810, %v2810
          %v2843 = vpack.c.b16 %v2811, %v2811
          %v2844 = vpack.c.b16 %v2812, %v2812
          %v2845 = vpack.c.b16 %v2813, %v2813
          %v2846 = vpack.c.b16 %v2814, %v2814
          %v2847 = vpack.c.b16 %v2815, %v2815
          %v2848 = vpack.c.b16 %v2816, %v2816
          %v2849 = vpack.c.b16 %v2817, %v2817
          %v2850 = vpack.c.b16 %v2818, %v2818
          %v2851 = vpack.c.b16 %v2819, %v2819
          %v2852 = vpack.c.b16 %v2820, %v2820
          %v2853 = vpack.c.b16 %v2821, %v2821
          %v2854 = vpack.c.b16 %v2822, %v2822
          %v2855 = vpack.c.b16 %v2823, %v2823
          %2856 = vrot.lane.b32.xlu0 %v2824, 24
          %v2857 = vpop.permute.xlu0 %2856
          %2858 = vrot.lane.b32.xlu0 %v2825, 24
          %v2859 = vpop.permute.xlu0 %2858
          %2860 = vrot.lane.b32.xlu0 %v2826, 24
          %v2861 = vpop.permute.xlu0 %2860
          %2862 = vrot.lane.b32.xlu0 %v2827, 24
          %v2863 = vpop.permute.xlu0 %2862
          %2864 = vrot.lane.b32.xlu0 %v2828, 24
          %v2865 = vpop.permute.xlu0 %2864
          %2866 = vrot.lane.b32.xlu0 %v2829, 24
          %v2867 = vpop.permute.xlu0 %2866
          %2868 = vrot.lane.b32.xlu0 %v2830, 24
          %v2869 = vpop.permute.xlu0 %2868
          %2870 = vrot.lane.b32.xlu0 %v2831, 24
          %v2871 = vpop.permute.xlu0 %2870
          %2872 = vrot.lane.b32.xlu0 %v2832, 24
          %v2873 = vpop.permute.xlu0 %2872
          %2874 = vrot.lane.b32.xlu0 %v2833, 24
          %v2875 = vpop.permute.xlu0 %2874
          %2876 = vrot.lane.b32.xlu0 %v2834, 24
          %v2877 = vpop.permute.xlu0 %2876
          %2878 = vrot.lane.b32.xlu0 %v2835, 24
          %v2879 = vpop.permute.xlu0 %2878
          %2880 = vrot.lane.b32.xlu0 %v2836, 24
          %v2881 = vpop.permute.xlu0 %2880
          %2882 = vrot.lane.b32.xlu0 %v2837, 24
          %v2883 = vpop.permute.xlu0 %2882
          %2884 = vrot.lane.b32.xlu0 %v2838, 24
          %v2885 = vpop.permute.xlu0 %2884
          %2886 = vrot.lane.b32.xlu0 %v2839, 24
          %v2887 = vpop.permute.xlu0 %2886
          %2888 = vrot.lane.b32.xlu0 %v2840, 24
          %v2889 = vpop.permute.xlu0 %2888
          %2890 = vrot.lane.b32.xlu0 %v2841, 24
          %v2891 = vpop.permute.xlu0 %2890
          %2892 = vrot.lane.b32.xlu0 %v2842, 24
          %v2893 = vpop.permute.xlu0 %2892
          %2894 = vrot.lane.b32.xlu0 %v2843, 24
          %v2895 = vpop.permute.xlu0 %2894
          %2896 = vrot.lane.b32.xlu0 %v2844, 24
          %v2897 = vpop.permute.xlu0 %2896
          %2898 = vrot.lane.b32.xlu0 %v2845, 24
          %v2899 = vpop.permute.xlu0 %2898
          %2900 = vrot.lane.b32.xlu0 %v2846, 24
          %v2901 = vpop.permute.xlu0 %2900
          %2902 = vrot.lane.b32.xlu0 %v2847, 24
          %v2903 = vpop.permute.xlu0 %2902
          %2904 = vrot.lane.b32.xlu0 %v2848, 24
          %v2905 = vpop.permute.xlu0 %2904
          %2906 = vrot.lane.b32.xlu0 %v2849, 24
          %v2907 = vpop.permute.xlu0 %2906
          %2908 = vrot.lane.b32.xlu0 %v2850, 24
          %v2909 = vpop.permute.xlu0 %2908
          %2910 = vrot.lane.b32.xlu0 %v2851, 24
          %v2911 = vpop.permute.xlu0 %2910
          %2912 = vrot.lane.b32.xlu0 %v2852, 24
          %v2913 = vpop.permute.xlu0 %2912
          %2914 = vrot.lane.b32.xlu0 %v2853, 24
          %v2915 = vpop.permute.xlu0 %2914
          %2916 = vrot.lane.b32.xlu0 %v2854, 24
          %v2917 = vpop.permute.xlu0 %2916
          %2918 = vrot.lane.b32.xlu0 %v2855, 24
          %v2919 = vpop.permute.xlu0 %2918
          %vm2952 = vcmask 224448
          %2953 = vst.msk [vmem:[#allocation2] sm:$0xf] %vm2952, %v2857
          %2954 = vst.msk [vmem:[#allocation2 + $0x4] sm:$0xf] %vm2952, %v2859
          %2955 = vst.msk [vmem:[#allocation2 + $0x8] sm:$0xf] %vm2952, %v2861
          %2956 = vst.msk [vmem:[#allocation2 + $0xc] sm:$0xf] %vm2952, %v2863
          %2957 = vst.msk [vmem:[#allocation2 + $0x10] sm:$0xf] %vm2952, %v2865
          %2958 = vst.msk [vmem:[#allocation2 + $0x14] sm:$0xf] %vm2952, %v2867
          %2959 = vst.msk [vmem:[#allocation2 + $0x18] sm:$0xf] %vm2952, %v2869
          %2960 = vst.msk [vmem:[#allocation2 + $0x1c] sm:$0xf] %vm2952, %v2871
          %2961 = vst.msk [vmem:[#allocation2 + $0x20] sm:$0xf] %vm2952, %v2873
          %2962 = vst.msk [vmem:[#allocation2 + $0x24] sm:$0xf] %vm2952, %v2875
          %2963 = vst.msk [vmem:[#allocation2 + $0x28] sm:$0xf] %vm2952, %v2877
          %2964 = vst.msk [vmem:[#allocation2 + $0x2c] sm:$0xf] %vm2952, %v2879
          %2965 = vst.msk [vmem:[#allocation2 + $0x30] sm:$0xf] %vm2952, %v2881
          %2966 = vst.msk [vmem:[#allocation2 + $0x34] sm:$0xf] %vm2952, %v2883
          %2967 = vst.msk [vmem:[#allocation2 + $0x38] sm:$0xf] %vm2952, %v2885
          %2968 = vst.msk [vmem:[#allocation2 + $0x3c] sm:$0xf] %vm2952, %v2887
          %2969 = vst.msk [vmem:[#allocation2 + $0x40] sm:$0xf] %vm2952, %v2889
          %2970 = vst.msk [vmem:[#allocation2 + $0x44] sm:$0xf] %vm2952, %v2891
          %2971 = vst.msk [vmem:[#allocation2 + $0x48] sm:$0xf] %vm2952, %v2893
          %2972 = vst.msk [vmem:[#allocation2 + $0x4c] sm:$0xf] %vm2952, %v2895
          %2973 = vst.msk [vmem:[#allocation2 + $0x50] sm:$0xf] %vm2952, %v2897
          %2974 = vst.msk [vmem:[#allocation2 + $0x54] sm:$0xf] %vm2952, %v2899
          %2975 = vst.msk [vmem:[#allocation2 + $0x58] sm:$0xf] %vm2952, %v2901
          %2976 = vst.msk [vmem:[#allocation2 + $0x5c] sm:$0xf] %vm2952, %v2903
          %2977 = vst.msk [vmem:[#allocation2 + $0x60] sm:$0xf] %vm2952, %v2905
          %2978 = vst.msk [vmem:[#allocation2 + $0x64] sm:$0xf] %vm2952, %v2907
          %2979 = vst.msk [vmem:[#allocation2 + $0x68] sm:$0xf] %vm2952, %v2909
          %2980 = vst.msk [vmem:[#allocation2 + $0x6c] sm:$0xf] %vm2952, %v2911
          %2981 = vst.msk [vmem:[#allocation2 + $0x70] sm:$0xf] %vm2952, %v2913
          %2982 = vst.msk [vmem:[#allocation2 + $0x74] sm:$0xf] %vm2952, %v2915
          %2983 = vst.msk [vmem:[#allocation2 + $0x78] sm:$0xf] %vm2952, %v2917
          %2984 = vst.msk [vmem:[#allocation2 + $0x7c] sm:$0xf] %vm2952, %v2919
          %v2985 = vpack.c.bf16 %v2714, %v2714
          %v2986 = vpack.c.bf16 %v2717, %v2717
          %v2987 = vpack.c.bf16 %v2720, %v2720
          %v2988 = vpack.c.bf16 %v2723, %v2723
          %v2989 = vpack.c.bf16 %v2726, %v2726
          %v2990 = vpack.c.bf16 %v2729, %v2729
          %v2991 = vpack.c.bf16 %v2732, %v2732
          %v2992 = vpack.c.bf16 %v2735, %v2735
          %v2993 = vpack.c.bf16 %v2738, %v2738
          %v2994 = vpack.c.bf16 %v2741, %v2741
          %v2995 = vpack.c.bf16 %v2744, %v2744
          %v2996 = vpack.c.bf16 %v2747, %v2747
          %v2997 = vpack.c.bf16 %v2750, %v2750
          %v2998 = vpack.c.bf16 %v2753, %v2753
          %v2999 = vpack.c.bf16 %v2756, %v2756
          %v3000 = vpack.c.bf16 %v2759, %v2759
          %v3017 = vunpack.c.l.b16 %v2985
          %v3018 = vunpack.c.l.b16 %v2986
          %v3019 = vunpack.c.l.b16 %v2987
          %v3020 = vunpack.c.l.b16 %v2988
          %v3021 = vunpack.c.l.b16 %v2989
          %v3022 = vunpack.c.l.b16 %v2990
          %v3023 = vunpack.c.l.b16 %v2991
          %v3024 = vunpack.c.l.b16 %v2992
          %v3025 = vunpack.c.l.b16 %v2993
          %v3026 = vunpack.c.l.b16 %v2994
          %v3027 = vunpack.c.l.b16 %v2995
          %v3028 = vunpack.c.l.b16 %v2996
          %v3029 = vunpack.c.l.b16 %v2997
          %v3030 = vunpack.c.l.b16 %v2998
          %v3031 = vunpack.c.l.b16 %v2999
          %v3032 = vunpack.c.l.b16 %v3000
          %v3033 = vpack.c.b16 %v3017, %v3017
          %v3034 = vpack.c.b16 %v3018, %v3018
          %v3035 = vpack.c.b16 %v3019, %v3019
          %v3036 = vpack.c.b16 %v3020, %v3020
          %v3037 = vpack.c.b16 %v3021, %v3021
          %v3038 = vpack.c.b16 %v3022, %v3022
          %v3039 = vpack.c.b16 %v3023, %v3023
          %v3040 = vpack.c.b16 %v3024, %v3024
          %v3041 = vpack.c.b16 %v3025, %v3025
          %v3042 = vpack.c.b16 %v3026, %v3026
          %v3043 = vpack.c.b16 %v3027, %v3027
          %v3044 = vpack.c.b16 %v3028, %v3028
          %v3045 = vpack.c.b16 %v3029, %v3029
          %v3046 = vpack.c.b16 %v3030, %v3030
          %v3047 = vpack.c.b16 %v3031, %v3031
          %v3048 = vpack.c.b16 %v3032, %v3032
          %v3050 = vshrl.u32 %v2824, 16
          %v3052 = vrot.slane %v3050, 4
          %v3053 = vshll.u32 %v2824, 16
          %v3055 = vrot.slane %v3053, 5
          %v3056 = vor.u32 %v3052, %v3055
          %v3057 = vrot.slane %v3056, 4
          %v3059 = vshll.u32 %v2825, 16
          %v3061 = vrot.slane %v3059, 5
          %v3062 = vsel %vm663, %v3057, %v3061
          %v3063 = vshrl.u32 %v2825, 16
          %v3065 = vrot.slane %v3063, 4
          %v3066 = vor.u32 %v3065, %v3061
          %v3067 = vrot.slane %v3066, 4
          %v3069 = vshll.u32 %v3033, 16
          %v3071 = vrot.slane %v3069, 5
          %v3072 = vsel %vm663, %v3067, %v3071
          %v3074 = vshrl.u32 %v2826, 16
          %v3076 = vrot.slane %v3074, 4
          %v3077 = vshll.u32 %v2826, 16
          %v3079 = vrot.slane %v3077, 5
          %v3080 = vor.u32 %v3076, %v3079
          %v3081 = vrot.slane %v3080, 4
          %v3083 = vshll.u32 %v2827, 16
          %v3085 = vrot.slane %v3083, 5
          %v3086 = vsel %vm663, %v3081, %v3085
          %v3087 = vshrl.u32 %v2827, 16
          %v3089 = vrot.slane %v3087, 4
          %v3090 = vor.u32 %v3089, %v3085
          %v3091 = vrot.slane %v3090, 4
          %v3093 = vshll.u32 %v3034, 16
          %v3095 = vrot.slane %v3093, 5
          %v3096 = vsel %vm663, %v3091, %v3095
          %v3098 = vshrl.u32 %v2828, 16
          %v3100 = vrot.slane %v3098, 4
          %v3101 = vshll.u32 %v2828, 16
          %v3103 = vrot.slane %v3101, 5
          %v3104 = vor.u32 %v3100, %v3103
          %v3105 = vrot.slane %v3104, 4
          %v3107 = vshll.u32 %v2829, 16
          %v3109 = vrot.slane %v3107, 5
          %v3110 = vsel %vm663, %v3105, %v3109
          %v3111 = vshrl.u32 %v2829, 16
          %v3113 = vrot.slane %v3111, 4
          %v3114 = vor.u32 %v3113, %v3109
          %v3115 = vrot.slane %v3114, 4
          %v3117 = vshll.u32 %v3035, 16
          %v3119 = vrot.slane %v3117, 5
          %v3120 = vsel %vm663, %v3115, %v3119
          %v3122 = vshrl.u32 %v2830, 16
          %v3124 = vrot.slane %v3122, 4
          %v3125 = vshll.u32 %v2830, 16
          %v3127 = vrot.slane %v3125, 5
          %v3128 = vor.u32 %v3124, %v3127
          %v3129 = vrot.slane %v3128, 4
          %v3131 = vshll.u32 %v2831, 16
          %v3133 = vrot.slane %v3131, 5
          %v3134 = vsel %vm663, %v3129, %v3133
          %v3135 = vshrl.u32 %v2831, 16
          %v3137 = vrot.slane %v3135, 4
          %v3138 = vor.u32 %v3137, %v3133
          %v3139 = vrot.slane %v3138, 4
          %v3141 = vshll.u32 %v3036, 16
          %v3143 = vrot.slane %v3141, 5
          %v3144 = vsel %vm663, %v3139, %v3143
          %v3146 = vshrl.u32 %v2832, 16
          %v3148 = vrot.slane %v3146, 4
          %v3149 = vshll.u32 %v2832, 16
          %v3151 = vrot.slane %v3149, 5
          %v3152 = vor.u32 %v3148, %v3151
          %v3153 = vrot.slane %v3152, 4
          %v3155 = vshll.u32 %v2833, 16
          %v3157 = vrot.slane %v3155, 5
          %v3158 = vsel %vm663, %v3153, %v3157
          %v3159 = vshrl.u32 %v2833, 16
          %v3161 = vrot.slane %v3159, 4
          %v3162 = vor.u32 %v3161, %v3157
          %v3163 = vrot.slane %v3162, 4
          %v3165 = vshll.u32 %v3037, 16
          %v3167 = vrot.slane %v3165, 5
          %v3168 = vsel %vm663, %v3163, %v3167
          %v3170 = vshrl.u32 %v2834, 16
          %v3172 = vrot.slane %v3170, 4
          %v3173 = vshll.u32 %v2834, 16
          %v3175 = vrot.slane %v3173, 5
          %v3176 = vor.u32 %v3172, %v3175
          %v3177 = vrot.slane %v3176, 4
          %v3179 = vshll.u32 %v2835, 16
          %v3181 = vrot.slane %v3179, 5
          %v3182 = vsel %vm663, %v3177, %v3181
          %v3183 = vshrl.u32 %v2835, 16
          %v3185 = vrot.slane %v3183, 4
          %v3186 = vor.u32 %v3185, %v3181
          %v3187 = vrot.slane %v3186, 4
          %v3189 = vshll.u32 %v3038, 16
          %v3191 = vrot.slane %v3189, 5
          %v3192 = vsel %vm663, %v3187, %v3191
          %v3194 = vshrl.u32 %v2836, 16
          %v3196 = vrot.slane %v3194, 4
          %v3197 = vshll.u32 %v2836, 16
          %v3199 = vrot.slane %v3197, 5
          %v3200 = vor.u32 %v3196, %v3199
          %v3201 = vrot.slane %v3200, 4
          %v3203 = vshll.u32 %v2837, 16
          %v3205 = vrot.slane %v3203, 5
          %v3206 = vsel %vm663, %v3201, %v3205
          %v3207 = vshrl.u32 %v2837, 16
          %v3209 = vrot.slane %v3207, 4
          %v3210 = vor.u32 %v3209, %v3205
          %v3211 = vrot.slane %v3210, 4
          %v3213 = vshll.u32 %v3039, 16
          %v3215 = vrot.slane %v3213, 5
          %v3216 = vsel %vm663, %v3211, %v3215
          %v3218 = vshrl.u32 %v2838, 16
          %v3220 = vrot.slane %v3218, 4
          %v3221 = vshll.u32 %v2838, 16
          %v3223 = vrot.slane %v3221, 5
          %v3224 = vor.u32 %v3220, %v3223
          %v3225 = vrot.slane %v3224, 4
          %v3227 = vshll.u32 %v2839, 16
          %v3229 = vrot.slane %v3227, 5
          %v3230 = vsel %vm663, %v3225, %v3229
          %v3231 = vshrl.u32 %v2839, 16
          %v3233 = vrot.slane %v3231, 4
          %v3234 = vor.u32 %v3233, %v3229
          %v3235 = vrot.slane %v3234, 4
          %v3237 = vshll.u32 %v3040, 16
          %v3239 = vrot.slane %v3237, 5
          %v3240 = vsel %vm663, %v3235, %v3239
          %v3242 = vshrl.u32 %v2840, 16
          %v3244 = vrot.slane %v3242, 4
          %v3245 = vshll.u32 %v2840, 16
          %v3247 = vrot.slane %v3245, 5
          %v3248 = vor.u32 %v3244, %v3247
          %v3249 = vrot.slane %v3248, 4
          %v3251 = vshll.u32 %v2841, 16
          %v3253 = vrot.slane %v3251, 5
          %v3254 = vsel %vm663, %v3249, %v3253
          %v3255 = vshrl.u32 %v2841, 16
          %v3257 = vrot.slane %v3255, 4
          %v3258 = vor.u32 %v3257, %v3253
          %v3259 = vrot.slane %v3258, 4
          %v3261 = vshll.u32 %v3041, 16
          %v3263 = vrot.slane %v3261, 5
          %v3264 = vsel %vm663, %v3259, %v3263
          %v3266 = vshrl.u32 %v2842, 16
          %v3268 = vrot.slane %v3266, 4
          %v3269 = vshll.u32 %v2842, 16
          %v3271 = vrot.slane %v3269, 5
          %v3272 = vor.u32 %v3268, %v3271
          %v3273 = vrot.slane %v3272, 4
          %v3275 = vshll.u32 %v2843, 16
          %v3277 = vrot.slane %v3275, 5
          %v3278 = vsel %vm663, %v3273, %v3277
          %v3279 = vshrl.u32 %v2843, 16
          %v3281 = vrot.slane %v3279, 4
          %v3282 = vor.u32 %v3281, %v3277
          %v3283 = vrot.slane %v3282, 4
          %v3285 = vshll.u32 %v3042, 16
          %v3287 = vrot.slane %v3285, 5
          %v3288 = vsel %vm663, %v3283, %v3287
          %v3290 = vshrl.u32 %v2844, 16
          %v3292 = vrot.slane %v3290, 4
          %v3293 = vshll.u32 %v2844, 16
          %v3295 = vrot.slane %v3293, 5
          %v3296 = vor.u32 %v3292, %v3295
          %v3297 = vrot.slane %v3296, 4
          %v3299 = vshll.u32 %v2845, 16
          %v3301 = vrot.slane %v3299, 5
          %v3302 = vsel %vm663, %v3297, %v3301
          %v3303 = vshrl.u32 %v2845, 16
          %v3305 = vrot.slane %v3303, 4
          %v3306 = vor.u32 %v3305, %v3301
          %v3307 = vrot.slane %v3306, 4
          %v3309 = vshll.u32 %v3043, 16
          %v3311 = vrot.slane %v3309, 5
          %v3312 = vsel %vm663, %v3307, %v3311
          %v3314 = vshrl.u32 %v2846, 16
          %v3316 = vrot.slane %v3314, 4
          %v3317 = vshll.u32 %v2846, 16
          %v3319 = vrot.slane %v3317, 5
          %v3320 = vor.u32 %v3316, %v3319
          %v3321 = vrot.slane %v3320, 4
          %v3323 = vshll.u32 %v2847, 16
          %v3325 = vrot.slane %v3323, 5
          %v3326 = vsel %vm663, %v3321, %v3325
          %v3327 = vshrl.u32 %v2847, 16
          %v3329 = vrot.slane %v3327, 4
          %v3330 = vor.u32 %v3329, %v3325
          %v3331 = vrot.slane %v3330, 4
          %v3333 = vshll.u32 %v3044, 16
          %v3335 = vrot.slane %v3333, 5
          %v3336 = vsel %vm663, %v3331, %v3335
          %v3338 = vshrl.u32 %v2848, 16
          %v3340 = vrot.slane %v3338, 4
          %v3341 = vshll.u32 %v2848, 16
          %v3343 = vrot.slane %v3341, 5
          %v3344 = vor.u32 %v3340, %v3343
          %v3345 = vrot.slane %v3344, 4
          %v3347 = vshll.u32 %v2849, 16
          %v3349 = vrot.slane %v3347, 5
          %v3350 = vsel %vm663, %v3345, %v3349
          %v3351 = vshrl.u32 %v2849, 16
          %v3353 = vrot.slane %v3351, 4
          %v3354 = vor.u32 %v3353, %v3349
          %v3355 = vrot.slane %v3354, 4
          %v3357 = vshll.u32 %v3045, 16
          %v3359 = vrot.slane %v3357, 5
          %v3360 = vsel %vm663, %v3355, %v3359
          %v3362 = vshrl.u32 %v2850, 16
          %v3364 = vrot.slane %v3362, 4
          %v3365 = vshll.u32 %v2850, 16
          %v3367 = vrot.slane %v3365, 5
          %v3368 = vor.u32 %v3364, %v3367
          %v3369 = vrot.slane %v3368, 4
          %v3371 = vshll.u32 %v2851, 16
          %v3373 = vrot.slane %v3371, 5
          %v3374 = vsel %vm663, %v3369, %v3373
          %v3375 = vshrl.u32 %v2851, 16
          %v3377 = vrot.slane %v3375, 4
          %v3378 = vor.u32 %v3377, %v3373
          %v3379 = vrot.slane %v3378, 4
          %v3381 = vshll.u32 %v3046, 16
          %v3383 = vrot.slane %v3381, 5
          %v3384 = vsel %vm663, %v3379, %v3383
          %v3386 = vshrl.u32 %v2852, 16
          %v3388 = vrot.slane %v3386, 4
          %v3389 = vshll.u32 %v2852, 16
          %v3391 = vrot.slane %v3389, 5
          %v3392 = vor.u32 %v3388, %v3391
          %v3393 = vrot.slane %v3392, 4
          %v3395 = vshll.u32 %v2853, 16
          %v3397 = vrot.slane %v3395, 5
          %v3398 = vsel %vm663, %v3393, %v3397
          %v3399 = vshrl.u32 %v2853, 16
          %v3401 = vrot.slane %v3399, 4
          %v3402 = vor.u32 %v3401, %v3397
          %v3403 = vrot.slane %v3402, 4
          %v3405 = vshll.u32 %v3047, 16
          %v3407 = vrot.slane %v3405, 5
          %v3408 = vsel %vm663, %v3403, %v3407
          %v3410 = vshrl.u32 %v2854, 16
          %v3412 = vrot.slane %v3410, 4
          %v3413 = vshll.u32 %v2854, 16
          %v3415 = vrot.slane %v3413, 5
          %v3416 = vor.u32 %v3412, %v3415
          %v3417 = vrot.slane %v3416, 4
          %v3419 = vshll.u32 %v2855, 16
          %v3421 = vrot.slane %v3419, 5
          %v3422 = vsel %vm663, %v3417, %v3421
          %v3423 = vshrl.u32 %v2855, 16
          %v3425 = vrot.slane %v3423, 4
          %v3426 = vor.u32 %v3425, %v3421
          %v3427 = vrot.slane %v3426, 4
          %v3429 = vshll.u32 %v3048, 16
          %v3431 = vrot.slane %v3429, 5
          %v3432 = vsel %vm663, %v3427, %v3431
          %3433 = vrot.lane.b32.xlu0 %v3062, 28
          %v3434 = vpop.permute.xlu0 %3433
          %3435 = vrot.lane.b32.xlu0 %v3072, 28
          %v3436 = vpop.permute.xlu0 %3435
          %3437 = vrot.lane.b32.xlu0 %v3086, 28
          %v3438 = vpop.permute.xlu0 %3437
          %3439 = vrot.lane.b32.xlu0 %v3096, 28
          %v3440 = vpop.permute.xlu0 %3439
          %3441 = vrot.lane.b32.xlu0 %v3110, 28
          %v3442 = vpop.permute.xlu0 %3441
          %3443 = vrot.lane.b32.xlu0 %v3120, 28
          %v3444 = vpop.permute.xlu0 %3443
          %3445 = vrot.lane.b32.xlu0 %v3134, 28
          %v3446 = vpop.permute.xlu0 %3445
          %3447 = vrot.lane.b32.xlu0 %v3144, 28
          %v3448 = vpop.permute.xlu0 %3447
          %3449 = vrot.lane.b32.xlu0 %v3158, 28
          %v3450 = vpop.permute.xlu0 %3449
          %3451 = vrot.lane.b32.xlu0 %v3168, 28
          %v3452 = vpop.permute.xlu0 %3451
          %3453 = vrot.lane.b32.xlu0 %v3182, 28
          %v3454 = vpop.permute.xlu0 %3453
          %3455 = vrot.lane.b32.xlu0 %v3192, 28
          %v3456 = vpop.permute.xlu0 %3455
          %3457 = vrot.lane.b32.xlu0 %v3206, 28
          %v3458 = vpop.permute.xlu0 %3457
          %3459 = vrot.lane.b32.xlu0 %v3216, 28
          %v3460 = vpop.permute.xlu0 %3459
          %3461 = vrot.lane.b32.xlu0 %v3230, 28
          %v3462 = vpop.permute.xlu0 %3461
          %3463 = vrot.lane.b32.xlu0 %v3240, 28
          %v3464 = vpop.permute.xlu0 %3463
          %3465 = vrot.lane.b32.xlu0 %v3254, 28
          %v3466 = vpop.permute.xlu0 %3465
          %3467 = vrot.lane.b32.xlu0 %v3264, 28
          %v3468 = vpop.permute.xlu0 %3467
          %3469 = vrot.lane.b32.xlu0 %v3278, 28
          %v3470 = vpop.permute.xlu0 %3469
          %3471 = vrot.lane.b32.xlu0 %v3288, 28
          %v3472 = vpop.permute.xlu0 %3471
          %3473 = vrot.lane.b32.xlu0 %v3302, 28
          %v3474 = vpop.permute.xlu0 %3473
          %3475 = vrot.lane.b32.xlu0 %v3312, 28
          %v3476 = vpop.permute.xlu0 %3475
          %3477 = vrot.lane.b32.xlu0 %v3326, 28
          %v3478 = vpop.permute.xlu0 %3477
          %3479 = vrot.lane.b32.xlu0 %v3336, 28
          %v3480 = vpop.permute.xlu0 %3479
          %3481 = vrot.lane.b32.xlu0 %v3350, 28
          %v3482 = vpop.permute.xlu0 %3481
          %3483 = vrot.lane.b32.xlu0 %v3360, 28
          %v3484 = vpop.permute.xlu0 %3483
          %3485 = vrot.lane.b32.xlu0 %v3374, 28
          %v3486 = vpop.permute.xlu0 %3485
          %3487 = vrot.lane.b32.xlu0 %v3384, 28
          %v3488 = vpop.permute.xlu0 %3487
          %3489 = vrot.lane.b32.xlu0 %v3398, 28
          %v3490 = vpop.permute.xlu0 %3489
          %3491 = vrot.lane.b32.xlu0 %v3408, 28
          %v3492 = vpop.permute.xlu0 %3491
          %3493 = vrot.lane.b32.xlu0 %v3422, 28
          %v3494 = vpop.permute.xlu0 %3493
          %3495 = vrot.lane.b32.xlu0 %v3432, 28
          %v3496 = vpop.permute.xlu0 %3495
          %vm3529 = vcmask 257248
          %3530 = vst.msk [vmem:[#allocation2] sm:$0xf] %vm3529, %v3434
          %3531 = vst.msk [vmem:[#allocation2 + $0x4] sm:$0xf] %vm3529, %v3436
          %3532 = vst.msk [vmem:[#allocation2 + $0x8] sm:$0xf] %vm3529, %v3438
          %3533 = vst.msk [vmem:[#allocation2 + $0xc] sm:$0xf] %vm3529, %v3440
          %3534 = vst.msk [vmem:[#allocation2 + $0x10] sm:$0xf] %vm3529, %v3442
          %3535 = vst.msk [vmem:[#allocation2 + $0x14] sm:$0xf] %vm3529, %v3444
          %3536 = vst.msk [vmem:[#allocation2 + $0x18] sm:$0xf] %vm3529, %v3446
          %3537 = vst.msk [vmem:[#allocation2 + $0x1c] sm:$0xf] %vm3529, %v3448
          %3538 = vst.msk [vmem:[#allocation2 + $0x20] sm:$0xf] %vm3529, %v3450
          %3539 = vst.msk [vmem:[#allocation2 + $0x24] sm:$0xf] %vm3529, %v3452
          %3540 = vst.msk [vmem:[#allocation2 + $0x28] sm:$0xf] %vm3529, %v3454
          %3541 = vst.msk [vmem:[#allocation2 + $0x2c] sm:$0xf] %vm3529, %v3456
          %3542 = vst.msk [vmem:[#allocation2 + $0x30] sm:$0xf] %vm3529, %v3458
          %3543 = vst.msk [vmem:[#allocation2 + $0x34] sm:$0xf] %vm3529, %v3460
          %3544 = vst.msk [vmem:[#allocation2 + $0x38] sm:$0xf] %vm3529, %v3462
          %3545 = vst.msk [vmem:[#allocation2 + $0x3c] sm:$0xf] %vm3529, %v3464
          %3546 = vst.msk [vmem:[#allocation2 + $0x40] sm:$0xf] %vm3529, %v3466
          %3547 = vst.msk [vmem:[#allocation2 + $0x44] sm:$0xf] %vm3529, %v3468
          %3548 = vst.msk [vmem:[#allocation2 + $0x48] sm:$0xf] %vm3529, %v3470
          %3549 = vst.msk [vmem:[#allocation2 + $0x4c] sm:$0xf] %vm3529, %v3472
          %3550 = vst.msk [vmem:[#allocation2 + $0x50] sm:$0xf] %vm3529, %v3474
          %3551 = vst.msk [vmem:[#allocation2 + $0x54] sm:$0xf] %vm3529, %v3476
          %3552 = vst.msk [vmem:[#allocation2 + $0x58] sm:$0xf] %vm3529, %v3478
          %3553 = vst.msk [vmem:[#allocation2 + $0x5c] sm:$0xf] %vm3529, %v3480
          %3554 = vst.msk [vmem:[#allocation2 + $0x60] sm:$0xf] %vm3529, %v3482
          %3555 = vst.msk [vmem:[#allocation2 + $0x64] sm:$0xf] %vm3529, %v3484
          %3556 = vst.msk [vmem:[#allocation2 + $0x68] sm:$0xf] %vm3529, %v3486
          %3557 = vst.msk [vmem:[#allocation2 + $0x6c] sm:$0xf] %vm3529, %v3488
          %3558 = vst.msk [vmem:[#allocation2 + $0x70] sm:$0xf] %vm3529, %v3490
          %3559 = vst.msk [vmem:[#allocation2 + $0x74] sm:$0xf] %vm3529, %v3492
          %3560 = vst.msk [vmem:[#allocation2 + $0x78] sm:$0xf] %vm3529, %v3494
          %3561 = vst.msk [vmem:[#allocation2 + $0x7c] sm:$0xf] %vm3529, %v3496
          %v3562 = vrot.slane %v2824, 5
          %v3563 = vrot.slane %v3562, 4
          %v3564 = vrot.slane %v2825, 5
          %v3565 = vsel %vm1179, %v3563, %v3564
          %v3566 = vrot.slane %v3564, 4
          %v3567 = vrot.slane %v3033, 5
          %v3568 = vsel %vm1179, %v3566, %v3567
          %v3569 = vrot.slane %v2826, 5
          %v3570 = vrot.slane %v3569, 4
          %v3571 = vrot.slane %v2827, 5
          %v3572 = vsel %vm1179, %v3570, %v3571
          %v3573 = vrot.slane %v3571, 4
          %v3574 = vrot.slane %v3034, 5
          %v3575 = vsel %vm1179, %v3573, %v3574
          %v3576 = vrot.slane %v2828, 5
          %v3577 = vrot.slane %v3576, 4
          %v3578 = vrot.slane %v2829, 5
          %v3579 = vsel %vm1179, %v3577, %v3578
          %v3580 = vrot.slane %v3578, 4
          %v3581 = vrot.slane %v3035, 5
          %v3582 = vsel %vm1179, %v3580, %v3581
          %v3583 = vrot.slane %v2830, 5
          %v3584 = vrot.slane %v3583, 4
          %v3585 = vrot.slane %v2831, 5
          %v3586 = vsel %vm1179, %v3584, %v3585
          %v3587 = vrot.slane %v3585, 4
          %v3588 = vrot.slane %v3036, 5
          %v3589 = vsel %vm1179, %v3587, %v3588
          %v3590 = vrot.slane %v2832, 5
          %v3591 = vrot.slane %v3590, 4
          %v3592 = vrot.slane %v2833, 5
          %v3593 = vsel %vm1179, %v3591, %v3592
          %v3594 = vrot.slane %v3592, 4
          %v3595 = vrot.slane %v3037, 5
          %v3596 = vsel %vm1179, %v3594, %v3595
          %v3597 = vrot.slane %v2834, 5
          %v3598 = vrot.slane %v3597, 4
          %v3599 = vrot.slane %v2835, 5
          %v3600 = vsel %vm1179, %v3598, %v3599
          %v3601 = vrot.slane %v3599, 4
          %v3602 = vrot.slane %v3038, 5
          %v3603 = vsel %vm1179, %v3601, %v3602
          %v3604 = vrot.slane %v2836, 5
          %v3605 = vrot.slane %v3604, 4
          %v3606 = vrot.slane %v2837, 5
          %v3607 = vsel %vm1179, %v3605, %v3606
          %v3608 = vrot.slane %v3606, 4
          %v3609 = vrot.slane %v3039, 5
          %v3610 = vsel %vm1179, %v3608, %v3609
          %v3611 = vrot.slane %v2838, 5
          %v3612 = vrot.slane %v3611, 4
          %v3613 = vrot.slane %v2839, 5
          %v3614 = vsel %vm1179, %v3612, %v3613
          %v3615 = vrot.slane %v3613, 4
          %v3616 = vrot.slane %v3040, 5
          %v3617 = vsel %vm1179, %v3615, %v3616
          %v3618 = vrot.slane %v2840, 5
          %v3619 = vrot.slane %v3618, 4
          %v3620 = vrot.slane %v2841, 5
          %v3621 = vsel %vm1179, %v3619, %v3620
          %v3622 = vrot.slane %v3620, 4
          %v3623 = vrot.slane %v3041, 5
          %v3624 = vsel %vm1179, %v3622, %v3623
          %v3625 = vrot.slane %v2842, 5
          %v3626 = vrot.slane %v3625, 4
          %v3627 = vrot.slane %v2843, 5
          %v3628 = vsel %vm1179, %v3626, %v3627
          %v3629 = vrot.slane %v3627, 4
          %v3630 = vrot.slane %v3042, 5
          %v3631 = vsel %vm1179, %v3629, %v3630
          %v3632 = vrot.slane %v2844, 5
          %v3633 = vrot.slane %v3632, 4
          %v3634 = vrot.slane %v2845, 5
          %v3635 = vsel %vm1179, %v3633, %v3634
          %v3636 = vrot.slane %v3634, 4
          %v3637 = vrot.slane %v3043, 5
          %v3638 = vsel %vm1179, %v3636, %v3637
          %v3639 = vrot.slane %v2846, 5
          %v3640 = vrot.slane %v3639, 4
          %v3641 = vrot.slane %v2847, 5
          %v3642 = vsel %vm1179, %v3640, %v3641
          %v3643 = vrot.slane %v3641, 4
          %v3644 = vrot.slane %v3044, 5
          %v3645 = vsel %vm1179, %v3643, %v3644
          %v3646 = vrot.slane %v2848, 5
          %v3647 = vrot.slane %v3646, 4
          %v3648 = vrot.slane %v2849, 5
          %v3649 = vsel %vm1179, %v3647, %v3648
          %v3650 = vrot.slane %v3648, 4
          %v3651 = vrot.slane %v3045, 5
          %v3652 = vsel %vm1179, %v3650, %v3651
          %v3653 = vrot.slane %v2850, 5
          %v3654 = vrot.slane %v3653, 4
          %v3655 = vrot.slane %v2851, 5
          %v3656 = vsel %vm1179, %v3654, %v3655
          %v3657 = vrot.slane %v3655, 4
          %v3658 = vrot.slane %v3046, 5
          %v3659 = vsel %vm1179, %v3657, %v3658
          %v3660 = vrot.slane %v2852, 5
          %v3661 = vrot.slane %v3660, 4
          %v3662 = vrot.slane %v2853, 5
          %v3663 = vsel %vm1179, %v3661, %v3662
          %v3664 = vrot.slane %v3662, 4
          %v3665 = vrot.slane %v3047, 5
          %v3666 = vsel %vm1179, %v3664, %v3665
          %v3667 = vrot.slane %v2854, 5
          %v3668 = vrot.slane %v3667, 4
          %v3669 = vrot.slane %v2855, 5
          %v3670 = vsel %vm1179, %v3668, %v3669
          %v3671 = vrot.slane %v3669, 4
          %v3672 = vrot.slane %v3048, 5
          %v3673 = vsel %vm1179, %v3671, %v3672
          %3674 = vrot.lane.b32.xlu0 %v3565, 32
          %v3675 = vpop.permute.xlu0 %3674
          %3676 = vrot.lane.b32.xlu0 %v3568, 32
          %v3677 = vpop.permute.xlu0 %3676
          %3678 = vrot.lane.b32.xlu0 %v3572, 32
          %v3679 = vpop.permute.xlu0 %3678
          %3680 = vrot.lane.b32.xlu0 %v3575, 32
          %v3681 = vpop.permute.xlu0 %3680
          %3682 = vrot.lane.b32.xlu0 %v3579, 32
          %v3683 = vpop.permute.xlu0 %3682
          %3684 = vrot.lane.b32.xlu0 %v3582, 32
          %v3685 = vpop.permute.xlu0 %3684
          %3686 = vrot.lane.b32.xlu0 %v3586, 32
          %v3687 = vpop.permute.xlu0 %3686
          %3688 = vrot.lane.b32.xlu0 %v3589, 32
          %v3689 = vpop.permute.xlu0 %3688
          %3690 = vrot.lane.b32.xlu0 %v3593, 32
          %v3691 = vpop.permute.xlu0 %3690
          %3692 = vrot.lane.b32.xlu0 %v3596, 32
          %v3693 = vpop.permute.xlu0 %3692
          %3694 = vrot.lane.b32.xlu0 %v3600, 32
          %v3695 = vpop.permute.xlu0 %3694
          %3696 = vrot.lane.b32.xlu0 %v3603, 32
          %v3697 = vpop.permute.xlu0 %3696
          %3698 = vrot.lane.b32.xlu0 %v3607, 32
          %v3699 = vpop.permute.xlu0 %3698
          %3700 = vrot.lane.b32.xlu0 %v3610, 32
          %v3701 = vpop.permute.xlu0 %3700
          %3702 = vrot.lane.b32.xlu0 %v3614, 32
          %v3703 = vpop.permute.xlu0 %3702
          %3704 = vrot.lane.b32.xlu0 %v3617, 32
          %v3705 = vpop.permute.xlu0 %3704
          %3706 = vrot.lane.b32.xlu0 %v3621, 32
          %v3707 = vpop.permute.xlu0 %3706
          %3708 = vrot.lane.b32.xlu0 %v3624, 32
          %v3709 = vpop.permute.xlu0 %3708
          %3710 = vrot.lane.b32.xlu0 %v3628, 32
          %v3711 = vpop.permute.xlu0 %3710
          %3712 = vrot.lane.b32.xlu0 %v3631, 32
          %v3713 = vpop.permute.xlu0 %3712
          %3714 = vrot.lane.b32.xlu0 %v3635, 32
          %v3715 = vpop.permute.xlu0 %3714
          %3716 = vrot.lane.b32.xlu0 %v3638, 32
          %v3717 = vpop.permute.xlu0 %3716
          %3718 = vrot.lane.b32.xlu0 %v3642, 32
          %v3719 = vpop.permute.xlu0 %3718
          %3720 = vrot.lane.b32.xlu0 %v3645, 32
          %v3721 = vpop.permute.xlu0 %3720
          %3722 = vrot.lane.b32.xlu0 %v3649, 32
          %v3723 = vpop.permute.xlu0 %3722
          %3724 = vrot.lane.b32.xlu0 %v3652, 32
          %v3725 = vpop.permute.xlu0 %3724
          %3726 = vrot.lane.b32.xlu0 %v3656, 32
          %v3727 = vpop.permute.xlu0 %3726
          %3728 = vrot.lane.b32.xlu0 %v3659, 32
          %v3729 = vpop.permute.xlu0 %3728
          %3730 = vrot.lane.b32.xlu0 %v3663, 32
          %v3731 = vpop.permute.xlu0 %3730
          %3732 = vrot.lane.b32.xlu0 %v3666, 32
          %v3733 = vpop.permute.xlu0 %3732
          %3734 = vrot.lane.b32.xlu0 %v3670, 32
          %v3735 = vpop.permute.xlu0 %3734
          %3736 = vrot.lane.b32.xlu0 %v3673, 32
          %v3737 = vpop.permute.xlu0 %3736
          %vm3770 = vcmask 290048
          %3771 = vst.msk [vmem:[#allocation2] sm:$0xf] %vm3770, %v3675
          %3772 = vst.msk [vmem:[#allocation2 + $0x4] sm:$0xf] %vm3770, %v3677
          %3773 = vst.msk [vmem:[#allocation2 + $0x8] sm:$0xf] %vm3770, %v3679
          %3774 = vst.msk [vmem:[#allocation2 + $0xc] sm:$0xf] %vm3770, %v3681
          %3775 = vst.msk [vmem:[#allocation2 + $0x10] sm:$0xf] %vm3770, %v3683
          %3776 = vst.msk [vmem:[#allocation2 + $0x14] sm:$0xf] %vm3770, %v3685
          %3777 = vst.msk [vmem:[#allocation2 + $0x18] sm:$0xf] %vm3770, %v3687
          %3778 = vst.msk [vmem:[#allocation2 + $0x1c] sm:$0xf] %vm3770, %v3689
          %3779 = vst.msk [vmem:[#allocation2 + $0x20] sm:$0xf] %vm3770, %v3691
          %3780 = vst.msk [vmem:[#allocation2 + $0x24] sm:$0xf] %vm3770, %v3693
          %3781 = vst.msk [vmem:[#allocation2 + $0x28] sm:$0xf] %vm3770, %v3695
          %3782 = vst.msk [vmem:[#allocation2 + $0x2c] sm:$0xf] %vm3770, %v3697
          %3783 = vst.msk [vmem:[#allocation2 + $0x30] sm:$0xf] %vm3770, %v3699
          %3784 = vst.msk [vmem:[#allocation2 + $0x34] sm:$0xf] %vm3770, %v3701
          %3785 = vst.msk [vmem:[#allocation2 + $0x38] sm:$0xf] %vm3770, %v3703
          %3786 = vst.msk [vmem:[#allocation2 + $0x3c] sm:$0xf] %vm3770, %v3705
          %3787 = vst.msk [vmem:[#allocation2 + $0x40] sm:$0xf] %vm3770, %v3707
          %3788 = vst.msk [vmem:[#allocation2 + $0x44] sm:$0xf] %vm3770, %v3709
          %3789 = vst.msk [vmem:[#allocation2 + $0x48] sm:$0xf] %vm3770, %v3711
          %3790 = vst.msk [vmem:[#allocation2 + $0x4c] sm:$0xf] %vm3770, %v3713
          %3791 = vst.msk [vmem:[#allocation2 + $0x50] sm:$0xf] %vm3770, %v3715
          %3792 = vst.msk [vmem:[#allocation2 + $0x54] sm:$0xf] %vm3770, %v3717
          %3793 = vst.msk [vmem:[#allocation2 + $0x58] sm:$0xf] %vm3770, %v3719
          %3794 = vst.msk [vmem:[#allocation2 + $0x5c] sm:$0xf] %vm3770, %v3721
          %3795 = vst.msk [vmem:[#allocation2 + $0x60] sm:$0xf] %vm3770, %v3723
          %3796 = vst.msk [vmem:[#allocation2 + $0x64] sm:$0xf] %vm3770, %v3725
          %3797 = vst.msk [vmem:[#allocation2 + $0x68] sm:$0xf] %vm3770, %v3727
          %3798 = vst.msk [vmem:[#allocation2 + $0x6c] sm:$0xf] %vm3770, %v3729
          %3799 = vst.msk [vmem:[#allocation2 + $0x70] sm:$0xf] %vm3770, %v3731
          %3800 = vst.msk [vmem:[#allocation2 + $0x74] sm:$0xf] %vm3770, %v3733
          %3801 = vst.msk [vmem:[#allocation2 + $0x78] sm:$0xf] %vm3770, %v3735
          %3802 = vst.msk [vmem:[#allocation2 + $0x7c] sm:$0xf] %vm3770, %v3737
        $region40: #{tpu_custom_call.1} parent=35 // pred_fallthru
          _
        %v3803 = vld [vmem:[#allocation2] sm:$0xf]
        %v3804 = vld [vmem:[#allocation2 + $0x4] sm:$0xf]
        %v3805 = vld [vmem:[#allocation2 + $0x8] sm:$0xf]
        %v3806 = vld [vmem:[#allocation2 + $0xc] sm:$0xf]
        %v3807 = vld [vmem:[#allocation2 + $0x10] sm:$0xf]
        %v3808 = vld [vmem:[#allocation2 + $0x14] sm:$0xf]
        %v3809 = vld [vmem:[#allocation2 + $0x18] sm:$0xf]
        %v3810 = vld [vmem:[#allocation2 + $0x1c] sm:$0xf]
        %v3811 = vld [vmem:[#allocation2 + $0x20] sm:$0xf]
        %v3812 = vld [vmem:[#allocation2 + $0x24] sm:$0xf]
        %v3813 = vld [vmem:[#allocation2 + $0x28] sm:$0xf]
        %v3814 = vld [vmem:[#allocation2 + $0x2c] sm:$0xf]
        %v3815 = vld [vmem:[#allocation2 + $0x30] sm:$0xf]
        %v3816 = vld [vmem:[#allocation2 + $0x34] sm:$0xf]
        %v3817 = vld [vmem:[#allocation2 + $0x38] sm:$0xf]
        %v3818 = vld [vmem:[#allocation2 + $0x3c] sm:$0xf]
        %v3819 = vld [vmem:[#allocation2 + $0x40] sm:$0xf]
        %v3820 = vld [vmem:[#allocation2 + $0x44] sm:$0xf]
        %v3821 = vld [vmem:[#allocation2 + $0x48] sm:$0xf]
        %v3822 = vld [vmem:[#allocation2 + $0x4c] sm:$0xf]
        %v3823 = vld [vmem:[#allocation2 + $0x50] sm:$0xf]
        %v3824 = vld [vmem:[#allocation2 + $0x54] sm:$0xf]
        %v3825 = vld [vmem:[#allocation2 + $0x58] sm:$0xf]
        %v3826 = vld [vmem:[#allocation2 + $0x5c] sm:$0xf]
        %v3827 = vld [vmem:[#allocation2 + $0x60] sm:$0xf]
        %v3828 = vld [vmem:[#allocation2 + $0x64] sm:$0xf]
        %v3829 = vld [vmem:[#allocation2 + $0x68] sm:$0xf]
        %v3830 = vld [vmem:[#allocation2 + $0x6c] sm:$0xf]
        %v3831 = vld [vmem:[#allocation2 + $0x70] sm:$0xf]
        %v3832 = vld [vmem:[#allocation2 + $0x74] sm:$0xf]
        %v3833 = vld [vmem:[#allocation2 + $0x78] sm:$0xf]
        %v3834 = vld [vmem:[#allocation2 + $0x7c] sm:$0xf]
        %v3835 = vld [vmem:[%s269] sm:$0xf]
        %v3836 = vld [vmem:[%s269 + $0x4] sm:$0xf]
        %v3837 = vld [vmem:[%s269 + $0x8] sm:$0xf]
        %v3838 = vld [vmem:[%s269 + $0xc] sm:$0xf]
        %v3839 = vld [vmem:[%s269 + $0x10] sm:$0x3]
        %v3872 = vunpack.c.l.b16 %v3803
        %v3873 = vunpack.c.l.b16 %v3804
        %v3874 = vunpack.c.l.b16 %v3805
        %v3875 = vunpack.c.l.b16 %v3806
        %v3876 = vunpack.c.l.b16 %v3807
        %v3877 = vunpack.c.l.b16 %v3808
        %v3878 = vunpack.c.l.b16 %v3809
        %v3879 = vunpack.c.l.b16 %v3810
        %v3880 = vunpack.c.l.b16 %v3811
        %v3881 = vunpack.c.l.b16 %v3812
        %v3882 = vunpack.c.l.b16 %v3813
        %v3883 = vunpack.c.l.b16 %v3814
        %v3884 = vunpack.c.l.b16 %v3815
        %v3885 = vunpack.c.l.b16 %v3816
        %v3886 = vunpack.c.l.b16 %v3817
        %v3887 = vunpack.c.l.b16 %v3818
        %v3888 = vunpack.c.l.b16 %v3819
        %v3889 = vunpack.c.l.b16 %v3820
        %v3890 = vunpack.c.l.b16 %v3821
        %v3891 = vunpack.c.l.b16 %v3822
        %v3892 = vunpack.c.l.b16 %v3823
        %v3893 = vunpack.c.l.b16 %v3824
        %v3894 = vunpack.c.l.b16 %v3825
        %v3895 = vunpack.c.l.b16 %v3826
        %v3896 = vunpack.c.l.b16 %v3827
        %v3897 = vunpack.c.l.b16 %v3828
        %v3898 = vunpack.c.l.b16 %v3829
        %v3899 = vunpack.c.l.b16 %v3830
        %v3900 = vunpack.c.l.b16 %v3831
        %v3901 = vunpack.c.l.b16 %v3832
        %v3902 = vunpack.c.l.b16 %v3833
        %v3903 = vunpack.c.l.b16 %v3834
        %v3904 = vpack.c.b16 %v3873, %v3872
        %v3905 = vpack.c.b16 %v3875, %v3874
        %v3906 = vpack.c.b16 %v3877, %v3876
        %v3907 = vpack.c.b16 %v3879, %v3878
        %v3908 = vpack.c.b16 %v3881, %v3880
        %v3909 = vpack.c.b16 %v3883, %v3882
        %v3910 = vpack.c.b16 %v3885, %v3884
        %v3911 = vpack.c.b16 %v3887, %v3886
        %v3912 = vpack.c.b16 %v3889, %v3888
        %v3913 = vpack.c.b16 %v3891, %v3890
        %v3914 = vpack.c.b16 %v3893, %v3892
        %v3915 = vpack.c.b16 %v3895, %v3894
        %v3916 = vpack.c.b16 %v3897, %v3896
        %v3917 = vpack.c.b16 %v3899, %v3898
        %v3918 = vpack.c.b16 %v3901, %v3900
        %v3919 = vpack.c.b16 %v3903, %v3902
        %v3925 = vunpack.c.l.b16 %v3835
        %v3926 = vunpack.c.l.b16 %v3836
        %v3927 = vunpack.c.l.b16 %v3837
        %v3928 = vunpack.c.l.b16 %v3838
        %v3929 = vunpack.c.l.b16 %v3839
        %v3930 = vpack.c.b16 %v3926, %v3925
        %v3931 = vpack.c.b16 %v3928, %v3927
        %v3932 = vpack.c.b16 %v3929, %v3929
        %vm3935 = vcmask 293888
        %v3937 = vsel %vm3935, %v3904, 0
        %v3940 = vsel %vm3935, %v3905, 0
        %v3943 = vsel %vm3935, %v3906, 0
        %v3946 = vsel %vm3935, %v3907, 0
        %v3949 = vsel %vm3935, %v3908, 0
        %v3952 = vsel %vm3935, %v3909, 0
        %v3955 = vsel %vm3935, %v3910, 0
        %v3958 = vsel %vm3935, %v3911, 0
        %v3961 = vsel %vm3935, %v3912, 0
        %v3964 = vsel %vm3935, %v3913, 0
        %v3967 = vsel %vm3935, %v3914, 0
        %v3970 = vsel %vm3935, %v3915, 0
        %v3973 = vsel %vm3935, %v3916, 0
        %v3976 = vsel %vm3935, %v3917, 0
        %v3979 = vsel %vm3935, %v3918, 0
        %v3982 = vsel %vm3935, %v3919, 0
        %vm3984 = vcmask 1041408
        %v3986 = vsel %vm3984, %v3932, 0
        %3988 = vmatprep.subr.bf16.mxu0 0
        %3989 = vmatpush1.bf16.msra.mxu0 0
        %3990 = vmatprep.subr.bf16.mxu0 0
        %3991 = vmatpush1.bf16.msra.mxu0 0
        %3992 = vmatprep.subr.bf16.mxu0 0
        %3993 = vmatpush1.bf16.msra.mxu0 0
        %3994 = vmatprep.subr.bf16.mxu0 0
        %3995 = vmatpush1.bf16.msra.mxu0 0
        %3996 = vmatprep.subr.bf16.mxu0 0
        %3997 = vmatpush1.bf16.msra.mxu0 0
        %3998 = vmatprep.subr.bf16.mxu0 0
        %3999 = vmatpush1.bf16.msra.mxu0 %v3986
        %4000 = vmatprep.subr.bf16.mxu0 0
        %4001 = vmatpush1.bf16.msra.mxu0 %v3931
        %4002 = vmatprep.subr.bf16.mxu0 0
        %4003 = vmatpush1.bf16.msra.mxu0 %v3930
        %4004 = vmatprep.subr.bf16.mxu0 0
        %4005 = vmatpush2.bf16.msra.mxu0 0
        %4006 = vmatprep.subr.bf16.mxu0 0
        %4007 = vmatpush2.bf16.msra.mxu0 0
        %4008 = vmatprep.subr.bf16.mxu0 0
        %4009 = vmatpush2.bf16.msra.mxu0 0
        %4010 = vmatprep.subr.bf16.mxu0 0
        %4011 = vmatpush2.bf16.msra.mxu0 0
        %4012 = vmatprep.subr.bf16.mxu0 0
        %4013 = vmatpush2.bf16.msra.mxu0 0
        %4014 = vmatprep.subr.bf16.mxu0 0
        %4015 = vmatpush2.bf16.msra.mxu0 0
        %4016 = vmatprep.subr.bf16.mxu0 0
        %4017 = vmatpush2.bf16.msra.mxu0 0
        %4018 = vmatprep.subr.bf16.mxu0 0
        %4019 = vmatpush2.bf16.msra.mxu0 0
        %4020 = vmatprep.mubr.bf16.mxu0 0
        %4021 = vmatmul.mubr.bf16.gmra.mxu0 %v3937
        %v4022 = vpop.f32.mrf.mxu0
        %v4023 = vadd.f32 0.0, %v4022
        %v4024 = vpop.f32.mrf.mxu0
        %v4025 = vpop.f32.mrf.mxu0
        %v4026 = vadd.f32 0.0, %v4025
        %v4027 = vpop.f32.mrf.mxu0
        %4028 = vmatprep.mubr.bf16.mxu0 0
        %4029 = vmatmul.mubr.bf16.gmra.mxu0 %v3940
        %v4030 = vpop.f32.mrf.mxu0
        %v4031 = vadd.f32 0.0, %v4030
        %v4032 = vpop.f32.mrf.mxu0
        %v4033 = vpop.f32.mrf.mxu0
        %v4034 = vadd.f32 0.0, %v4033
        %v4035 = vpop.f32.mrf.mxu0
        %4036 = vmatprep.mubr.bf16.mxu0 0
        %4037 = vmatmul.mubr.bf16.gmra.mxu0 %v3943
        %v4038 = vpop.f32.mrf.mxu0
        %v4039 = vadd.f32 0.0, %v4038
        %v4040 = vpop.f32.mrf.mxu0
        %v4041 = vpop.f32.mrf.mxu0
        %v4042 = vadd.f32 0.0, %v4041
        %v4043 = vpop.f32.mrf.mxu0
        %4044 = vmatprep.mubr.bf16.mxu0 0
        %4045 = vmatmul.mubr.bf16.gmra.mxu0 %v3946
        %v4046 = vpop.f32.mrf.mxu0
        %v4047 = vadd.f32 0.0, %v4046
        %v4048 = vpop.f32.mrf.mxu0
        %v4049 = vpop.f32.mrf.mxu0
        %v4050 = vadd.f32 0.0, %v4049
        %v4051 = vpop.f32.mrf.mxu0
        %4052 = vmatprep.mubr.bf16.mxu0 0
        %4053 = vmatmul.mubr.bf16.gmra.mxu0 %v3949
        %v4054 = vpop.f32.mrf.mxu0
        %v4055 = vadd.f32 0.0, %v4054
        %v4056 = vpop.f32.mrf.mxu0
        %v4057 = vpop.f32.mrf.mxu0
        %v4058 = vadd.f32 0.0, %v4057
        %v4059 = vpop.f32.mrf.mxu0
        %4060 = vmatprep.mubr.bf16.mxu0 0
        %4061 = vmatmul.mubr.bf16.gmra.mxu0 %v3952
        %v4062 = vpop.f32.mrf.mxu0
        %v4063 = vadd.f32 0.0, %v4062
        %v4064 = vpop.f32.mrf.mxu0
        %v4065 = vpop.f32.mrf.mxu0
        %v4066 = vadd.f32 0.0, %v4065
        %v4067 = vpop.f32.mrf.mxu0
        %4068 = vmatprep.mubr.bf16.mxu0 0
        %4069 = vmatmul.mubr.bf16.gmra.mxu0 %v3955
        %v4070 = vpop.f32.mrf.mxu0
        %v4071 = vadd.f32 0.0, %v4070
        %v4072 = vpop.f32.mrf.mxu0
        %v4073 = vpop.f32.mrf.mxu0
        %v4074 = vadd.f32 0.0, %v4073
        %v4075 = vpop.f32.mrf.mxu0
        %4076 = vmatprep.mubr.bf16.mxu0 0
        %4077 = vmatmul.mubr.bf16.gmra.mxu0 %v3958
        %v4078 = vpop.f32.mrf.mxu0
        %v4079 = vadd.f32 0.0, %v4078
        %v4080 = vpop.f32.mrf.mxu0
        %v4081 = vpop.f32.mrf.mxu0
        %v4082 = vadd.f32 0.0, %v4081
        %v4083 = vpop.f32.mrf.mxu0
        %4084 = vmatprep.mubr.bf16.mxu0 0
        %4085 = vmatmul.mubr.bf16.gmra.mxu0 %v3961
        %v4086 = vpop.f32.mrf.mxu0
        %v4087 = vadd.f32 0.0, %v4086
        %v4088 = vpop.f32.mrf.mxu0
        %v4089 = vpop.f32.mrf.mxu0
        %v4090 = vadd.f32 0.0, %v4089
        %v4091 = vpop.f32.mrf.mxu0
        %4092 = vmatprep.mubr.bf16.mxu0 0
        %4093 = vmatmul.mubr.bf16.gmra.mxu0 %v3964
        %v4094 = vpop.f32.mrf.mxu0
        %v4095 = vadd.f32 0.0, %v4094
        %v4096 = vpop.f32.mrf.mxu0
        %v4097 = vpop.f32.mrf.mxu0
        %v4098 = vadd.f32 0.0, %v4097
        %v4099 = vpop.f32.mrf.mxu0
        %4100 = vmatprep.mubr.bf16.mxu0 0
        %4101 = vmatmul.mubr.bf16.gmra.mxu0 %v3967
        %v4102 = vpop.f32.mrf.mxu0
        %v4103 = vadd.f32 0.0, %v4102
        %v4104 = vpop.f32.mrf.mxu0
        %v4105 = vpop.f32.mrf.mxu0
        %v4106 = vadd.f32 0.0, %v4105
        %v4107 = vpop.f32.mrf.mxu0
        %4108 = vmatprep.mubr.bf16.mxu0 0
        %4109 = vmatmul.mubr.bf16.gmra.mxu0 %v3970
        %v4110 = vpop.f32.mrf.mxu0
        %v4111 = vadd.f32 0.0, %v4110
        %v4112 = vpop.f32.mrf.mxu0
        %v4113 = vpop.f32.mrf.mxu0
        %v4114 = vadd.f32 0.0, %v4113
        %v4115 = vpop.f32.mrf.mxu0
        %4116 = vmatprep.mubr.bf16.mxu0 0
        %4117 = vmatmul.mubr.bf16.gmra.mxu0 %v3973
        %v4118 = vpop.f32.mrf.mxu0
        %v4119 = vadd.f32 0.0, %v4118
        %v4120 = vpop.f32.mrf.mxu0
        %v4121 = vpop.f32.mrf.mxu0
        %v4122 = vadd.f32 0.0, %v4121
        %v4123 = vpop.f32.mrf.mxu0
        %4124 = vmatprep.mubr.bf16.mxu0 0
        %4125 = vmatmul.mubr.bf16.gmra.mxu0 %v3976
        %v4126 = vpop.f32.mrf.mxu0
        %v4127 = vadd.f32 0.0, %v4126
        %v4128 = vpop.f32.mrf.mxu0
        %v4129 = vpop.f32.mrf.mxu0
        %v4130 = vadd.f32 0.0, %v4129
        %v4131 = vpop.f32.mrf.mxu0
        %4132 = vmatprep.mubr.bf16.mxu0 0
        %4133 = vmatmul.mubr.bf16.gmra.mxu0 %v3979
        %v4134 = vpop.f32.mrf.mxu0
        %v4135 = vadd.f32 0.0, %v4134
        %v4136 = vpop.f32.mrf.mxu0
        %v4137 = vpop.f32.mrf.mxu0
        %v4138 = vadd.f32 0.0, %v4137
        %v4139 = vpop.f32.mrf.mxu0
        %4140 = vmatprep.mubr.bf16.mxu0 0
        %4141 = vmatmul.mubr.bf16.gmra.mxu0 %v3982
        %v4142 = vpop.f32.mrf.mxu0
        %v4143 = vadd.f32 0.0, %v4142
        %v4144 = vpop.f32.mrf.mxu0
        %v4145 = vpop.f32.mrf.mxu0
        %v4146 = vadd.f32 0.0, %v4145
        %v4147 = vpop.f32.mrf.mxu0
        %4148 = vdwg.mxu0
        %v4149 = vld [vmem:[%s265] sm:$0x1]
        %v4151 = vlaneseq
        %v4152 = vshrl.u32 %v4151, 7
        %v4153 = vsub.s32 0, %v4152
        %v4154 = vrot.slane %v4149, %v4153
        %v4156 = vmul.f32 %v4023, %v4154
        %v4157 = vmul.f32 %v4026, %v4154
        %v4158 = vmul.f32 %v4031, %v4154
        %v4159 = vmul.f32 %v4034, %v4154
        %v4160 = vmul.f32 %v4039, %v4154
        %v4161 = vmul.f32 %v4042, %v4154
        %v4162 = vmul.f32 %v4047, %v4154
        %v4163 = vmul.f32 %v4050, %v4154
        %v4164 = vmul.f32 %v4055, %v4154
        %v4165 = vmul.f32 %v4058, %v4154
        %v4166 = vmul.f32 %v4063, %v4154
        %v4167 = vmul.f32 %v4066, %v4154
        %v4168 = vmul.f32 %v4071, %v4154
        %v4169 = vmul.f32 %v4074, %v4154
        %v4170 = vmul.f32 %v4079, %v4154
        %v4171 = vmul.f32 %v4082, %v4154
        %v4172 = vmul.f32 %v4087, %v4154
        %v4173 = vmul.f32 %v4090, %v4154
        %v4174 = vmul.f32 %v4095, %v4154
        %v4175 = vmul.f32 %v4098, %v4154
        %v4176 = vmul.f32 %v4103, %v4154
        %v4177 = vmul.f32 %v4106, %v4154
        %v4178 = vmul.f32 %v4111, %v4154
        %v4179 = vmul.f32 %v4114, %v4154
        %v4180 = vmul.f32 %v4119, %v4154
        %v4181 = vmul.f32 %v4122, %v4154
        %v4182 = vmul.f32 %v4127, %v4154
        %v4183 = vmul.f32 %v4130, %v4154
        %v4184 = vmul.f32 %v4135, %v4154
        %v4185 = vmul.f32 %v4138, %v4154
        %v4186 = vmul.f32 %v4143, %v4154
        %v4187 = vmul.f32 %v4146, %v4154
        %4188 = vst [vmem:[%s256] sm:$0xff] %v4156
        %4189 = vst [vmem:[%s256 + $0x8] sm:$0xff] %v4157
        %4190 = vst [vmem:[%s256 + $0x10] sm:$0xff] %v4158
        %4191 = vst [vmem:[%s256 + $0x18] sm:$0xff] %v4159
        %4192 = vst [vmem:[%s256 + $0x20] sm:$0xff] %v4160
        %4193 = vst [vmem:[%s256 + $0x28] sm:$0xff] %v4161
        %4194 = vst [vmem:[%s256 + $0x30] sm:$0xff] %v4162
        %4195 = vst [vmem:[%s256 + $0x38] sm:$0xff] %v4163
        %4196 = vst [vmem:[%s256 + $0x40] sm:$0xff] %v4164
        %4197 = vst [vmem:[%s256 + $0x48] sm:$0xff] %v4165
        %4198 = vst [vmem:[%s256 + $0x50] sm:$0xff] %v4166
        %4199 = vst [vmem:[%s256 + $0x58] sm:$0xff] %v4167
        %4200 = vst [vmem:[%s256 + $0x60] sm:$0xff] %v4168
        %4201 = vst [vmem:[%s256 + $0x68] sm:$0xff] %v4169
        %4202 = vst [vmem:[%s256 + $0x70] sm:$0xff] %v4170
        %4203 = vst [vmem:[%s256 + $0x78] sm:$0xff] %v4171
        %4204 = vst [vmem:[%s256 + $0x80] sm:$0xff] %v4172
        %4205 = vst [vmem:[%s256 + $0x88] sm:$0xff] %v4173
        %4206 = vst [vmem:[%s256 + $0x90] sm:$0xff] %v4174
        %4207 = vst [vmem:[%s256 + $0x98] sm:$0xff] %v4175
        %4208 = vst [vmem:[%s256 + $0xa0] sm:$0xff] %v4176
        %4209 = vst [vmem:[%s256 + $0xa8] sm:$0xff] %v4177
        %4210 = vst [vmem:[%s256 + $0xb0] sm:$0xff] %v4178
        %4211 = vst [vmem:[%s256 + $0xb8] sm:$0xff] %v4179
        %4212 = vst [vmem:[%s256 + $0xc0] sm:$0xff] %v4180
        %4213 = vst [vmem:[%s256 + $0xc8] sm:$0xff] %v4181
        %4214 = vst [vmem:[%s256 + $0xd0] sm:$0xff] %v4182
        %4215 = vst [vmem:[%s256 + $0xd8] sm:$0xff] %v4183
        %4216 = vst [vmem:[%s256 + $0xe0] sm:$0xff] %v4184
        %4217 = vst [vmem:[%s256 + $0xe8] sm:$0xff] %v4185
        %4218 = vst [vmem:[%s256 + $0xf0] sm:$0xff] %v4186
        %4219 = vst [vmem:[%s256 + $0xf8] sm:$0xff] %v4187
        %s4220 = sand.u32 %s155, 1
        %s4221 = scalar_lea.sflag [#allocation4], %s4220
        %s4222 = sand.u32 %s155, 1
        %s4223 = smul.addr %s4222, 256
        %s4224 = scalar_lea.vmem [#allocation3], %s4223
        // Predicated region
        $region41: #{tpu_custom_call.1} parent=35 // pred_check
          %p4225 = pneg %p165
        $region42: #{tpu_custom_call.1} parent=35 // pred_check_branch
          %4227 = sbr.rel (%p4225) target = $region44
        $region43: #{tpu_custom_call.1} parent=35 // pred_region
          %s4228 = smul.u32 16, %s24
          %s4230 = ssub.s32 4096, 4096
          %4231 = vsyncadd %s4221, %s4230
          %s4232 = smul.addr %s4228, 2
          %s4233 = sadd.s32 %s25, %s4232
          %s4234 = smul.addr %s23, 32
          %s4235 = sadd.s32 %s4233, %s4234
          %s4236 = smul.addr %s4235, 128
          %s4237 = scalar_lea.hbm %s4, %s4236
          %s4238 = sshll.u32 %s4224, 4
          %s4239 = int_to_ptr.vmem [resolvable:$true] %s4238
          %4244 = dma.vmem_to_hbm [thread:$0]  %s4239, 4096, %s4237, %s4221, 128, 128, 8
        $region44: #{tpu_custom_call.1} parent=35 // pred_fallthru
          _
      $region36: #{tpu_custom_call.1} parent=5 // pred_fallthru
        _
      %p4245 = scmp.le.s32.totalorder 2, %s13
      // Predicated region
      $region45: #{tpu_custom_call.1} parent=5 // pred_check
        %p4246 = pneg %p4245
      $region46: #{tpu_custom_call.1} parent=5 // pred_check_branch
        %4248 = sbr.rel (%p4246) target = $region48
      $region47: #{tpu_custom_call.1} parent=5 // pred_region
        %s4249 = ssub.s32 %s13, 2
        // Predicated region
        $region49: #{tpu_custom_call.1} parent=47 // pred_check
          %p4250 = pneg %p171
        $region50: #{tpu_custom_call.1} parent=47 // pred_check_branch
          %4252 = sbr.rel (%p4250) target = $region52
        $region51: #{tpu_custom_call.1} parent=47 // pred_region
          %s4253 = sand.u32 %s156, 1
          %s4254 = scalar_lea.sflag [#allocation4], %s4253
          %s4255 = sand.u32 %s156, 1
          %s4256 = smul.addr %s4255, 256
          %s4257 = scalar_lea.vmem [#allocation3], %s4256
          %4258 = dma.done %s4254, 4096
        $region52: #{tpu_custom_call.1} parent=47 // pred_fallthru
          _
      $region48: #{tpu_custom_call.1} parent=5 // pred_fallthru
        _
    $region6: #{tpu_custom_call.1} parent=1 // loop_footer
      %s17 = sadd.s32 1, %s13
    $region7: #{tpu_custom_call.1} parent=1 // loop_footer_branch
      %12 = sbr.rel target = $region3
    $region8: #{tpu_custom_call.1} parent=1 // loop_exit
      _
    %4259 = vsyncpa [#allocation4], 1
    %s4260 = scalar_lea.sflag [#allocation4], 1
    %4261 = vsyncpa %s4260, 1

</llo_original>
